<compile_context>
chip_gen: v6e
topology: v6e:2x2x1
jax: 0.10.0
libtpu: 0.0.40
codegen_flags: <defaults>
</compile_context>

<pallas_src>
import functools

import jax
import jax.numpy as jnp
import numpy as np
from jax import lax
from jax.experimental import pallas as pl
from jax.experimental.pallas import tpu as pltpu


def _cr_attention_kernel(q_ref, v_ref, wq_ref, wk_ref, wv_ref, wp_ref, bp_ref,
                         o_ref, kp_ref, vp_ref, *, num_heads, scale):
    """Grid = (batch, query-tile).

      q_ref : (1, tq, dim)    query tile for this (b, i)
      v_ref : (1, NK, dim)    full key/value sequence for batch b
      wq/wk/wv : (dim, C)     projection weights, stored (in, out)
      wp    : (C, C)          output projection weight, stored (in, out)
      bp    : (1, C)          output projection bias
      o_ref : (1, tq, C)      output tile
      kp_ref/vp_ref : (NK, C) VMEM scratch: projected K / V for batch b,
                              computed at query-tile 0 and reused after.
    """
    # --- K / V projections: once per batch element.  The query-tile grid
    # axis is the inner, sequential ("arbitrary") axis, so this scratch
    # persists across all query tiles of the current batch element. ---
    @pl.when(pl.program_id(1) == 0)
    def _():
        kv = v_ref[0]                                            # (NK, dim)
        kp_ref[...] = jnp.dot(kv, wk_ref[...],
                              preferred_element_type=jnp.float32
                              ).astype(kp_ref.dtype)
        vp_ref[...] = jnp.dot(kv, wv_ref[...],
                              preferred_element_type=jnp.float32
                              ).astype(vp_ref.dtype)

    # --- Q projection for this query tile (native-dtype operands, f32
    # accumulation).  Fold the softmax scale into the (tq, C) projected
    # queries instead of scaling the (tq, NK) scores per head. ---
    q = q_ref[0]                                                 # (tq, dim)
    qp = jnp.dot(q, wq_ref[...], preferred_element_type=jnp.float32)
    qp = (qp * scale).astype(kp_ref.dtype)                       # (tq, C)

    tq, C = qp.shape
    hd = C // num_heads

    kp = kp_ref[...]                                             # (NK, C)
    vp = vp_ref[...]                                             # (NK, C)
    wp = wp_ref[...]                                             # (C, C)

    # Per-head attention with the head merge fused into the output
    # projection: out = sum_h softmax(q_h k_h^T) v_h @ wp[h*hd:(h+1)*hd, :].
    acc = jnp.zeros((tq, C), jnp.float32)
    for h in range(num_heads):
        lo, hi = h * hd, (h + 1) * hd
        qh = qp[:, lo:hi]                                        # (tq, hd)
        kh = kp[:, lo:hi]                                        # (NK, hd)
        vh = vp[:, lo:hi]                                        # (NK, hd)

        # q_h @ k_h^T without materializing a transpose: contract last dims.
        scores = lax.dot_general(
            qh, kh, (((1,), (1,)), ((), ())),
            preferred_element_type=jnp.float32)                  # (tq, NK)

        # Softmax statistics in f32; normalization is applied on the small
        # (tq, hd) PV result instead of dividing the (tq, NK) tensor.
        # NOTE: for very long NK this should become a flash-style online
        # softmax over NK tiles to bound the (tq, NK) intermediate.
        m = jnp.max(scores, axis=-1, keepdims=True)              # (tq, 1)
        p = jnp.exp(scores - m)                                  # (tq, NK)
        l = jnp.sum(p, axis=-1, keepdims=True)                   # (tq, 1)

        # attn_drop is identity (p=0.0 / eval mode).
        oh = jnp.dot(p.astype(vh.dtype), vh,
                     preferred_element_type=jnp.float32)         # (tq, hd)
        oh = oh * pl.reciprocal(l, approx=False)

        acc = acc + jnp.dot(oh.astype(wp.dtype), wp[lo:hi, :],
                            preferred_element_type=jnp.float32)  # (tq, C)

    # Output projection bias (proj_drop is identity).
    acc = acc + bp_ref[...].astype(jnp.float32)
    o_ref[0] = acc.astype(o_ref.dtype)


def _pick_query_tile(n, max_tile=256):
    """Largest query tile <= max_tile that evenly divides n with the sublane
    dimension a multiple of 8; falls back to the full extent n."""
    if n <= max_tile:
        return n
    t = max_tile - (max_tile % 8)
    while t >= 8:
        if n % t == 0:
            return t
        t -= 8
    return n


def cr_attention(q, v, params, *, num_heads, qk_scale=None, max_query_tile=256):
    """q: (B, N, dim), v: (B, NK, dim) -> (B, N, out_dim)."""
    B, N, dim = q.shape
    NK = v.shape[1]
    wq, wk, wv, wp, bp = params  # wq/wk/wv: (dim, C); wp: (C, C); bp: (1, C)
    C = wq.shape[1]
    assert C % num_heads == 0, "out_dim must be divisible by num_heads"
    head_dim = C // num_heads
    scale = qk_scale if qk_scale is not None else head_dim ** (-0.5)

    tq = _pick_query_tile(N, max_query_tile)
    n_q_tiles = N // tq

    kernel = functools.partial(_cr_attention_kernel,
                               num_heads=num_heads, scale=scale)

    return pl.pallas_call(
        kernel,
        out_shape=jax.ShapeDtypeStruct((B, N, C), q.dtype),
        grid_spec=pltpu.PrefetchScalarGridSpec(
            num_scalar_prefetch=0,
            grid=(B, n_q_tiles),
            in_specs=[
                pl.BlockSpec((1, tq, dim), lambda b, i: (b, i, 0)),
                pl.BlockSpec((1, NK, dim), lambda b, i: (b, 0, 0)),
                pl.BlockSpec((dim, C), lambda b, i: (0, 0)),
                pl.BlockSpec((dim, C), lambda b, i: (0, 0)),
                pl.BlockSpec((dim, C), lambda b, i: (0, 0)),
                pl.BlockSpec((C, C), lambda b, i: (0, 0)),
                pl.BlockSpec((1, C), lambda b, i: (0, 0)),
            ],
            out_specs=pl.BlockSpec((1, tq, C), lambda b, i: (b, i, 0)),
            scratch_shapes=[
                pltpu.VMEM((NK, C), q.dtype),   # projected K (per batch)
                pltpu.VMEM((NK, C), q.dtype),   # projected V (per batch)
            ],
        ),
        compiler_params=pltpu.CompilerParams(
            # Batch axis is megacore-parallel; the query-tile axis must stay
            # sequential so the per-batch K/V projection scratch is reusable.
            dimension_semantics=("parallel", "arbitrary"),
            # Explicit scoped-VMEM budget; re-derive tile sizes / this limit
            # for v7x (64 MiB physical VMEM per TensorCore).
            vmem_limit_bytes=64 * 1024 * 1024,
        ),
    )(q, v, wq, wk, wv, wp, bp)


def cr_attention_ref(q, v, params, *, num_heads, qk_scale=None):
    """Pure-JAX reference mirroring the PyTorch forward."""
    wq, wk, wv, wp, bp = params
    B, N, _ = q.shape
    NK = v.shape[1]
    C = wq.shape[1]
    hd = C // num_heads
    scale = qk_scale if qk_scale is not None else hd ** (-0.5)

    qp = (q @ wq).reshape(B, N, num_heads, hd).transpose(0, 2, 1, 3)
    kp = (v @ wk).reshape(B, NK, num_heads, hd).transpose(0, 2, 1, 3)
    vp = (v @ wv).reshape(B, NK, num_heads, hd).transpose(0, 2, 1, 3)
    at = jnp.einsum("bhqd,bhkd->bhqk", qp, kp) * scale
    at = jax.nn.softmax(at, axis=-1)
    x = jnp.einsum("bhqk,bhkd->bhqd", at, vp).transpose(0, 2, 1, 3)
    x = x.reshape(B, N, C)
    return x @ wp + bp


if __name__ == "__main__":
    B, N, NK = 2, 8, 16
    dim, out_dim, num_heads = 32, 32, 8

    key = jax.random.PRNGKey(0)
    k_q, k_v, k_wq, k_wk, k_wv, k_wp, k_bp = jax.random.split(key, 7)

    q = jax.random.normal(k_q, (B, N, dim), dtype=jnp.float32)
    v = jax.random.normal(k_v, (B, NK, dim), dtype=jnp.float32)

    # Deterministic synthetic parameters (Linear weights stored as (in, out)).
    wq = jax.random.normal(k_wq, (dim, out_dim), dtype=jnp.float32) * 0.1
    wk = jax.random.normal(k_wk, (dim, out_dim), dtype=jnp.float32) * 0.1
    wv = jax.random.normal(k_wv, (dim, out_dim), dtype=jnp.float32) * 0.1
    wp = jax.random.normal(k_wp, (out_dim, out_dim), dtype=jnp.float32) * 0.1
    bp = jax.random.normal(k_bp, (1, out_dim), dtype=jnp.float32) * 0.1
    params = (wq, wk, wv, wp, bp)

    out = cr_attention(q, v, params, num_heads=num_heads)
    out = jax.block_until_ready(out)

    ref = cr_attention_ref(q, v, params, num_heads=num_heads)
    np.testing.assert_allclose(np.asarray(out), np.asarray(ref),
                               rtol=1e-4, atol=1e-4)
    print("KERNEL_OK")
</pallas_src>

<mosaic_0001>
module attributes {stable_mosaic.version = 11 : i64} {
  func.func @_cr_attention_kernel(%arg0: i32, %arg1: i32, %arg2: memref<1x8x32xf32, #tpu.memory_space<vmem>>, %arg3: memref<1x16x32xf32, #tpu.memory_space<vmem>>, %arg4: memref<32x32xf32, #tpu.memory_space<vmem>>, %arg5: memref<32x32xf32, #tpu.memory_space<vmem>>, %arg6: memref<32x32xf32, #tpu.memory_space<vmem>>, %arg7: memref<32x32xf32, #tpu.memory_space<vmem>>, %arg8: memref<1x32xf32, #tpu.memory_space<vmem>>, %arg9: memref<1x8x32xf32, #tpu.memory_space<vmem>>, %arg10: memref<16x32xf32, #tpu.memory_space<vmem>>, %arg11: memref<16x32xf32, #tpu.memory_space<vmem>>) attributes {dimension_semantics = [#tpu.dimension_semantics<parallel>, #tpu.dimension_semantics<arbitrary>], iteration_bounds = array<i64: 2, 1>, scalar_prefetch = 0 : i64, scratch_operands = 2 : i64, tpu.core_type = #tpu.core_type<tc>, window_params = [{transform_indices = @transform_0, window_bounds = array<i64: 1, 8, 32>}, {transform_indices = @transform_1, window_bounds = array<i64: 1, 16, 32>}, {pipeline_mode = #tpu.pipeline_mode<synchronous>, transform_indices = @transform_2, window_bounds = array<i64: 32, 32>}, {pipeline_mode = #tpu.pipeline_mode<synchronous>, transform_indices = @transform_3, window_bounds = array<i64: 32, 32>}, {pipeline_mode = #tpu.pipeline_mode<synchronous>, transform_indices = @transform_4, window_bounds = array<i64: 32, 32>}, {pipeline_mode = #tpu.pipeline_mode<synchronous>, transform_indices = @transform_5, window_bounds = array<i64: 32, 32>}, {pipeline_mode = #tpu.pipeline_mode<synchronous>, transform_indices = @transform_6, window_bounds = array<i64: 1, 32>}, {transform_indices = @transform_7, window_bounds = array<i64: 1, 8, 32>}]} {
    %c0_i32 = arith.constant 0 : i32
    %0 = arith.cmpi eq, %arg1, %c0_i32 : i32
    %1 = arith.extui %0 : i1 to i32
    %c0_i32_0 = arith.constant 0 : i32
    %2 = arith.cmpi ne, %1, %c0_i32_0 : i32
    scf.if %2 {
      %c0_58 = arith.constant 0 : index
      %c0_59 = arith.constant 0 : index
      %c0_60 = arith.constant 0 : index
      %163 = vector.load %arg3[%c0_58, %c0_59, %c0_60] : memref<1x16x32xf32, #tpu.memory_space<vmem>>, vector<1x16x32xf32>
      %164 = vector.shape_cast %163 : vector<1x16x32xf32> to vector<16x32xf32>
      %c0_61 = arith.constant 0 : index
      %c0_62 = arith.constant 0 : index
      %165 = vector.load %arg5[%c0_61, %c0_62] : memref<32x32xf32, #tpu.memory_space<vmem>>, vector<32x32xf32>
      %cst_63 = arith.constant dense<0.000000e+00> : vector<16x32xf32>
      %166 = tpu.matmul %164, %165, %cst_63 {dimension_numbers = #tpu.dot_dimension_numbers<[1], [0], [0], [1], [0, 0, 1, 1], [], []>} : vector<16x32xf32>, vector<32x32xf32>, vector<16x32xf32> -> vector<16x32xf32>
      %c0_64 = arith.constant 0 : index
      %c0_65 = arith.constant 0 : index
      %167 = vector.load %arg10[%c0_64, %c0_65] : memref<16x32xf32, #tpu.memory_space<vmem>>, vector<16x32xf32>
      tpu.vector_store %arg10[%c0_64, %c0_65], %166 {strides = array<i32>} : memref<16x32xf32, #tpu.memory_space<vmem>>, vector<16x32xf32>,
      %c0_66 = arith.constant 0 : index
      %c0_67 = arith.constant 0 : index
      %168 = vector.load %arg6[%c0_66, %c0_67] : memref<32x32xf32, #tpu.memory_space<vmem>>, vector<32x32xf32>
      %cst_68 = arith.constant dense<0.000000e+00> : vector<16x32xf32>
      %169 = tpu.matmul %164, %168, %cst_68 {dimension_numbers = #tpu.dot_dimension_numbers<[1], [0], [0], [1], [0, 0, 1, 1], [], []>} : vector<16x32xf32>, vector<32x32xf32>, vector<16x32xf32> -> vector<16x32xf32>
      %c0_69 = arith.constant 0 : index
      %c0_70 = arith.constant 0 : index
      %170 = vector.load %arg11[%c0_69, %c0_70] : memref<16x32xf32, #tpu.memory_space<vmem>>, vector<16x32xf32>
      tpu.vector_store %arg11[%c0_69, %c0_70], %169 {strides = array<i32>} : memref<16x32xf32, #tpu.memory_space<vmem>>, vector<16x32xf32>,
    } else {
    }
    %c0 = arith.constant 0 : index
    %c0_1 = arith.constant 0 : index
    %c0_2 = arith.constant 0 : index
    %3 = vector.load %arg2[%c0, %c0_1, %c0_2] : memref<1x8x32xf32, #tpu.memory_space<vmem>>, vector<1x8x32xf32>
    %4 = vector.shape_cast %3 : vector<1x8x32xf32> to vector<8x32xf32>
    %c0_3 = arith.constant 0 : index
    %c0_4 = arith.constant 0 : index
    %5 = vector.load %arg4[%c0_3, %c0_4] : memref<32x32xf32, #tpu.memory_space<vmem>>, vector<32x32xf32>
    %cst = arith.constant dense<0.000000e+00> : vector<8x32xf32>
    %6 = tpu.matmul %4, %5, %cst {dimension_numbers = #tpu.dot_dimension_numbers<[1], [0], [0], [1], [0, 0, 1, 1], [], []>} : vector<8x32xf32>, vector<32x32xf32>, vector<8x32xf32> -> vector<8x32xf32>
    %cst_5 = arith.constant 5.000000e-01 : f32
    %7 = vector.broadcast %cst_5 : f32 to vector<8x32xf32>
    %8 = arith.mulf %6, %7 : vector<8x32xf32>
    %c0_6 = arith.constant 0 : index
    %c0_7 = arith.constant 0 : index
    %9 = vector.load %arg10[%c0_6, %c0_7] : memref<16x32xf32, #tpu.memory_space<vmem>>, vector<16x32xf32>
    %c0_8 = arith.constant 0 : index
    %c0_9 = arith.constant 0 : index
    %10 = vector.load %arg11[%c0_8, %c0_9] : memref<16x32xf32, #tpu.memory_space<vmem>>, vector<16x32xf32>
    %c0_10 = arith.constant 0 : index
    %c0_11 = arith.constant 0 : index
    %11 = vector.load %arg7[%c0_10, %c0_11] : memref<32x32xf32, #tpu.memory_space<vmem>>, vector<32x32xf32>
    %cst_12 = arith.constant 0.000000e+00 : f32
    %12 = vector.broadcast %cst_12 : f32 to vector<8x32xf32>
    %13 = vector.extract_strided_slice %8 {offsets = [0, 0], sizes = [8, 4], strides = [1, 1]} : vector<8x32xf32> to vector<8x4xf32>
    %14 = vector.extract_strided_slice %9 {offsets = [0, 0], sizes = [16, 4], strides = [1, 1]} : vector<16x32xf32> to vector<16x4xf32>
    %15 = vector.extract_strided_slice %10 {offsets = [0, 0], sizes = [16, 4], strides = [1, 1]} : vector<16x32xf32> to vector<16x4xf32>
    %cst_13 = arith.constant dense<0.000000e+00> : vector<8x16xf32>
    %16 = tpu.matmul %13, %14, %cst_13 {dimension_numbers = #tpu.dot_dimension_numbers<[1], [1], [0], [0], [0, 0, 1, 0], [], []>} : vector<8x4xf32>, vector<16x4xf32>, vector<8x16xf32> -> vector<8x16xf32>
    %cst_14 = arith.constant dense<0xFF800000> : vector<8xf32>
    %17 = vector.multi_reduction <maximumf>, %16, %cst_14 [1] : vector<8x16xf32> to vector<8xf32>
    %18 = vector.shape_cast %17 : vector<8xf32> to vector<8x1xf32>
    %19 = vector.broadcast %18 : vector<8x1xf32> to vector<8x16xf32>
    %20 = arith.subf %16, %19 : vector<8x16xf32>
    %21 = math.exp %20 : vector<8x16xf32>
    %cst_15 = arith.constant dense<0.000000e+00> : vector<8xf32>
    %22 = vector.multi_reduction <add>, %21, %cst_15 [1] : vector<8x16xf32> to vector<8xf32>
    %23 = vector.shape_cast %22 : vector<8xf32> to vector<8x1xf32>
    %cst_16 = arith.constant dense<0.000000e+00> : vector<8x4xf32>
    %24 = tpu.matmul %21, %15, %cst_16 {dimension_numbers = #tpu.dot_dimension_numbers<[1], [0], [0], [1], [0, 0, 1, 1], [], []>} : vector<8x16xf32>, vector<16x4xf32>, vector<8x4xf32> -> vector<8x4xf32>
    %25 = tpu.reciprocal %23 : vector<8x1xf32> -> vector<8x1xf32>
    %26 = vector.broadcast %25 : vector<8x1xf32> to vector<8x4xf32>
    %27 = arith.mulf %24, %26 : vector<8x4xf32>
    %28 = vector.extract_strided_slice %11 {offsets = [0, 0], sizes = [4, 32], strides = [1, 1]} : vector<32x32xf32> to vector<4x32xf32>
    %cst_17 = arith.constant dense<0.000000e+00> : vector<8x32xf32>
    %29 = tpu.matmul %27, %28, %cst_17 {dimension_numbers = #tpu.dot_dimension_numbers<[1], [0], [0], [1], [0, 0, 1, 1], [], []>} : vector<8x4xf32>, vector<4x32xf32>, vector<8x32xf32> -> vector<8x32xf32>
    %30 = arith.addf %12, %29 : vector<8x32xf32>
    %31 = vector.extract_strided_slice %8 {offsets = [0, 4], sizes = [8, 4], strides = [1, 1]} : vector<8x32xf32> to vector<8x4xf32>
    %32 = vector.extract_strided_slice %9 {offsets = [0, 4], sizes = [16, 4], strides = [1, 1]} : vector<16x32xf32> to vector<16x4xf32>
    %33 = vector.extract_strided_slice %10 {offsets = [0, 4], sizes = [16, 4], strides = [1, 1]} : vector<16x32xf32> to vector<16x4xf32>
    %cst_18 = arith.constant dense<0.000000e+00> : vector<8x16xf32>
    %34 = tpu.matmul %31, %32, %cst_18 {dimension_numbers = #tpu.dot_dimension_numbers<[1], [1], [0], [0], [0, 0, 1, 0], [], []>} : vector<8x4xf32>, vector<16x4xf32>, vector<8x16xf32> -> vector<8x16xf32>
    %cst_19 = arith.constant dense<0xFF800000> : vector<8xf32>
    %35 = vector.multi_reduction <maximumf>, %34, %cst_19 [1] : vector<8x16xf32> to vector<8xf32>
    %36 = vector.shape_cast %35 : vector<8xf32> to vector<8x1xf32>
    %37 = vector.broadcast %36 : vector<8x1xf32> to vector<8x16xf32>
    %38 = arith.subf %34, %37 : vector<8x16xf32>
    %39 = math.exp %38 : vector<8x16xf32>
    %cst_20 = arith.constant dense<0.000000e+00> : vector<8xf32>
    %40 = vector.multi_reduction <add>, %39, %cst_20 [1] : vector<8x16xf32> to vector<8xf32>
    %41 = vector.shape_cast %40 : vector<8xf32> to vector<8x1xf32>
    %cst_21 = arith.constant dense<0.000000e+00> : vector<8x4xf32>
    %42 = tpu.matmul %39, %33, %cst_21 {dimension_numbers = #tpu.dot_dimension_numbers<[1], [0], [0], [1], [0, 0, 1, 1], [], []>} : vector<8x16xf32>, vector<16x4xf32>, vector<8x4xf32> -> vector<8x4xf32>
    %43 = tpu.reciprocal %41 : vector<8x1xf32> -> vector<8x1xf32>
    %44 = vector.broadcast %43 : vector<8x1xf32> to vector<8x4xf32>
    %45 = arith.mulf %42, %44 : vector<8x4xf32>
    %46 = vector.extract_strided_slice %11 {offsets = [4, 0], sizes = [4, 32], strides = [1, 1]} : vector<32x32xf32> to vector<4x32xf32>
    %cst_22 = arith.constant dense<0.000000e+00> : vector<8x32xf32>
    %47 = tpu.matmul %45, %46, %cst_22 {dimension_numbers = #tpu.dot_dimension_numbers<[1], [0], [0], [1], [0, 0, 1, 1], [], []>} : vector<8x4xf32>, vector<4x32xf32>, vector<8x32xf32> -> vector<8x32xf32>
    %48 = arith.addf %30, %47 : vector<8x32xf32>
    %49 = vector.extract_strided_slice %8 {offsets = [0, 8], sizes = [8, 4], strides = [1, 1]} : vector<8x32xf32> to vector<8x4xf32>
    %50 = vector.extract_strided_slice %9 {offsets = [0, 8], sizes = [16, 4], strides = [1, 1]} : vector<16x32xf32> to vector<16x4xf32>
    %51 = vector.extract_strided_slice %10 {offsets = [0, 8], sizes = [16, 4], strides = [1, 1]} : vector<16x32xf32> to vector<16x4xf32>
    %cst_23 = arith.constant dense<0.000000e+00> : vector<8x16xf32>
    %52 = tpu.matmul %49, %50, %cst_23 {dimension_numbers = #tpu.dot_dimension_numbers<[1], [1], [0], [0], [0, 0, 1, 0], [], []>} : vector<8x4xf32>, vector<16x4xf32>, vector<8x16xf32> -> vector<8x16xf32>
    %cst_24 = arith.constant dense<0xFF800000> : vector<8xf32>
    %53 = vector.multi_reduction <maximumf>, %52, %cst_24 [1] : vector<8x16xf32> to vector<8xf32>
    %54 = vector.shape_cast %53 : vector<8xf32> to vector<8x1xf32>
    %55 = vector.broadcast %54 : vector<8x1xf32> to vector<8x16xf32>
    %56 = arith.subf %52, %55 : vector<8x16xf32>
    %57 = math.exp %56 : vector<8x16xf32>
    %cst_25 = arith.constant dense<0.000000e+00> : vector<8xf32>
    %58 = vector.multi_reduction <add>, %57, %cst_25 [1] : vector<8x16xf32> to vector<8xf32>
    %59 = vector.shape_cast %58 : vector<8xf32> to vector<8x1xf32>
    %cst_26 = arith.constant dense<0.000000e+00> : vector<8x4xf32>
    %60 = tpu.matmul %57, %51, %cst_26 {dimension_numbers = #tpu.dot_dimension_numbers<[1], [0], [0], [1], [0, 0, 1, 1], [], []>} : vector<8x16xf32>, vector<16x4xf32>, vector<8x4xf32> -> vector<8x4xf32>
    %61 = tpu.reciprocal %59 : vector<8x1xf32> -> vector<8x1xf32>
    %62 = vector.broadcast %61 : vector<8x1xf32> to vector<8x4xf32>
    %63 = arith.mulf %60, %62 : vector<8x4xf32>
    %64 = vector.extract_strided_slice %11 {offsets = [8, 0], sizes = [4, 32], strides = [1, 1]} : vector<32x32xf32> to vector<4x32xf32>
    %cst_27 = arith.constant dense<0.000000e+00> : vector<8x32xf32>
    %65 = tpu.matmul %63, %64, %cst_27 {dimension_numbers = #tpu.dot_dimension_numbers<[1], [0], [0], [1], [0, 0, 1, 1], [], []>} : vector<8x4xf32>, vector<4x32xf32>, vector<8x32xf32> -> vector<8x32xf32>
    %66 = arith.addf %48, %65 : vector<8x32xf32>
    %67 = vector.extract_strided_slice %8 {offsets = [0, 12], sizes = [8, 4], strides = [1, 1]} : vector<8x32xf32> to vector<8x4xf32>
    %68 = vector.extract_strided_slice %9 {offsets = [0, 12], sizes = [16, 4], strides = [1, 1]} : vector<16x32xf32> to vector<16x4xf32>
    %69 = vector.extract_strided_slice %10 {offsets = [0, 12], sizes = [16, 4], strides = [1, 1]} : vector<16x32xf32> to vector<16x4xf32>
    %cst_28 = arith.constant dense<0.000000e+00> : vector<8x16xf32>
    %70 = tpu.matmul %67, %68, %cst_28 {dimension_numbers = #tpu.dot_dimension_numbers<[1], [1], [0], [0], [0, 0, 1, 0], [], []>} : vector<8x4xf32>, vector<16x4xf32>, vector<8x16xf32> -> vector<8x16xf32>
    %cst_29 = arith.constant dense<0xFF800000> : vector<8xf32>
    %71 = vector.multi_reduction <maximumf>, %70, %cst_29 [1] : vector<8x16xf32> to vector<8xf32>
    %72 = vector.shape_cast %71 : vector<8xf32> to vector<8x1xf32>
    %73 = vector.broadcast %72 : vector<8x1xf32> to vector<8x16xf32>
    %74 = arith.subf %70, %73 : vector<8x16xf32>
    %75 = math.exp %74 : vector<8x16xf32>
    %cst_30 = arith.constant dense<0.000000e+00> : vector<8xf32>
    %76 = vector.multi_reduction <add>, %75, %cst_30 [1] : vector<8x16xf32> to vector<8xf32>
    %77 = vector.shape_cast %76 : vector<8xf32> to vector<8x1xf32>
    %cst_31 = arith.constant dense<0.000000e+00> : vector<8x4xf32>
    %78 = tpu.matmul %75, %69, %cst_31 {dimension_numbers = #tpu.dot_dimension_numbers<[1], [0], [0], [1], [0, 0, 1, 1], [], []>} : vector<8x16xf32>, vector<16x4xf32>, vector<8x4xf32> -> vector<8x4xf32>
    %79 = tpu.reciprocal %77 : vector<8x1xf32> -> vector<8x1xf32>
    %80 = vector.broadcast %79 : vector<8x1xf32> to vector<8x4xf32>
    %81 = arith.mulf %78, %80 : vector<8x4xf32>
    %82 = vector.extract_strided_slice %11 {offsets = [12, 0], sizes = [4, 32], strides = [1, 1]} : vector<32x32xf32> to vector<4x32xf32>
    %cst_32 = arith.constant dense<0.000000e+00> : vector<8x32xf32>
    %83 = tpu.matmul %81, %82, %cst_32 {dimension_numbers = #tpu.dot_dimension_numbers<[1], [0], [0], [1], [0, 0, 1, 1], [], []>} : vector<8x4xf32>, vector<4x32xf32>, vector<8x32xf32> -> vector<8x32xf32>
    %84 = arith.addf %66, %83 : vector<8x32xf32>
    %85 = vector.extract_strided_slice %8 {offsets = [0, 16], sizes = [8, 4], strides = [1, 1]} : vector<8x32xf32> to vector<8x4xf32>
    %86 = vector.extract_strided_slice %9 {offsets = [0, 16], sizes = [16, 4], strides = [1, 1]} : vector<16x32xf32> to vector<16x4xf32>
    %87 = vector.extract_strided_slice %10 {offsets = [0, 16], sizes = [16, 4], strides = [1, 1]} : vector<16x32xf32> to vector<16x4xf32>
    %cst_33 = arith.constant dense<0.000000e+00> : vector<8x16xf32>
    %88 = tpu.matmul %85, %86, %cst_33 {dimension_numbers = #tpu.dot_dimension_numbers<[1], [1], [0], [0], [0, 0, 1, 0], [], []>} : vector<8x4xf32>, vector<16x4xf32>, vector<8x16xf32> -> vector<8x16xf32>
    %cst_34 = arith.constant dense<0xFF800000> : vector<8xf32>
    %89 = vector.multi_reduction <maximumf>, %88, %cst_34 [1] : vector<8x16xf32> to vector<8xf32>
    %90 = vector.shape_cast %89 : vector<8xf32> to vector<8x1xf32>
    %91 = vector.broadcast %90 : vector<8x1xf32> to vector<8x16xf32>
    %92 = arith.subf %88, %91 : vector<8x16xf32>
    %93 = math.exp %92 : vector<8x16xf32>
    %cst_35 = arith.constant dense<0.000000e+00> : vector<8xf32>
    %94 = vector.multi_reduction <add>, %93, %cst_35 [1] : vector<8x16xf32> to vector<8xf32>
    %95 = vector.shape_cast %94 : vector<8xf32> to vector<8x1xf32>
    %cst_36 = arith.constant dense<0.000000e+00> : vector<8x4xf32>
    %96 = tpu.matmul %93, %87, %cst_36 {dimension_numbers = #tpu.dot_dimension_numbers<[1], [0], [0], [1], [0, 0, 1, 1], [], []>} : vector<8x16xf32>, vector<16x4xf32>, vector<8x4xf32> -> vector<8x4xf32>
    %97 = tpu.reciprocal %95 : vector<8x1xf32> -> vector<8x1xf32>
    %98 = vector.broadcast %97 : vector<8x1xf32> to vector<8x4xf32>
    %99 = arith.mulf %96, %98 : vector<8x4xf32>
    %100 = vector.extract_strided_slice %11 {offsets = [16, 0], sizes = [4, 32], strides = [1, 1]} : vector<32x32xf32> to vector<4x32xf32>
    %cst_37 = arith.constant dense<0.000000e+00> : vector<8x32xf32>
    %101 = tpu.matmul %99, %100, %cst_37 {dimension_numbers = #tpu.dot_dimension_numbers<[1], [0], [0], [1], [0, 0, 1, 1], [], []>} : vector<8x4xf32>, vector<4x32xf32>, vector<8x32xf32> -> vector<8x32xf32>
    %102 = arith.addf %84, %101 : vector<8x32xf32>
    %103 = vector.extract_strided_slice %8 {offsets = [0, 20], sizes = [8, 4], strides = [1, 1]} : vector<8x32xf32> to vector<8x4xf32>
    %104 = vector.extract_strided_slice %9 {offsets = [0, 20], sizes = [16, 4], strides = [1, 1]} : vector<16x32xf32> to vector<16x4xf32>
    %105 = vector.extract_strided_slice %10 {offsets = [0, 20], sizes = [16, 4], strides = [1, 1]} : vector<16x32xf32> to vector<16x4xf32>
    %cst_38 = arith.constant dense<0.000000e+00> : vector<8x16xf32>
    %106 = tpu.matmul %103, %104, %cst_38 {dimension_numbers = #tpu.dot_dimension_numbers<[1], [1], [0], [0], [0, 0, 1, 0], [], []>} : vector<8x4xf32>, vector<16x4xf32>, vector<8x16xf32> -> vector<8x16xf32>
    %cst_39 = arith.constant dense<0xFF800000> : vector<8xf32>
    %107 = vector.multi_reduction <maximumf>, %106, %cst_39 [1] : vector<8x16xf32> to vector<8xf32>
    %108 = vector.shape_cast %107 : vector<8xf32> to vector<8x1xf32>
    %109 = vector.broadcast %108 : vector<8x1xf32> to vector<8x16xf32>
    %110 = arith.subf %106, %109 : vector<8x16xf32>
    %111 = math.exp %110 : vector<8x16xf32>
    %cst_40 = arith.constant dense<0.000000e+00> : vector<8xf32>
    %112 = vector.multi_reduction <add>, %111, %cst_40 [1] : vector<8x16xf32> to vector<8xf32>
    %113 = vector.shape_cast %112 : vector<8xf32> to vector<8x1xf32>
    %cst_41 = arith.constant dense<0.000000e+00> : vector<8x4xf32>
    %114 = tpu.matmul %111, %105, %cst_41 {dimension_numbers = #tpu.dot_dimension_numbers<[1], [0], [0], [1], [0, 0, 1, 1], [], []>} : vector<8x16xf32>, vector<16x4xf32>, vector<8x4xf32> -> vector<8x4xf32>
    %115 = tpu.reciprocal %113 : vector<8x1xf32> -> vector<8x1xf32>
    %116 = vector.broadcast %115 : vector<8x1xf32> to vector<8x4xf32>
    %117 = arith.mulf %114, %116 : vector<8x4xf32>
    %118 = vector.extract_strided_slice %11 {offsets = [20, 0], sizes = [4, 32], strides = [1, 1]} : vector<32x32xf32> to vector<4x32xf32>
    %cst_42 = arith.constant dense<0.000000e+00> : vector<8x32xf32>
    %119 = tpu.matmul %117, %118, %cst_42 {dimension_numbers = #tpu.dot_dimension_numbers<[1], [0], [0], [1], [0, 0, 1, 1], [], []>} : vector<8x4xf32>, vector<4x32xf32>, vector<8x32xf32> -> vector<8x32xf32>
    %120 = arith.addf %102, %119 : vector<8x32xf32>
    %121 = vector.extract_strided_slice %8 {offsets = [0, 24], sizes = [8, 4], strides = [1, 1]} : vector<8x32xf32> to vector<8x4xf32>
    %122 = vector.extract_strided_slice %9 {offsets = [0, 24], sizes = [16, 4], strides = [1, 1]} : vector<16x32xf32> to vector<16x4xf32>
    %123 = vector.extract_strided_slice %10 {offsets = [0, 24], sizes = [16, 4], strides = [1, 1]} : vector<16x32xf32> to vector<16x4xf32>
    %cst_43 = arith.constant dense<0.000000e+00> : vector<8x16xf32>
    %124 = tpu.matmul %121, %122, %cst_43 {dimension_numbers = #tpu.dot_dimension_numbers<[1], [1], [0], [0], [0, 0, 1, 0], [], []>} : vector<8x4xf32>, vector<16x4xf32>, vector<8x16xf32> -> vector<8x16xf32>
    %cst_44 = arith.constant dense<0xFF800000> : vector<8xf32>
    %125 = vector.multi_reduction <maximumf>, %124, %cst_44 [1] : vector<8x16xf32> to vector<8xf32>
    %126 = vector.shape_cast %125 : vector<8xf32> to vector<8x1xf32>
    %127 = vector.broadcast %126 : vector<8x1xf32> to vector<8x16xf32>
    %128 = arith.subf %124, %127 : vector<8x16xf32>
    %129 = math.exp %128 : vector<8x16xf32>
    %cst_45 = arith.constant dense<0.000000e+00> : vector<8xf32>
    %130 = vector.multi_reduction <add>, %129, %cst_45 [1] : vector<8x16xf32> to vector<8xf32>
    %131 = vector.shape_cast %130 : vector<8xf32> to vector<8x1xf32>
    %cst_46 = arith.constant dense<0.000000e+00> : vector<8x4xf32>
    %132 = tpu.matmul %129, %123, %cst_46 {dimension_numbers = #tpu.dot_dimension_numbers<[1], [0], [0], [1], [0, 0, 1, 1], [], []>} : vector<8x16xf32>, vector<16x4xf32>, vector<8x4xf32> -> vector<8x4xf32>
    %133 = tpu.reciprocal %131 : vector<8x1xf32> -> vector<8x1xf32>
    %134 = vector.broadcast %133 : vector<8x1xf32> to vector<8x4xf32>
    %135 = arith.mulf %132, %134 : vector<8x4xf32>
    %136 = vector.extract_strided_slice %11 {offsets = [24, 0], sizes = [4, 32], strides = [1, 1]} : vector<32x32xf32> to vector<4x32xf32>
    %cst_47 = arith.constant dense<0.000000e+00> : vector<8x32xf32>
    %137 = tpu.matmul %135, %136, %cst_47 {dimension_numbers = #tpu.dot_dimension_numbers<[1], [0], [0], [1], [0, 0, 1, 1], [], []>} : vector<8x4xf32>, vector<4x32xf32>, vector<8x32xf32> -> vector<8x32xf32>
    %138 = arith.addf %120, %137 : vector<8x32xf32>
    %139 = vector.extract_strided_slice %8 {offsets = [0, 28], sizes = [8, 4], strides = [1, 1]} : vector<8x32xf32> to vector<8x4xf32>
    %140 = vector.extract_strided_slice %9 {offsets = [0, 28], sizes = [16, 4], strides = [1, 1]} : vector<16x32xf32> to vector<16x4xf32>
    %141 = vector.extract_strided_slice %10 {offsets = [0, 28], sizes = [16, 4], strides = [1, 1]} : vector<16x32xf32> to vector<16x4xf32>
    %cst_48 = arith.constant dense<0.000000e+00> : vector<8x16xf32>
    %142 = tpu.matmul %139, %140, %cst_48 {dimension_numbers = #tpu.dot_dimension_numbers<[1], [1], [0], [0], [0, 0, 1, 0], [], []>} : vector<8x4xf32>, vector<16x4xf32>, vector<8x16xf32> -> vector<8x16xf32>
    %cst_49 = arith.constant dense<0xFF800000> : vector<8xf32>
    %143 = vector.multi_reduction <maximumf>, %142, %cst_49 [1] : vector<8x16xf32> to vector<8xf32>
    %144 = vector.shape_cast %143 : vector<8xf32> to vector<8x1xf32>
    %145 = vector.broadcast %144 : vector<8x1xf32> to vector<8x16xf32>
    %146 = arith.subf %142, %145 : vector<8x16xf32>
    %147 = math.exp %146 : vector<8x16xf32>
    %cst_50 = arith.constant dense<0.000000e+00> : vector<8xf32>
    %148 = vector.multi_reduction <add>, %147, %cst_50 [1] : vector<8x16xf32> to vector<8xf32>
    %149 = vector.shape_cast %148 : vector<8xf32> to vector<8x1xf32>
    %cst_51 = arith.constant dense<0.000000e+00> : vector<8x4xf32>
    %150 = tpu.matmul %147, %141, %cst_51 {dimension_numbers = #tpu.dot_dimension_numbers<[1], [0], [0], [1], [0, 0, 1, 1], [], []>} : vector<8x16xf32>, vector<16x4xf32>, vector<8x4xf32> -> vector<8x4xf32>
    %151 = tpu.reciprocal %149 : vector<8x1xf32> -> vector<8x1xf32>
    %152 = vector.broadcast %151 : vector<8x1xf32> to vector<8x4xf32>
    %153 = arith.mulf %150, %152 : vector<8x4xf32>
    %154 = vector.extract_strided_slice %11 {offsets = [28, 0], sizes = [4, 32], strides = [1, 1]} : vector<32x32xf32> to vector<4x32xf32>
    %cst_52 = arith.constant dense<0.000000e+00> : vector<8x32xf32>
    %155 = tpu.matmul %153, %154, %cst_52 {dimension_numbers = #tpu.dot_dimension_numbers<[1], [0], [0], [1], [0, 0, 1, 1], [], []>} : vector<8x4xf32>, vector<4x32xf32>, vector<8x32xf32> -> vector<8x32xf32>
    %156 = arith.addf %138, %155 : vector<8x32xf32>
    %c0_53 = arith.constant 0 : index
    %c0_54 = arith.constant 0 : index
    %157 = vector.load %arg8[%c0_53, %c0_54] : memref<1x32xf32, #tpu.memory_space<vmem>>, vector<1x32xf32>
    %158 = vector.broadcast %157 : vector<1x32xf32> to vector<8x32xf32>
    %159 = arith.addf %156, %158 : vector<8x32xf32>
    %c0_55 = arith.constant 0 : index
    %c0_56 = arith.constant 0 : index
    %c0_57 = arith.constant 0 : index
    %160 = vector.load %arg9[%c0_55, %c0_56, %c0_57] : memref<1x8x32xf32, #tpu.memory_space<vmem>>, vector<1x8x32xf32>
    %161 = vector.shape_cast %160 : vector<1x8x32xf32> to vector<8x32xf32>
    %162 = vector.shape_cast %159 : vector<8x32xf32> to vector<1x8x32xf32>
    tpu.vector_store %arg9[%c0_55, %c0_56, %c0_57], %162 {strides = array<i32>} : memref<1x8x32xf32, #tpu.memory_space<vmem>>, vector<1x8x32xf32>,
    return
  }
  func.func @transform_0(%arg0: i32, %arg1: i32) -> (i32, i32, i32) {
    %c0_i32 = arith.constant 0 : i32
    %c0_i32_0 = arith.constant 0 : i32
    return %arg0, %arg1, %c0_i32 : i32, i32, i32
  }
  func.func @transform_1(%arg0: i32, %arg1: i32) -> (i32, i32, i32) {
    %c0_i32 = arith.constant 0 : i32
    %c0_i32_0 = arith.constant 0 : i32
    %c0_i32_1 = arith.constant 0 : i32
    return %arg0, %c0_i32, %c0_i32_0 : i32, i32, i32
  }
  func.func @transform_2(%arg0: i32, %arg1: i32) -> (i32, i32) {
    %c0_i32 = arith.constant 0 : i32
    %c0_i32_0 = arith.constant 0 : i32
    %c0_i32_1 = arith.constant 0 : i32
    return %c0_i32, %c0_i32_0 : i32, i32
  }
  func.func @transform_3(%arg0: i32, %arg1: i32) -> (i32, i32) {
    %c0_i32 = arith.constant 0 : i32
    %c0_i32_0 = arith.constant 0 : i32
    %c0_i32_1 = arith.constant 0 : i32
    return %c0_i32, %c0_i32_0 : i32, i32
  }
  func.func @transform_4(%arg0: i32, %arg1: i32) -> (i32, i32) {
    %c0_i32 = arith.constant 0 : i32
    %c0_i32_0 = arith.constant 0 : i32
    %c0_i32_1 = arith.constant 0 : i32
    return %c0_i32, %c0_i32_0 : i32, i32
  }
  func.func @transform_5(%arg0: i32, %arg1: i32) -> (i32, i32) {
    %c0_i32 = arith.constant 0 : i32
    %c0_i32_0 = arith.constant 0 : i32
    %c0_i32_1 = arith.constant 0 : i32
    return %c0_i32, %c0_i32_0 : i32, i32
  }
  func.func @transform_6(%arg0: i32, %arg1: i32) -> (i32, i32) {
    %c0_i32 = arith.constant 0 : i32
    %c0_i32_0 = arith.constant 0 : i32
    %c0_i32_1 = arith.constant 0 : i32
    return %c0_i32, %c0_i32_0 : i32, i32
  }
  func.func @transform_7(%arg0: i32, %arg1: i32) -> (i32, i32, i32) {
    %c0_i32 = arith.constant 0 : i32
    %c0_i32_0 = arith.constant 0 : i32
    return %arg0, %arg1, %c0_i32 : i32, i32, i32
  }
}

</mosaic_0001>

<llo_original>
// kernel: tpu_custom_call.1
$region0: #{tpu_custom_call.1}
  #allocation0 [shape = 'u32[]', space=smem, size = 0x4, offset = 0x4, fixed_abs, tag = 'smem constant byte address 0x4 - core index']
  #allocation1 [shape = 'u32[144,128]{1,0:T(1,128)}', space=vmem, size = 0x12000, scoped, tag = 'internal scratch']
  #allocation2 [shape = 'f32[16,32]{1,0:T(8,128)}', space=vmem, size = 0x2000, scoped, tag = 'scratch operand']
  #allocation3 [shape = 'f32[16,32]{1,0:T(8,128)}', space=vmem, size = 0x2000, scoped, tag = 'scratch operand']
  %s0 = inlined_call_operand.hbm [shape: f32[2,8,32], index: 0, kind: input, shape index: {}]
  %s1 = inlined_call_operand.hbm [shape: f32[2,16,32], index: 1, kind: input, shape index: {}]
  %s2 = inlined_call_operand.hbm [shape: f32[32,32], index: 2, kind: input, shape index: {}]
  %s3 = inlined_call_operand.hbm [shape: f32[32,32], index: 3, kind: input, shape index: {}]
  %s4 = inlined_call_operand.hbm [shape: f32[32,32], index: 4, kind: input, shape index: {}]
  %s5 = inlined_call_operand.hbm [shape: f32[32,32], index: 5, kind: input, shape index: {}]
  %s6 = inlined_call_operand.vmem [shape: f32[1,32], index: 6, kind: input, shape index: {}]
  %s7 = inlined_call_operand.hbm [shape: f32[2,8,32], index: 7, kind: output, shape index: {}]
  %s8 = sld [smem:[#allocation0]]
  $region89: #{tpu_custom_call.1} parent=0
    _
  %s10 = ssub.s32 1, %s8
  %s11 = scalar_select 0, %s10, %s8
  $region1: #{tpu_custom_call.1} parent=0
    #allocation4 [shape = 'u8[8192]{0}', space=vmem, size = 0x2000, scoped, tag = 'input window, operand 0']
    #allocation5 [shape = 's32[2]{0}', space=sflag, size = 0x8, scoped, tag = 'scoped memory for tpu_custom_call.1']
    #allocation6 [shape = 's32[2]{0}', space=sflag, size = 0x8, scoped, tag = 'scoped memory for tpu_custom_call.1']
    #allocation7 [shape = 'u8[16384]{0}', space=vmem, size = 0x4000, scoped, tag = 'input window, operand 1']
    #allocation8 [shape = 's32[2]{0}', space=sflag, size = 0x8, scoped, tag = 'scoped memory for tpu_custom_call.1']
    #allocation9 [shape = 'u8[16384]{0}', space=vmem, size = 0x4000, scoped, tag = 'input window, operand 2, single buffered']
    #allocation10 [shape = 'u8[16384]{0}', space=vmem, size = 0x4000, scoped, tag = 'input window, operand 3, single buffered']
    #allocation11 [shape = 's32[1]{0}', space=sflag, size = 0x4, scoped, tag = 'scoped memory for tpu_custom_call.1']
    #allocation12 [shape = 'u8[16384]{0}', space=vmem, size = 0x4000, scoped, tag = 'input window, operand 4, single buffered']
    #allocation13 [shape = 'u8[16384]{0}', space=vmem, size = 0x4000, scoped, tag = 'input window, operand 5, single buffered']
    #allocation14 [shape = 's32[1]{0}', space=sflag, size = 0x4, scoped, tag = 'scoped memory for tpu_custom_call.1']
    #allocation15 [shape = 'u8[8192]{0}', space=vmem, size = 0x2000, scoped, tag = 'output window, operand 0']
    %12 = vsyncpa [#allocation5], 0
    %s13 = scalar_lea.sflag [#allocation5], 1
    %14 = vsyncpa %s13, 0
    %15 = vsyncpa [#allocation8], 0
    %s16 = scalar_lea.sflag [#allocation8], 1
    %17 = vsyncpa %s16, 0
    %18 = vsyncpa [#allocation11], 0
    %19 = vsyncpa [#allocation14], 0
    %20 = vsyncpa [#allocation6], 0
    %s21 = scalar_lea.sflag [#allocation6], 1
    %22 = vsyncpa %s21, 0
    loop: start=0, step=1, limit=4
    $region2: #{tpu_custom_call.1} parent=1 // loop_pre_header
      _
    $region3: #{tpu_custom_call.1} parent=1 // loop_header
      %s24 = sphi 0, %s28
      %p25 = scmp.ge.s32.totalorder %s24, 4
      %s31 = sphi 0, %s43
      %s32 = sphi 0, %s39
      %s33 = sphi 0, %s31
      %s34 = sphi 0, %s32
      %s35 = sphi 0, %s33
      %s36 = sphi 0, %s34
      %s48 = sphi 0, %s50
      %s51 = sphi 0, %s48
      %s52 = sphi 0, %s51
      %s68 = sphi 0, %s52
      %s74 = sphi 0, %s76
      %s77 = sphi 0, %s74
      %s78 = sphi 0, %s77
      %s94 = sphi 0, %s78
      %s98 = sphi 0, %s98
      %s100 = sphi 0, %s98
      %s101 = sphi 0, %s100
      %s115 = sphi 0, %s101
      %s119 = sphi 0, %s119
      %s121 = sphi 0, %s119
      %s122 = sphi 0, %s121
      %s136 = sphi 0, %s122
      %s140 = sphi 0, %s140
      %s142 = sphi 0, %s140
      %s143 = sphi 0, %s142
      %s157 = sphi 0, %s143
      %s161 = sphi 0, %s161
      %s163 = sphi 0, %s161
      %s164 = sphi 0, %s163
      %s178 = sphi 0, %s164
      %s182 = sphi 0, %s182
      %s184 = sphi 0, %s182
      %s185 = sphi 0, %s184
      %s199 = sphi 0, %s185
      %s207 = sphi 0, %s209
      %s210 = sphi 0, %s207
      %s211 = sphi 0, %s210
      %s227 = sphi 0, %s211
    $region4: #{tpu_custom_call.1} parent=1 // loop_header_branch
      %27 = sbr.rel (%p25) target = $region8
    $region5: #{tpu_custom_call.1} parent=1 // loop_body
      %s29 = ssub.s32 %s24, 1
      %s30 = ssub.s32 %s24, 2
      %s37 = sadd.s32 1, %s32
      %p38 = scmp.ge.s32.totalorder %s37, 1
      %s39 = scalar_select %p38, 0, %s37
      %s40 = sadd.s32 1, %s31
      %s41 = scalar_select %p38, %s40, %s31
      %p42 = scmp.ge.s32.totalorder %s41, 2
      %s43 = scalar_select %p42, 0, %s41
      %s44 = ssub.s32 %s31, %s43
      %s45 = ssub.s32 %s32, %s39
      %s46 = sor.u32 %s44, %s45
      %p47 = scmp.eq.s32.totalorder %s46, 0
      %s49 = sadd.s32 %s48, 1
      %s50 = scalar_select %p47, %s48, %s49
      %p53 = pneg %p47
      %p54 = scmp.eq.s32.totalorder %s24, 1
      %p55 = por %p53, %p54
      %p56 = scmp.ne.s32.totalorder %s48, %s51
      %p57 = scmp.eq.s32.totalorder %s24, 0
      %p58 = por %p56, %p57
      %p59 = scmp.ne.s32.totalorder %s48, %s51
      %p60 = scmp.eq.s32.totalorder %s29, 1
      %p61 = por %p59, %p60
      %p62 = scmp.ne.s32.totalorder %s51, %s52
      %p63 = scmp.eq.s32.totalorder %s29, 0
      %p64 = por %p62, %p63
      %p65 = scmp.ne.s32.totalorder %s51, %s52
      %p66 = scmp.eq.s32.totalorder %s30, 1
      %p67 = por %p65, %p66
      %p69 = scmp.ne.s32.totalorder %s52, %s68
      %p70 = scmp.eq.s32.totalorder %s30, 0
      %p71 = por %p69, %p70
      %s72 = ssub.s32 %s31, %s43
      %p73 = scmp.eq.s32.totalorder %s72, 0
      %s75 = sadd.s32 %s74, 1
      %s76 = scalar_select %p73, %s74, %s75
      %p79 = pneg %p73
      %p80 = scmp.eq.s32.totalorder %s24, 1
      %p81 = por %p79, %p80
      %p82 = scmp.ne.s32.totalorder %s74, %s77
      %p83 = scmp.eq.s32.totalorder %s24, 0
      %p84 = por %p82, %p83
      %p85 = scmp.ne.s32.totalorder %s74, %s77
      %p86 = scmp.eq.s32.totalorder %s29, 1
      %p87 = por %p85, %p86
      %p88 = scmp.ne.s32.totalorder %s77, %s78
      %p89 = scmp.eq.s32.totalorder %s29, 0
      %p90 = por %p88, %p89
      %p91 = scmp.ne.s32.totalorder %s77, %s78
      %p92 = scmp.eq.s32.totalorder %s30, 1
      %p93 = por %p91, %p92
      %p95 = scmp.ne.s32.totalorder %s78, %s94
      %p96 = scmp.eq.s32.totalorder %s30, 0
      %p97 = por %p95, %p96
      %s99 = sadd.s32 %s98, 1
      %p102 = scmp.eq.s32.totalorder %s24, 1
      %p103 = scmp.ne.s32.totalorder %s98, %s100
      %p104 = scmp.eq.s32.totalorder %s24, 0
      %p105 = por %p103, %p104
      %p106 = scmp.ne.s32.totalorder %s98, %s100
      %p107 = scmp.eq.s32.totalorder %s29, 1
      %p108 = por %p106, %p107
      %p109 = scmp.ne.s32.totalorder %s100, %s101
      %p110 = scmp.eq.s32.totalorder %s29, 0
      %p111 = por %p109, %p110
      %p112 = scmp.ne.s32.totalorder %s100, %s101
      %p113 = scmp.eq.s32.totalorder %s30, 1
      %p114 = por %p112, %p113
      %p116 = scmp.ne.s32.totalorder %s101, %s115
      %p117 = scmp.eq.s32.totalorder %s30, 0
      %p118 = por %p116, %p117
      %s120 = sadd.s32 %s119, 1
      %p123 = scmp.eq.s32.totalorder %s24, 1
      %p124 = scmp.ne.s32.totalorder %s119, %s121
      %p125 = scmp.eq.s32.totalorder %s24, 0
      %p126 = por %p124, %p125
      %p127 = scmp.ne.s32.totalorder %s119, %s121
      %p128 = scmp.eq.s32.totalorder %s29, 1
      %p129 = por %p127, %p128
      %p130 = scmp.ne.s32.totalorder %s121, %s122
      %p131 = scmp.eq.s32.totalorder %s29, 0
      %p132 = por %p130, %p131
      %p133 = scmp.ne.s32.totalorder %s121, %s122
      %p134 = scmp.eq.s32.totalorder %s30, 1
      %p135 = por %p133, %p134
      %p137 = scmp.ne.s32.totalorder %s122, %s136
      %p138 = scmp.eq.s32.totalorder %s30, 0
      %p139 = por %p137, %p138
      %s141 = sadd.s32 %s140, 1
      %p144 = scmp.eq.s32.totalorder %s24, 1
      %p145 = scmp.ne.s32.totalorder %s140, %s142
      %p146 = scmp.eq.s32.totalorder %s24, 0
      %p147 = por %p145, %p146
      %p148 = scmp.ne.s32.totalorder %s140, %s142
      %p149 = scmp.eq.s32.totalorder %s29, 1
      %p150 = por %p148, %p149
      %p151 = scmp.ne.s32.totalorder %s142, %s143
      %p152 = scmp.eq.s32.totalorder %s29, 0
      %p153 = por %p151, %p152
      %p154 = scmp.ne.s32.totalorder %s142, %s143
      %p155 = scmp.eq.s32.totalorder %s30, 1
      %p156 = por %p154, %p155
      %p158 = scmp.ne.s32.totalorder %s143, %s157
      %p159 = scmp.eq.s32.totalorder %s30, 0
      %p160 = por %p158, %p159
      %s162 = sadd.s32 %s161, 1
      %p165 = scmp.eq.s32.totalorder %s24, 1
      %p166 = scmp.ne.s32.totalorder %s161, %s163
      %p167 = scmp.eq.s32.totalorder %s24, 0
      %p168 = por %p166, %p167
      %p169 = scmp.ne.s32.totalorder %s161, %s163
      %p170 = scmp.eq.s32.totalorder %s29, 1
      %p171 = por %p169, %p170
      %p172 = scmp.ne.s32.totalorder %s163, %s164
      %p173 = scmp.eq.s32.totalorder %s29, 0
      %p174 = por %p172, %p173
      %p175 = scmp.ne.s32.totalorder %s163, %s164
      %p176 = scmp.eq.s32.totalorder %s30, 1
      %p177 = por %p175, %p176
      %p179 = scmp.ne.s32.totalorder %s164, %s178
      %p180 = scmp.eq.s32.totalorder %s30, 0
      %p181 = por %p179, %p180
      %s183 = sadd.s32 %s182, 1
      %p186 = scmp.eq.s32.totalorder %s24, 1
      %p187 = scmp.ne.s32.totalorder %s182, %s184
      %p188 = scmp.eq.s32.totalorder %s24, 0
      %p189 = por %p187, %p188
      %p190 = scmp.ne.s32.totalorder %s182, %s184
      %p191 = scmp.eq.s32.totalorder %s29, 1
      %p192 = por %p190, %p191
      %p193 = scmp.ne.s32.totalorder %s184, %s185
      %p194 = scmp.eq.s32.totalorder %s29, 0
      %p195 = por %p193, %p194
      %p196 = scmp.ne.s32.totalorder %s184, %s185
      %p197 = scmp.eq.s32.totalorder %s30, 1
      %p198 = por %p196, %p197
      %p200 = scmp.ne.s32.totalorder %s185, %s199
      %p201 = scmp.eq.s32.totalorder %s30, 0
      %p202 = por %p200, %p201
      %s203 = ssub.s32 %s31, %s43
      %s204 = ssub.s32 %s32, %s39
      %s205 = sor.u32 %s203, %s204
      %p206 = scmp.eq.s32.totalorder %s205, 0
      %s208 = sadd.s32 %s207, 1
      %s209 = scalar_select %p206, %s207, %s208
      %p212 = pneg %p206
      %p213 = scmp.eq.s32.totalorder %s24, 1
      %p214 = por %p212, %p213
      %p215 = scmp.ne.s32.totalorder %s207, %s210
      %p216 = scmp.eq.s32.totalorder %s24, 0
      %p217 = por %p215, %p216
      %p218 = scmp.ne.s32.totalorder %s207, %s210
      %p219 = scmp.eq.s32.totalorder %s29, 1
      %p220 = por %p218, %p219
      %p221 = scmp.ne.s32.totalorder %s210, %s211
      %p222 = scmp.eq.s32.totalorder %s29, 0
      %p223 = por %p221, %p222
      %p224 = scmp.ne.s32.totalorder %s210, %s211
      %p225 = scmp.eq.s32.totalorder %s30, 1
      %p226 = por %p224, %p225
      %p228 = scmp.ne.s32.totalorder %s211, %s227
      %p229 = scmp.eq.s32.totalorder %s30, 0
      %p230 = por %p228, %p229
      %p231 = scmp.le.s32.totalorder 1, %s24
      %p232 = scmp.lt.s32.totalorder %s24, 3
      %p233 = pnand %p231, %p232
      %p234 = pneg %p233
      // Predicated region
      $region9: #{tpu_custom_call.1} parent=5 // pred_check
        _
      $region10: #{tpu_custom_call.1} parent=5 // pred_check_branch
        %236 = sbr.rel (%p233) target = $region12
      $region11: #{tpu_custom_call.1} parent=5 // pred_region
        %s237 = ssub.s32 %s24, 1
        // Predicated region
        $region13: #{tpu_custom_call.1} parent=11 // pred_check
          %p238 = pneg %p111
        $region14: #{tpu_custom_call.1} parent=11 // pred_check_branch
          %240 = sbr.rel (%p238) target = $region16
        $region15: #{tpu_custom_call.1} parent=11 // pred_region
          %s242 = ssub.s32 512, 512
          %243 = vsyncadd [#allocation8], %s242
          %s244 = sshll.u32 [#allocation9], 4
          %s245 = int_to_ptr.vmem [resolvable:$true] %s244
          %250 = dma.hbm_to_vmem [thread:$0]  %s2, 512, %s245, [#allocation8], 128, 128, 8
        $region16: #{tpu_custom_call.1} parent=11 // pred_fallthru
          _
        // Predicated region
        $region17: #{tpu_custom_call.1} parent=11 // pred_check
          %p251 = pneg %p132
        $region18: #{tpu_custom_call.1} parent=11 // pred_check_branch
          %253 = sbr.rel (%p251) target = $region20
        $region19: #{tpu_custom_call.1} parent=11 // pred_region
          %s255 = ssub.s32 512, 512
          %256 = vsyncadd [#allocation11], %s255
          %s257 = sshll.u32 [#allocation10], 4
          %s258 = int_to_ptr.vmem [resolvable:$true] %s257
          %263 = dma.hbm_to_vmem [thread:$0]  %s3, 512, %s258, [#allocation11], 128, 128, 8
        $region20: #{tpu_custom_call.1} parent=11 // pred_fallthru
          _
        // Predicated region
        $region21: #{tpu_custom_call.1} parent=11 // pred_check
          %p264 = pneg %p153
        $region22: #{tpu_custom_call.1} parent=11 // pred_check_branch
          %266 = sbr.rel (%p264) target = $region24
        $region23: #{tpu_custom_call.1} parent=11 // pred_region
          %s268 = ssub.s32 512, 512
          %269 = vsyncadd [#allocation11], %s268
          %s270 = sshll.u32 [#allocation12], 4
          %s271 = int_to_ptr.vmem [resolvable:$true] %s270
          %276 = dma.hbm_to_vmem [thread:$0]  %s4, 512, %s271, [#allocation11], 128, 128, 8
        $region24: #{tpu_custom_call.1} parent=11 // pred_fallthru
          _
        // Predicated region
        $region25: #{tpu_custom_call.1} parent=11 // pred_check
          %p277 = pneg %p174
        $region26: #{tpu_custom_call.1} parent=11 // pred_check_branch
          %279 = sbr.rel (%p277) target = $region28
        $region27: #{tpu_custom_call.1} parent=11 // pred_region
          %s281 = ssub.s32 512, 512
          %282 = vsyncadd [#allocation14], %s281
          %s283 = sshll.u32 [#allocation13], 4
          %s284 = int_to_ptr.vmem [resolvable:$true] %s283
          %289 = dma.hbm_to_vmem [thread:$0]  %s5, 512, %s284, [#allocation14], 128, 128, 8
        $region28: #{tpu_custom_call.1} parent=11 // pred_fallthru
          _
        // Predicated region
        $region29: #{tpu_custom_call.1} parent=11 // pred_check
          %p290 = pneg %p195
        $region30: #{tpu_custom_call.1} parent=11 // pred_check_branch
          %292 = sbr.rel (%p290) target = $region32
        $region31: #{tpu_custom_call.1} parent=11 // pred_region
          _
        $region32: #{tpu_custom_call.1} parent=11 // pred_fallthru
          _
      $region12: #{tpu_custom_call.1} parent=5 // pred_fallthru
        _
      %p293 = scmp.lt.s32.totalorder %s24, 2
      // Predicated region
      $region33: #{tpu_custom_call.1} parent=5 // pred_check
        %p294 = pneg %p293
      $region34: #{tpu_custom_call.1} parent=5 // pred_check_branch
        %296 = sbr.rel (%p294) target = $region36
      $region35: #{tpu_custom_call.1} parent=5 // pred_region
        // Predicated region
        $region37: #{tpu_custom_call.1} parent=35 // pred_check
          %p297 = pneg %p58
        $region38: #{tpu_custom_call.1} parent=35 // pred_check_branch
          %299 = sbr.rel (%p297) target = $region40
        $region39: #{tpu_custom_call.1} parent=35 // pred_region
          %s300 = sand.u32 %s48, 1
          %s301 = scalar_lea.sflag [#allocation5], %s300
          %s302 = sand.u32 %s48, 1
          %s303 = smul.addr %s302, 8
          %s304 = scalar_lea.vmem [#allocation4], %s303
          %s306 = ssub.s32 128, 128
          %307 = vsyncadd %s301, %s306
          %s308 = sadd.s32 %s32, %s31
          %s309 = smul.addr %s308, 128
          %s310 = scalar_lea.hbm %s0, %s309
          %s312 = sshll.u32 %s304, 4
          %s313 = int_to_ptr.vmem [resolvable:$true] %s312
          %315 = dma.hbm_to_vmem [thread:$0]  %s310, 128, %s313, %s301
        $region40: #{tpu_custom_call.1} parent=35 // pred_fallthru
          _
        // Predicated region
        $region41: #{tpu_custom_call.1} parent=35 // pred_check
          %p316 = pneg %p84
        $region42: #{tpu_custom_call.1} parent=35 // pred_check_branch
          %318 = sbr.rel (%p316) target = $region44
        $region43: #{tpu_custom_call.1} parent=35 // pred_region
          %s319 = sand.u32 %s24, 1
          %s320 = scalar_lea.sflag [#allocation8], %s319
          %s321 = sand.u32 %s74, 1
          %s322 = smul.addr %s321, 16
          %s323 = scalar_lea.vmem [#allocation7], %s322
          %s325 = ssub.s32 256, 256
          %326 = vsyncadd %s320, %s325
          %s327 = smul.addr %s31, 2
          %s328 = smul.addr %s327, 128
          %s329 = scalar_lea.hbm %s1, %s328
          %s330 = sshll.u32 %s323, 4
          %s331 = int_to_ptr.vmem [resolvable:$true] %s330
          %336 = dma.hbm_to_vmem [thread:$0]  %s329, 256, %s331, %s320, 128, 128, 8
        $region44: #{tpu_custom_call.1} parent=35 // pred_fallthru
          _
      $region36: #{tpu_custom_call.1} parent=5 // pred_fallthru
        _
      %p337 = scmp.le.s32.totalorder 1, %s24
      %p338 = scmp.lt.s32.totalorder %s24, 3
      %p339 = pnand %p337, %p338
      %p340 = pneg %p339
      // Predicated region
      $region45: #{tpu_custom_call.1} parent=5 // pred_check
        _
      $region46: #{tpu_custom_call.1} parent=5 // pred_check_branch
        %342 = sbr.rel (%p339) target = $region48
      $region47: #{tpu_custom_call.1} parent=5 // pred_region
        %s343 = ssub.s32 %s24, 1
        %s344 = sand.u32 %s51, 1
        %s345 = scalar_lea.sflag [#allocation5], %s344
        %s346 = sand.u32 %s51, 1
        %s347 = smul.addr %s346, 8
        %s348 = scalar_lea.vmem [#allocation4], %s347
        // Predicated region
        $region49: #{tpu_custom_call.1} parent=47 // pred_check
          %p349 = pneg %p64
        $region50: #{tpu_custom_call.1} parent=47 // pred_check_branch
          %351 = sbr.rel (%p349) target = $region52
        $region51: #{tpu_custom_call.1} parent=47 // pred_region
          %352 = dma.done %s345, 128
        $region52: #{tpu_custom_call.1} parent=47 // pred_fallthru
          _
        %s353 = sand.u32 %s29, 1
        %s354 = scalar_lea.sflag [#allocation8], %s353
        %s355 = sand.u32 %s77, 1
        %s356 = smul.addr %s355, 16
        %s357 = scalar_lea.vmem [#allocation7], %s356
        // Predicated region
        $region53: #{tpu_custom_call.1} parent=47 // pred_check
          %p358 = pneg %p90
        $region54: #{tpu_custom_call.1} parent=47 // pred_check_branch
          %360 = sbr.rel (%p358) target = $region56
        $region55: #{tpu_custom_call.1} parent=47 // pred_region
          %361 = dma.done %s354, 256
        $region56: #{tpu_custom_call.1} parent=47 // pred_fallthru
          _
        // Predicated region
        $region57: #{tpu_custom_call.1} parent=47 // pred_check
          %p362 = pneg %p111
        $region58: #{tpu_custom_call.1} parent=47 // pred_check_branch
          %364 = sbr.rel (%p362) target = $region60
        $region59: #{tpu_custom_call.1} parent=47 // pred_region
          %365 = dma.done [#allocation8], 512
        $region60: #{tpu_custom_call.1} parent=47 // pred_fallthru
          _
        // Predicated region
        $region61: #{tpu_custom_call.1} parent=47 // pred_check
          %p366 = pneg %p132
        $region62: #{tpu_custom_call.1} parent=47 // pred_check_branch
          %368 = sbr.rel (%p366) target = $region64
        $region63: #{tpu_custom_call.1} parent=47 // pred_region
          %369 = dma.done [#allocation11], 512
        $region64: #{tpu_custom_call.1} parent=47 // pred_fallthru
          _
        // Predicated region
        $region65: #{tpu_custom_call.1} parent=47 // pred_check
          %p370 = pneg %p153
        $region66: #{tpu_custom_call.1} parent=47 // pred_check_branch
          %372 = sbr.rel (%p370) target = $region68
        $region67: #{tpu_custom_call.1} parent=47 // pred_region
          %373 = dma.done [#allocation11], 512
        $region68: #{tpu_custom_call.1} parent=47 // pred_fallthru
          _
        // Predicated region
        $region69: #{tpu_custom_call.1} parent=47 // pred_check
          %p374 = pneg %p174
        $region70: #{tpu_custom_call.1} parent=47 // pred_check_branch
          %376 = sbr.rel (%p374) target = $region72
        $region71: #{tpu_custom_call.1} parent=47 // pred_region
          %377 = dma.done [#allocation14], 512
        $region72: #{tpu_custom_call.1} parent=47 // pred_fallthru
          _
        %s378 = sand.u32 %s51, 1
        %s379 = scalar_lea.sflag [#allocation5], %s378
        %s380 = sand.u32 %s51, 1
        %s381 = smul.addr %s380, 8
        %s382 = scalar_lea.vmem [#allocation4], %s381
        %p383 = pneg %p64
        %p384 = pneg %p61
        %s385 = sand.u32 %s29, 1
        %s386 = scalar_lea.sflag [#allocation8], %s385
        %s387 = sand.u32 %s77, 1
        %s388 = smul.addr %s387, 16
        %s389 = scalar_lea.vmem [#allocation7], %s388
        %p390 = pneg %p90
        %p391 = pneg %p87
        %p392 = pneg %p111
        %p393 = pneg %p108
        %p394 = pneg %p132
        %p395 = pneg %p129
        %p396 = pneg %p153
        %p397 = pneg %p150
        %p398 = pneg %p174
        %p399 = pneg %p171
        %p400 = pneg %p195
        %p401 = pneg %p192
        %p402 = pneg %p223
        %p403 = pneg %p220
        %s404 = sand.u32 %s210, 1
        %s405 = scalar_lea.sflag [#allocation6], %s404
        %s406 = sand.u32 %s210, 1
        %s407 = smul.addr %s406, 8
        %s408 = scalar_lea.vmem [#allocation15], %s407
        %p409 = scmp.eq.s32.totalorder %s34, 0
        // Predicated region
        $region73: #{tpu_custom_call.1} parent=47 // pred_check
          %p410 = pneg %p409
        $region74: #{tpu_custom_call.1} parent=47 // pred_check_branch
          %412 = sbr.rel (%p410) target = $region76
        $region75: #{tpu_custom_call.1} parent=47 // pred_region
          %v413 = vld [vmem:[%s357] sm:$0xff]
          %v414 = vld [vmem:[%s357 + $0x8] sm:$0xff]
          %v415 = vld [vmem:[#allocation10] sm:$0xff]
          %v416 = vld [vmem:[#allocation10 + $0x8] sm:$0xff]
          %v417 = vld [vmem:[#allocation10 + $0x10] sm:$0xff]
          %v418 = vld [vmem:[#allocation10 + $0x18] sm:$0xff]
          %vm419 = vcmask 261120
          %v421 = vsel %vm419, %v413, 0
          %v424 = vsel %vm419, %v414, 0
          %426 = vmatprep.subr.mxu0 0.0
          %427 = vmatpush1.msra.mxu0 0.0
          %428 = vmatprep.subr.mxu0 0.0
          %429 = vmatpush1.msra.mxu0 0.0
          %430 = vmatprep.subr.mxu0 0.0
          %431 = vmatpush1.msra.mxu0 0.0
          %432 = vmatprep.subr.mxu0 0.0
          %433 = vmatpush1.msra.mxu0 0.0
          %434 = vmatprep.subr.mxu0 0.0
          %435 = vmatpush1.msra.mxu0 0.0
          %436 = vmatprep.subr.mxu0 0.0
          %437 = vmatpush1.msra.mxu0 0.0
          %438 = vmatprep.subr.mxu0 0.0
          %439 = vmatpush1.msra.mxu0 0.0
          %440 = vmatprep.subr.mxu0 0.0
          %441 = vmatpush1.msra.mxu0 0.0
          %442 = vmatprep.subr.mxu0 0.0
          %443 = vmatpush1.msra.mxu0 0.0
          %444 = vmatprep.subr.mxu0 0.0
          %445 = vmatpush1.msra.mxu0 0.0
          %446 = vmatprep.subr.mxu0 0.0
          %447 = vmatpush1.msra.mxu0 0.0
          %448 = vmatprep.subr.mxu0 0.0
          %449 = vmatpush1.msra.mxu0 0.0
          %450 = vmatprep.subr.mxu0 0.0
          %451 = vmatpush1.msra.mxu0 %v418
          %452 = vmatprep.subr.mxu0 0.0
          %453 = vmatpush1.msra.mxu0 %v417
          %454 = vmatprep.subr.mxu0 0.0
          %455 = vmatpush1.msra.mxu0 %v416
          %456 = vmatprep.subr.mxu0 0.0
          %457 = vmatpush1.msra.mxu0 %v415
          %458 = vmatprep.subr.mxu0 0.0
          %459 = vmatpush2.msra.mxu0 0.0
          %460 = vmatprep.subr.mxu0 0.0
          %461 = vmatpush2.msra.mxu0 0.0
          %462 = vmatprep.subr.mxu0 0.0
          %463 = vmatpush2.msra.mxu0 0.0
          %464 = vmatprep.subr.mxu0 0.0
          %465 = vmatpush2.msra.mxu0 0.0
          %466 = vmatprep.subr.mxu0 0.0
          %467 = vmatpush2.msra.mxu0 0.0
          %468 = vmatprep.subr.mxu0 0.0
          %469 = vmatpush2.msra.mxu0 0.0
          %470 = vmatprep.subr.mxu0 0.0
          %471 = vmatpush2.msra.mxu0 0.0
          %472 = vmatprep.subr.mxu0 0.0
          %473 = vmatpush2.msra.mxu0 0.0
          %474 = vmatprep.subr.mxu0 0.0
          %475 = vmatpush2.msra.mxu0 0.0
          %476 = vmatprep.subr.mxu0 0.0
          %477 = vmatpush2.msra.mxu0 0.0
          %478 = vmatprep.subr.mxu0 0.0
          %479 = vmatpush2.msra.mxu0 0.0
          %480 = vmatprep.subr.mxu0 0.0
          %481 = vmatpush2.msra.mxu0 0.0
          %482 = vmatprep.subr.mxu0 0.0
          %483 = vmatpush2.msra.mxu0 0.0
          %484 = vmatprep.subr.mxu0 0.0
          %485 = vmatpush2.msra.mxu0 0.0
          %486 = vmatprep.subr.mxu0 0.0
          %487 = vmatpush2.msra.mxu0 0.0
          %488 = vmatprep.subr.mxu0 0.0
          %489 = vmatpush2.msra.mxu0 0.0
          %490 = vmatprep.mubr.f32.mxu0 0.0
          %491 = vmatmul.mubr.f32.gmra.mxu0 %v421
          %v492 = vpop.f32.mrf.mxu0
          %v493 = vadd.f32 0.0, %v492
          %v494 = vpop.f32.mrf.mxu0
          %495 = vmatprep.mubr.f32.mxu0 0.0
          %496 = vmatmul.mubr.f32.gmra.mxu0 %v424
          %v497 = vpop.f32.mrf.mxu0
          %v498 = vadd.f32 0.0, %v497
          %v499 = vpop.f32.mrf.mxu0
          %500 = vdwg.mxu0
          %501 = vst.msk [vmem:[#allocation2] sm:$0xff] %vm419, %v493
          %502 = vst.msk [vmem:[#allocation2 + $0x8] sm:$0xff] %vm419, %v498
          %v503 = vld [vmem:[#allocation12] sm:$0xff]
          %v504 = vld [vmem:[#allocation12 + $0x8] sm:$0xff]
          %v505 = vld [vmem:[#allocation12 + $0x10] sm:$0xff]
          %v506 = vld [vmem:[#allocation12 + $0x18] sm:$0xff]
          %507 = vmatprep.subr.mxu0 0.0
          %508 = vmatpush1.msra.mxu0 0.0
          %509 = vmatprep.subr.mxu0 0.0
          %510 = vmatpush1.msra.mxu0 0.0
          %511 = vmatprep.subr.mxu0 0.0
          %512 = vmatpush1.msra.mxu0 0.0
          %513 = vmatprep.subr.mxu0 0.0
          %514 = vmatpush1.msra.mxu0 0.0
          %515 = vmatprep.subr.mxu0 0.0
          %516 = vmatpush1.msra.mxu0 0.0
          %517 = vmatprep.subr.mxu0 0.0
          %518 = vmatpush1.msra.mxu0 0.0
          %519 = vmatprep.subr.mxu0 0.0
          %520 = vmatpush1.msra.mxu0 0.0
          %521 = vmatprep.subr.mxu0 0.0
          %522 = vmatpush1.msra.mxu0 0.0
          %523 = vmatprep.subr.mxu0 0.0
          %524 = vmatpush1.msra.mxu0 0.0
          %525 = vmatprep.subr.mxu0 0.0
          %526 = vmatpush1.msra.mxu0 0.0
          %527 = vmatprep.subr.mxu0 0.0
          %528 = vmatpush1.msra.mxu0 0.0
          %529 = vmatprep.subr.mxu0 0.0
          %530 = vmatpush1.msra.mxu0 0.0
          %531 = vmatprep.subr.mxu0 0.0
          %532 = vmatpush1.msra.mxu0 %v506
          %533 = vmatprep.subr.mxu0 0.0
          %534 = vmatpush1.msra.mxu0 %v505
          %535 = vmatprep.subr.mxu0 0.0
          %536 = vmatpush1.msra.mxu0 %v504
          %537 = vmatprep.subr.mxu0 0.0
          %538 = vmatpush1.msra.mxu0 %v503
          %539 = vmatprep.subr.mxu0 0.0
          %540 = vmatpush2.msra.mxu0 0.0
          %541 = vmatprep.subr.mxu0 0.0
          %542 = vmatpush2.msra.mxu0 0.0
          %543 = vmatprep.subr.mxu0 0.0
          %544 = vmatpush2.msra.mxu0 0.0
          %545 = vmatprep.subr.mxu0 0.0
          %546 = vmatpush2.msra.mxu0 0.0
          %547 = vmatprep.subr.mxu0 0.0
          %548 = vmatpush2.msra.mxu0 0.0
          %549 = vmatprep.subr.mxu0 0.0
          %550 = vmatpush2.msra.mxu0 0.0
          %551 = vmatprep.subr.mxu0 0.0
          %552 = vmatpush2.msra.mxu0 0.0
          %553 = vmatprep.subr.mxu0 0.0
          %554 = vmatpush2.msra.mxu0 0.0
          %555 = vmatprep.subr.mxu0 0.0
          %556 = vmatpush2.msra.mxu0 0.0
          %557 = vmatprep.subr.mxu0 0.0
          %558 = vmatpush2.msra.mxu0 0.0
          %559 = vmatprep.subr.mxu0 0.0
          %560 = vmatpush2.msra.mxu0 0.0
          %561 = vmatprep.subr.mxu0 0.0
          %562 = vmatpush2.msra.mxu0 0.0
          %563 = vmatprep.subr.mxu0 0.0
          %564 = vmatpush2.msra.mxu0 0.0
          %565 = vmatprep.subr.mxu0 0.0
          %566 = vmatpush2.msra.mxu0 0.0
          %567 = vmatprep.subr.mxu0 0.0
          %568 = vmatpush2.msra.mxu0 0.0
          %569 = vmatprep.subr.mxu0 0.0
          %570 = vmatpush2.msra.mxu0 0.0
          %571 = vmatprep.mubr.f32.mxu0 0.0
          %572 = vmatmul.mubr.f32.gmra.mxu0 %v421
          %v573 = vpop.f32.mrf.mxu0
          %v574 = vadd.f32 0.0, %v573
          %v575 = vpop.f32.mrf.mxu0
          %576 = vmatprep.mubr.f32.mxu0 0.0
          %577 = vmatmul.mubr.f32.gmra.mxu0 %v424
          %v578 = vpop.f32.mrf.mxu0
          %v579 = vadd.f32 0.0, %v578
          %v580 = vpop.f32.mrf.mxu0
          %581 = vdwg.mxu0
          %582 = vst.msk [vmem:[#allocation3] sm:$0xff] %vm419, %v574
          %583 = vst.msk [vmem:[#allocation3 + $0x8] sm:$0xff] %vm419, %v579
        $region76: #{tpu_custom_call.1} parent=47 // pred_fallthru
          _
        %v584 = vld [vmem:[%s348] sm:$0xff]
        %v585 = vld [vmem:[#allocation9] sm:$0xff]
        %v586 = vld [vmem:[#allocation9 + $0x8] sm:$0xff]
        %v587 = vld [vmem:[#allocation9 + $0x10] sm:$0xff]
        %v588 = vld [vmem:[#allocation9 + $0x18] sm:$0xff]
        %vm589 = vcmask 261120
        %v591 = vsel %vm589, %v584, 0
        %593 = vmatprep.subr.mxu0 0.0
        %594 = vmatpush1.msra.mxu0 0.0
        %595 = vmatprep.subr.mxu0 0.0
        %596 = vmatpush1.msra.mxu0 0.0
        %597 = vmatprep.subr.mxu0 0.0
        %598 = vmatpush1.msra.mxu0 0.0
        %599 = vmatprep.subr.mxu0 0.0
        %600 = vmatpush1.msra.mxu0 0.0
        %601 = vmatprep.subr.mxu0 0.0
        %602 = vmatpush1.msra.mxu0 0.0
        %603 = vmatprep.subr.mxu0 0.0
        %604 = vmatpush1.msra.mxu0 0.0
        %605 = vmatprep.subr.mxu0 0.0
        %606 = vmatpush1.msra.mxu0 0.0
        %607 = vmatprep.subr.mxu0 0.0
        %608 = vmatpush1.msra.mxu0 0.0
        %609 = vmatprep.subr.mxu0 0.0
        %610 = vmatpush1.msra.mxu0 0.0
        %611 = vmatprep.subr.mxu0 0.0
        %612 = vmatpush1.msra.mxu0 0.0
        %613 = vmatprep.subr.mxu0 0.0
        %614 = vmatpush1.msra.mxu0 0.0
        %615 = vmatprep.subr.mxu0 0.0
        %616 = vmatpush1.msra.mxu0 0.0
        %617 = vmatprep.subr.mxu0 0.0
        %618 = vmatpush1.msra.mxu0 %v588
        %619 = vmatprep.subr.mxu0 0.0
        %620 = vmatpush1.msra.mxu0 %v587
        %621 = vmatprep.subr.mxu0 0.0
        %622 = vmatpush1.msra.mxu0 %v586
        %623 = vmatprep.subr.mxu0 0.0
        %624 = vmatpush1.msra.mxu0 %v585
        %625 = vmatprep.subr.mxu0 0.0
        %626 = vmatpush2.msra.mxu0 0.0
        %627 = vmatprep.subr.mxu0 0.0
        %628 = vmatpush2.msra.mxu0 0.0
        %629 = vmatprep.subr.mxu0 0.0
        %630 = vmatpush2.msra.mxu0 0.0
        %631 = vmatprep.subr.mxu0 0.0
        %632 = vmatpush2.msra.mxu0 0.0
        %633 = vmatprep.subr.mxu0 0.0
        %634 = vmatpush2.msra.mxu0 0.0
        %635 = vmatprep.subr.mxu0 0.0
        %636 = vmatpush2.msra.mxu0 0.0
        %637 = vmatprep.subr.mxu0 0.0
        %638 = vmatpush2.msra.mxu0 0.0
        %639 = vmatprep.subr.mxu0 0.0
        %640 = vmatpush2.msra.mxu0 0.0
        %641 = vmatprep.subr.mxu0 0.0
        %642 = vmatpush2.msra.mxu0 0.0
        %643 = vmatprep.subr.mxu0 0.0
        %644 = vmatpush2.msra.mxu0 0.0
        %645 = vmatprep.subr.mxu0 0.0
        %646 = vmatpush2.msra.mxu0 0.0
        %647 = vmatprep.subr.mxu0 0.0
        %648 = vmatpush2.msra.mxu0 0.0
        %649 = vmatprep.subr.mxu0 0.0
        %650 = vmatpush2.msra.mxu0 0.0
        %651 = vmatprep.subr.mxu0 0.0
        %652 = vmatpush2.msra.mxu0 0.0
        %653 = vmatprep.subr.mxu0 0.0
        %654 = vmatpush2.msra.mxu0 0.0
        %655 = vmatprep.subr.mxu0 0.0
        %656 = vmatpush2.msra.mxu0 0.0
        %657 = vmatprep.mubr.f32.mxu0 0.0
        %658 = vmatmul.mubr.f32.gmra.mxu0 %v591
        %v659 = vpop.f32.mrf.mxu0
        %v660 = vadd.f32 0.0, %v659
        %v661 = vpop.f32.mrf.mxu0
        %662 = vdwg.mxu0
        %v663 = vmul.f32 %v660, 0.5
        %v664 = vld [vmem:[#allocation2] sm:$0xff]
        %v665 = vld [vmem:[#allocation2 + $0x8] sm:$0xff]
        %v666 = vld [vmem:[#allocation3] sm:$0xff]
        %v667 = vld [vmem:[#allocation3 + $0x8] sm:$0xff]
        %v668 = vld [vmem:[#allocation13] sm:$0xff]
        %v669 = vld [vmem:[#allocation13 + $0x8] sm:$0xff]
        %v670 = vld [vmem:[#allocation13 + $0x10] sm:$0xff]
        %v671 = vld [vmem:[#allocation13 + $0x18] sm:$0xff]
        %vm672 = vcmask 31744
        %v674 = vsel %vm672, %v663, 0
        %v677 = vsel %vm672, %v664, 0
        %v680 = vsel %vm672, %v665, 0
        %682 = vmatprep.subr.mxu0 0.0
        %683 = vmatpush1.xpose.msra.mxu0 0.0
        %684 = vmatprep.subr.mxu0 0.0
        %685 = vmatpush1.xpose.msra.mxu0 0.0
        %686 = vmatprep.subr.mxu0 0.0
        %687 = vmatpush1.xpose.msra.mxu0 0.0
        %688 = vmatprep.subr.mxu0 0.0
        %689 = vmatpush1.xpose.msra.mxu0 0.0
        %690 = vmatprep.subr.mxu0 0.0
        %691 = vmatpush1.xpose.msra.mxu0 0.0
        %692 = vmatprep.subr.mxu0 0.0
        %693 = vmatpush1.xpose.msra.mxu0 0.0
        %694 = vmatprep.subr.mxu0 0.0
        %695 = vmatpush1.xpose.msra.mxu0 0.0
        %696 = vmatprep.subr.mxu0 0.0
        %697 = vmatpush1.xpose.msra.mxu0 0.0
        %698 = vmatprep.subr.mxu0 0.0
        %699 = vmatpush1.xpose.msra.mxu0 0.0
        %700 = vmatprep.subr.mxu0 0.0
        %701 = vmatpush1.xpose.msra.mxu0 0.0
        %702 = vmatprep.subr.mxu0 0.0
        %703 = vmatpush1.xpose.msra.mxu0 0.0
        %704 = vmatprep.subr.mxu0 0.0
        %705 = vmatpush1.xpose.msra.mxu0 0.0
        %706 = vmatprep.subr.mxu0 0.0
        %707 = vmatpush1.xpose.msra.mxu0 0.0
        %708 = vmatprep.subr.mxu0 0.0
        %709 = vmatpush1.xpose.msra.mxu0 0.0
        %710 = vmatprep.subr.mxu0 0.0
        %711 = vmatpush1.xpose.msra.mxu0 %v680
        %712 = vmatprep.subr.mxu0 0.0
        %713 = vmatpush1.xpose.msra.mxu0 %v677
        %714 = vmatprep.subr.mxu0 0.0
        %715 = vmatpush2.xpose.msra.mxu0 0.0
        %716 = vmatprep.subr.mxu0 0.0
        %717 = vmatpush2.xpose.msra.mxu0 0.0
        %718 = vmatprep.subr.mxu0 0.0
        %719 = vmatpush2.xpose.msra.mxu0 0.0
        %720 = vmatprep.subr.mxu0 0.0
        %721 = vmatpush2.xpose.msra.mxu0 0.0
        %722 = vmatprep.subr.mxu0 0.0
        %723 = vmatpush2.xpose.msra.mxu0 0.0
        %724 = vmatprep.subr.mxu0 0.0
        %725 = vmatpush2.xpose.msra.mxu0 0.0
        %726 = vmatprep.subr.mxu0 0.0
        %727 = vmatpush2.xpose.msra.mxu0 0.0
        %728 = vmatprep.subr.mxu0 0.0
        %729 = vmatpush2.xpose.msra.mxu0 0.0
        %730 = vmatprep.subr.mxu0 0.0
        %731 = vmatpush2.xpose.msra.mxu0 0.0
        %732 = vmatprep.subr.mxu0 0.0
        %733 = vmatpush2.xpose.msra.mxu0 0.0
        %734 = vmatprep.subr.mxu0 0.0
        %735 = vmatpush2.xpose.msra.mxu0 0.0
        %736 = vmatprep.subr.mxu0 0.0
        %737 = vmatpush2.xpose.msra.mxu0 0.0
        %738 = vmatprep.subr.mxu0 0.0
        %739 = vmatpush2.xpose.msra.mxu0 0.0
        %740 = vmatprep.subr.mxu0 0.0
        %741 = vmatpush2.xpose.msra.mxu0 0.0
        %742 = vmatprep.subr.mxu0 0.0
        %743 = vmatpush2.xpose.msra.mxu0 0.0
        %744 = vmatprep.subr.mxu0 0.0
        %745 = vmatpush2.xpose.msra.mxu0 0.0
        %746 = vmatprep.mubr.f32.mxu0 0.0
        %747 = vmatmul.mubr.f32.gmra.mxu0 %v674
        %v748 = vpop.f32.mrf.mxu0
        %v749 = vadd.f32 0.0, %v748
        %v750 = vpop.f32.mrf.mxu0
        %751 = vdwg.mxu0
        %vm752 = vcmask 130048
        %v753 = vsel %vm752, %v749, -inf
        %754 = vmax.xlane.f32.xlu0 %v753
        %v755 = vpop.xlane.xlu0 %754
        %v756 = vsub.f32 %v749, %v755
        %v757 = vmul.f32 %v756, 1.442695
        %v758 = vpow.pop %v757
        %v759 = vsel %vm752, %v758, 0.0
        %760 = vadd.xlane.f32.xlu0 %v759
        %v761 = vpop.xlane.xlu0 %760
        %v763 = vsel %vm752, %v758, 0
        %765 = vmatprep.subr.mxu0 0.0
        %766 = vmatpush1.msra.mxu0 0.0
        %767 = vmatprep.subr.mxu0 0.0
        %768 = vmatpush1.msra.mxu0 0.0
        %769 = vmatprep.subr.mxu0 0.0
        %770 = vmatpush1.msra.mxu0 0.0
        %771 = vmatprep.subr.mxu0 0.0
        %772 = vmatpush1.msra.mxu0 0.0
        %773 = vmatprep.subr.mxu0 0.0
        %774 = vmatpush1.msra.mxu0 0.0
        %775 = vmatprep.subr.mxu0 0.0
        %776 = vmatpush1.msra.mxu0 0.0
        %777 = vmatprep.subr.mxu0 0.0
        %778 = vmatpush1.msra.mxu0 0.0
        %779 = vmatprep.subr.mxu0 0.0
        %780 = vmatpush1.msra.mxu0 0.0
        %781 = vmatprep.subr.mxu0 0.0
        %782 = vmatpush1.msra.mxu0 0.0
        %783 = vmatprep.subr.mxu0 0.0
        %784 = vmatpush1.msra.mxu0 0.0
        %785 = vmatprep.subr.mxu0 0.0
        %786 = vmatpush1.msra.mxu0 0.0
        %787 = vmatprep.subr.mxu0 0.0
        %788 = vmatpush1.msra.mxu0 0.0
        %789 = vmatprep.subr.mxu0 0.0
        %790 = vmatpush1.msra.mxu0 0.0
        %791 = vmatprep.subr.mxu0 0.0
        %792 = vmatpush1.msra.mxu0 0.0
        %793 = vmatprep.subr.mxu0 0.0
        %794 = vmatpush1.msra.mxu0 %v667
        %795 = vmatprep.subr.mxu0 0.0
        %796 = vmatpush1.msra.mxu0 %v666
        %797 = vmatprep.subr.mxu0 0.0
        %798 = vmatpush2.msra.mxu0 0.0
        %799 = vmatprep.subr.mxu0 0.0
        %800 = vmatpush2.msra.mxu0 0.0
        %801 = vmatprep.subr.mxu0 0.0
        %802 = vmatpush2.msra.mxu0 0.0
        %803 = vmatprep.subr.mxu0 0.0
        %804 = vmatpush2.msra.mxu0 0.0
        %805 = vmatprep.subr.mxu0 0.0
        %806 = vmatpush2.msra.mxu0 0.0
        %807 = vmatprep.subr.mxu0 0.0
        %808 = vmatpush2.msra.mxu0 0.0
        %809 = vmatprep.subr.mxu0 0.0
        %810 = vmatpush2.msra.mxu0 0.0
        %811 = vmatprep.subr.mxu0 0.0
        %812 = vmatpush2.msra.mxu0 0.0
        %813 = vmatprep.subr.mxu0 0.0
        %814 = vmatpush2.msra.mxu0 0.0
        %815 = vmatprep.subr.mxu0 0.0
        %816 = vmatpush2.msra.mxu0 0.0
        %817 = vmatprep.subr.mxu0 0.0
        %818 = vmatpush2.msra.mxu0 0.0
        %819 = vmatprep.subr.mxu0 0.0
        %820 = vmatpush2.msra.mxu0 0.0
        %821 = vmatprep.subr.mxu0 0.0
        %822 = vmatpush2.msra.mxu0 0.0
        %823 = vmatprep.subr.mxu0 0.0
        %824 = vmatpush2.msra.mxu0 0.0
        %825 = vmatprep.subr.mxu0 0.0
        %826 = vmatpush2.msra.mxu0 0.0
        %827 = vmatprep.subr.mxu0 0.0
        %828 = vmatpush2.msra.mxu0 0.0
        %829 = vmatprep.mubr.f32.mxu0 0.0
        %830 = vmatmul.mubr.f32.gmra.mxu0 %v763
        %v831 = vpop.f32.mrf.mxu0
        %v832 = vadd.f32 0.0, %v831
        %v833 = vpop.f32.mrf.mxu0
        %834 = vdwg.mxu0
        %v835 = vrcp.pop %v761
        %v836 = vmul.f32 %v832, %v835
        %837 = vrot.lane.b32.xlu0 %v663, 124
        %v838 = vpop.permute.xlu0 %837
        %839 = vrot.lane.b32.xlu0 %v664, 124
        %v840 = vpop.permute.xlu0 %839
        %841 = vrot.lane.b32.xlu0 %v665, 124
        %v842 = vpop.permute.xlu0 %841
        %v843 = vsel %vm672, %v838, 0
        %v845 = vsel %vm672, %v840, 0
        %v847 = vsel %vm672, %v842, 0
        %849 = vmatprep.subr.mxu0 0.0
        %850 = vmatpush1.xpose.msra.mxu0 0.0
        %851 = vmatprep.subr.mxu0 0.0
        %852 = vmatpush1.xpose.msra.mxu0 0.0
        %853 = vmatprep.subr.mxu0 0.0
        %854 = vmatpush1.xpose.msra.mxu0 0.0
        %855 = vmatprep.subr.mxu0 0.0
        %856 = vmatpush1.xpose.msra.mxu0 0.0
        %857 = vmatprep.subr.mxu0 0.0
        %858 = vmatpush1.xpose.msra.mxu0 0.0
        %859 = vmatprep.subr.mxu0 0.0
        %860 = vmatpush1.xpose.msra.mxu0 0.0
        %861 = vmatprep.subr.mxu0 0.0
        %862 = vmatpush1.xpose.msra.mxu0 0.0
        %863 = vmatprep.subr.mxu0 0.0
        %864 = vmatpush1.xpose.msra.mxu0 0.0
        %865 = vmatprep.subr.mxu0 0.0
        %866 = vmatpush1.xpose.msra.mxu0 0.0
        %867 = vmatprep.subr.mxu0 0.0
        %868 = vmatpush1.xpose.msra.mxu0 0.0
        %869 = vmatprep.subr.mxu0 0.0
        %870 = vmatpush1.xpose.msra.mxu0 0.0
        %871 = vmatprep.subr.mxu0 0.0
        %872 = vmatpush1.xpose.msra.mxu0 0.0
        %873 = vmatprep.subr.mxu0 0.0
        %874 = vmatpush1.xpose.msra.mxu0 0.0
        %875 = vmatprep.subr.mxu0 0.0
        %876 = vmatpush1.xpose.msra.mxu0 0.0
        %877 = vmatprep.subr.mxu0 0.0
        %878 = vmatpush1.xpose.msra.mxu0 %v847
        %879 = vmatprep.subr.mxu0 0.0
        %880 = vmatpush1.xpose.msra.mxu0 %v845
        %881 = vmatprep.subr.mxu0 0.0
        %882 = vmatpush2.xpose.msra.mxu0 0.0
        %883 = vmatprep.subr.mxu0 0.0
        %884 = vmatpush2.xpose.msra.mxu0 0.0
        %885 = vmatprep.subr.mxu0 0.0
        %886 = vmatpush2.xpose.msra.mxu0 0.0
        %887 = vmatprep.subr.mxu0 0.0
        %888 = vmatpush2.xpose.msra.mxu0 0.0
        %889 = vmatprep.subr.mxu0 0.0
        %890 = vmatpush2.xpose.msra.mxu0 0.0
        %891 = vmatprep.subr.mxu0 0.0
        %892 = vmatpush2.xpose.msra.mxu0 0.0
        %893 = vmatprep.subr.mxu0 0.0
        %894 = vmatpush2.xpose.msra.mxu0 0.0
        %895 = vmatprep.subr.mxu0 0.0
        %896 = vmatpush2.xpose.msra.mxu0 0.0
        %897 = vmatprep.subr.mxu0 0.0
        %898 = vmatpush2.xpose.msra.mxu0 0.0
        %899 = vmatprep.subr.mxu0 0.0
        %900 = vmatpush2.xpose.msra.mxu0 0.0
        %901 = vmatprep.subr.mxu0 0.0
        %902 = vmatpush2.xpose.msra.mxu0 0.0
        %903 = vmatprep.subr.mxu0 0.0
        %904 = vmatpush2.xpose.msra.mxu0 0.0
        %905 = vmatprep.subr.mxu0 0.0
        %906 = vmatpush2.xpose.msra.mxu0 0.0
        %907 = vmatprep.subr.mxu0 0.0
        %908 = vmatpush2.xpose.msra.mxu0 0.0
        %909 = vmatprep.subr.mxu0 0.0
        %910 = vmatpush2.xpose.msra.mxu0 0.0
        %911 = vmatprep.subr.mxu0 0.0
        %912 = vmatpush2.xpose.msra.mxu0 0.0
        %913 = vmatprep.mubr.f32.mxu0 0.0
        %914 = vmatmul.mubr.f32.gmra.mxu0 %v843
        %v915 = vpop.f32.mrf.mxu0
        %v916 = vadd.f32 0.0, %v915
        %v917 = vpop.f32.mrf.mxu0
        %918 = vdwg.mxu0
        %v919 = vsel %vm752, %v916, -inf
        %920 = vmax.xlane.f32.xlu0 %v919
        %v921 = vpop.xlane.xlu0 %920
        %v922 = vsub.f32 %v916, %v921
        %v923 = vmul.f32 %v922, 1.442695
        %v924 = vpow.pop %v923
        %v925 = vsel %vm752, %v924, 0.0
        %926 = vadd.xlane.f32.xlu0 %v925
        %v927 = vpop.xlane.xlu0 %926
        %930 = vrot.lane.b32.xlu0 %v666, 124
        %v931 = vpop.permute.xlu0 %930
        %932 = vrot.lane.b32.xlu0 %v667, 124
        %v933 = vpop.permute.xlu0 %932
        %v937 = vsel %vm752, %v924, 0
        %939 = vmatprep.subr.mxu0 0.0
        %940 = vmatpush1.msra.mxu0 0.0
        %941 = vmatprep.subr.mxu0 0.0
        %942 = vmatpush1.msra.mxu0 0.0
        %943 = vmatprep.subr.mxu0 0.0
        %944 = vmatpush1.msra.mxu0 0.0
        %945 = vmatprep.subr.mxu0 0.0
        %946 = vmatpush1.msra.mxu0 0.0
        %947 = vmatprep.subr.mxu0 0.0
        %948 = vmatpush1.msra.mxu0 0.0
        %949 = vmatprep.subr.mxu0 0.0
        %950 = vmatpush1.msra.mxu0 0.0
        %951 = vmatprep.subr.mxu0 0.0
        %952 = vmatpush1.msra.mxu0 0.0
        %953 = vmatprep.subr.mxu0 0.0
        %954 = vmatpush1.msra.mxu0 0.0
        %955 = vmatprep.subr.mxu0 0.0
        %956 = vmatpush1.msra.mxu0 0.0
        %957 = vmatprep.subr.mxu0 0.0
        %958 = vmatpush1.msra.mxu0 0.0
        %959 = vmatprep.subr.mxu0 0.0
        %960 = vmatpush1.msra.mxu0 0.0
        %961 = vmatprep.subr.mxu0 0.0
        %962 = vmatpush1.msra.mxu0 0.0
        %963 = vmatprep.subr.mxu0 0.0
        %964 = vmatpush1.msra.mxu0 0.0
        %965 = vmatprep.subr.mxu0 0.0
        %966 = vmatpush1.msra.mxu0 0.0
        %967 = vmatprep.subr.mxu0 0.0
        %968 = vmatpush1.msra.mxu0 %v933
        %969 = vmatprep.subr.mxu0 0.0
        %970 = vmatpush1.msra.mxu0 %v931
        %971 = vmatprep.subr.mxu0 0.0
        %972 = vmatpush2.msra.mxu0 0.0
        %973 = vmatprep.subr.mxu0 0.0
        %974 = vmatpush2.msra.mxu0 0.0
        %975 = vmatprep.subr.mxu0 0.0
        %976 = vmatpush2.msra.mxu0 0.0
        %977 = vmatprep.subr.mxu0 0.0
        %978 = vmatpush2.msra.mxu0 0.0
        %979 = vmatprep.subr.mxu0 0.0
        %980 = vmatpush2.msra.mxu0 0.0
        %981 = vmatprep.subr.mxu0 0.0
        %982 = vmatpush2.msra.mxu0 0.0
        %983 = vmatprep.subr.mxu0 0.0
        %984 = vmatpush2.msra.mxu0 0.0
        %985 = vmatprep.subr.mxu0 0.0
        %986 = vmatpush2.msra.mxu0 0.0
        %987 = vmatprep.subr.mxu0 0.0
        %988 = vmatpush2.msra.mxu0 0.0
        %989 = vmatprep.subr.mxu0 0.0
        %990 = vmatpush2.msra.mxu0 0.0
        %991 = vmatprep.subr.mxu0 0.0
        %992 = vmatpush2.msra.mxu0 0.0
        %993 = vmatprep.subr.mxu0 0.0
        %994 = vmatpush2.msra.mxu0 0.0
        %995 = vmatprep.subr.mxu0 0.0
        %996 = vmatpush2.msra.mxu0 0.0
        %997 = vmatprep.subr.mxu0 0.0
        %998 = vmatpush2.msra.mxu0 0.0
        %999 = vmatprep.subr.mxu0 0.0
        %1000 = vmatpush2.msra.mxu0 0.0
        %1001 = vmatprep.subr.mxu0 0.0
        %1002 = vmatpush2.msra.mxu0 0.0
        %1003 = vmatprep.mubr.f32.mxu0 0.0
        %1004 = vmatmul.mubr.f32.gmra.mxu0 %v937
        %v1005 = vpop.f32.mrf.mxu0
        %v1006 = vadd.f32 0.0, %v1005
        %v1007 = vpop.f32.mrf.mxu0
        %1008 = vdwg.mxu0
        %v1009 = vrcp.pop %v927
        %v1010 = vmul.f32 %v1006, %v1009
        %v1012 = vrot.slane %v668, 4
        %v1014 = vsel %vm672, %v1010, 0
        %vm1016 = vcmask 1043456
        %v1017 = vsel %vm1016, %v1012, 0
        %1019 = vmatprep.subr.mxu0 0.0
        %1020 = vmatpush1.msra.mxu0 0.0
        %1021 = vmatprep.subr.mxu0 0.0
        %1022 = vmatpush1.msra.mxu0 0.0
        %1023 = vmatprep.subr.mxu0 0.0
        %1024 = vmatpush1.msra.mxu0 0.0
        %1025 = vmatprep.subr.mxu0 0.0
        %1026 = vmatpush1.msra.mxu0 0.0
        %1027 = vmatprep.subr.mxu0 0.0
        %1028 = vmatpush1.msra.mxu0 0.0
        %1029 = vmatprep.subr.mxu0 0.0
        %1030 = vmatpush1.msra.mxu0 0.0
        %1031 = vmatprep.subr.mxu0 0.0
        %1032 = vmatpush1.msra.mxu0 0.0
        %1033 = vmatprep.subr.mxu0 0.0
        %1034 = vmatpush1.msra.mxu0 0.0
        %1035 = vmatprep.subr.mxu0 0.0
        %1036 = vmatpush1.msra.mxu0 0.0
        %1037 = vmatprep.subr.mxu0 0.0
        %1038 = vmatpush1.msra.mxu0 0.0
        %1039 = vmatprep.subr.mxu0 0.0
        %1040 = vmatpush1.msra.mxu0 0.0
        %1041 = vmatprep.subr.mxu0 0.0
        %1042 = vmatpush1.msra.mxu0 0.0
        %1043 = vmatprep.subr.mxu0 0.0
        %1044 = vmatpush1.msra.mxu0 0.0
        %1045 = vmatprep.subr.mxu0 0.0
        %1046 = vmatpush1.msra.mxu0 0.0
        %1047 = vmatprep.subr.mxu0 0.0
        %1048 = vmatpush1.msra.mxu0 0.0
        %1049 = vmatprep.subr.mxu0 0.0
        %1050 = vmatpush1.msra.mxu0 %v1017
        %1051 = vmatprep.subr.mxu0 0.0
        %1052 = vmatpush2.msra.mxu0 0.0
        %1053 = vmatprep.subr.mxu0 0.0
        %1054 = vmatpush2.msra.mxu0 0.0
        %1055 = vmatprep.subr.mxu0 0.0
        %1056 = vmatpush2.msra.mxu0 0.0
        %1057 = vmatprep.subr.mxu0 0.0
        %1058 = vmatpush2.msra.mxu0 0.0
        %1059 = vmatprep.subr.mxu0 0.0
        %1060 = vmatpush2.msra.mxu0 0.0
        %1061 = vmatprep.subr.mxu0 0.0
        %1062 = vmatpush2.msra.mxu0 0.0
        %1063 = vmatprep.subr.mxu0 0.0
        %1064 = vmatpush2.msra.mxu0 0.0
        %1065 = vmatprep.subr.mxu0 0.0
        %1066 = vmatpush2.msra.mxu0 0.0
        %1067 = vmatprep.subr.mxu0 0.0
        %1068 = vmatpush2.msra.mxu0 0.0
        %1069 = vmatprep.subr.mxu0 0.0
        %1070 = vmatpush2.msra.mxu0 0.0
        %1071 = vmatprep.subr.mxu0 0.0
        %1072 = vmatpush2.msra.mxu0 0.0
        %1073 = vmatprep.subr.mxu0 0.0
        %1074 = vmatpush2.msra.mxu0 0.0
        %1075 = vmatprep.subr.mxu0 0.0
        %1076 = vmatpush2.msra.mxu0 0.0
        %1077 = vmatprep.subr.mxu0 0.0
        %1078 = vmatpush2.msra.mxu0 0.0
        %1079 = vmatprep.subr.mxu0 0.0
        %1080 = vmatpush2.msra.mxu0 0.0
        %1081 = vmatprep.subr.mxu0 0.0
        %1082 = vmatpush2.msra.mxu0 0.0
        %1083 = vmatprep.mubr.f32.mxu0 0.0
        %1084 = vmatmul.mubr.f32.gmra.mxu0 %v1014
        %v1085 = vpop.f32.mrf.mxu0
        %v1086 = vadd.f32 0.0, %v1085
        %v1087 = vpop.f32.mrf.mxu0
        %1088 = vdwg.mxu0
        %v1090 = vsel %vm672, %v836, 0
        %v1092 = vsel %vm1016, %v668, 0
        %1094 = vmatprep.subr.mxu0 0.0
        %1095 = vmatpush1.msra.mxu0 0.0
        %1096 = vmatprep.subr.mxu0 0.0
        %1097 = vmatpush1.msra.mxu0 0.0
        %1098 = vmatprep.subr.mxu0 0.0
        %1099 = vmatpush1.msra.mxu0 0.0
        %1100 = vmatprep.subr.mxu0 0.0
        %1101 = vmatpush1.msra.mxu0 0.0
        %1102 = vmatprep.subr.mxu0 0.0
        %1103 = vmatpush1.msra.mxu0 0.0
        %1104 = vmatprep.subr.mxu0 0.0
        %1105 = vmatpush1.msra.mxu0 0.0
        %1106 = vmatprep.subr.mxu0 0.0
        %1107 = vmatpush1.msra.mxu0 0.0
        %1108 = vmatprep.subr.mxu0 0.0
        %1109 = vmatpush1.msra.mxu0 0.0
        %1110 = vmatprep.subr.mxu0 0.0
        %1111 = vmatpush1.msra.mxu0 0.0
        %1112 = vmatprep.subr.mxu0 0.0
        %1113 = vmatpush1.msra.mxu0 0.0
        %1114 = vmatprep.subr.mxu0 0.0
        %1115 = vmatpush1.msra.mxu0 0.0
        %1116 = vmatprep.subr.mxu0 0.0
        %1117 = vmatpush1.msra.mxu0 0.0
        %1118 = vmatprep.subr.mxu0 0.0
        %1119 = vmatpush1.msra.mxu0 0.0
        %1120 = vmatprep.subr.mxu0 0.0
        %1121 = vmatpush1.msra.mxu0 0.0
        %1122 = vmatprep.subr.mxu0 0.0
        %1123 = vmatpush1.msra.mxu0 0.0
        %1124 = vmatprep.subr.mxu0 0.0
        %1125 = vmatpush1.msra.mxu0 %v1092
        %1126 = vmatprep.subr.mxu0 0.0
        %1127 = vmatpush2.msra.mxu0 0.0
        %1128 = vmatprep.subr.mxu0 0.0
        %1129 = vmatpush2.msra.mxu0 0.0
        %1130 = vmatprep.subr.mxu0 0.0
        %1131 = vmatpush2.msra.mxu0 0.0
        %1132 = vmatprep.subr.mxu0 0.0
        %1133 = vmatpush2.msra.mxu0 0.0
        %1134 = vmatprep.subr.mxu0 0.0
        %1135 = vmatpush2.msra.mxu0 0.0
        %1136 = vmatprep.subr.mxu0 0.0
        %1137 = vmatpush2.msra.mxu0 0.0
        %1138 = vmatprep.subr.mxu0 0.0
        %1139 = vmatpush2.msra.mxu0 0.0
        %1140 = vmatprep.subr.mxu0 0.0
        %1141 = vmatpush2.msra.mxu0 0.0
        %1142 = vmatprep.subr.mxu0 0.0
        %1143 = vmatpush2.msra.mxu0 0.0
        %1144 = vmatprep.subr.mxu0 0.0
        %1145 = vmatpush2.msra.mxu0 0.0
        %1146 = vmatprep.subr.mxu0 0.0
        %1147 = vmatpush2.msra.mxu0 0.0
        %1148 = vmatprep.subr.mxu0 0.0
        %1149 = vmatpush2.msra.mxu0 0.0
        %1150 = vmatprep.subr.mxu0 0.0
        %1151 = vmatpush2.msra.mxu0 0.0
        %1152 = vmatprep.subr.mxu0 0.0
        %1153 = vmatpush2.msra.mxu0 0.0
        %1154 = vmatprep.subr.mxu0 0.0
        %1155 = vmatpush2.msra.mxu0 0.0
        %1156 = vmatprep.subr.mxu0 0.0
        %1157 = vmatpush2.msra.mxu0 0.0
        %1158 = vmatprep.mubr.f32.mxu0 0.0
        %1159 = vmatmul.mubr.f32.gmra.mxu0 %v1090
        %v1160 = vpop.f32.mrf.mxu0
        %v1161 = vadd.f32 %v1086, %v1160
        %v1162 = vpop.f32.mrf.mxu0
        %1163 = vdwg.mxu0
        %1164 = vrot.lane.b32.xlu0 %v663, 120
        %v1165 = vpop.permute.xlu0 %1164
        %1166 = vrot.lane.b32.xlu0 %v664, 120
        %v1167 = vpop.permute.xlu0 %1166
        %1168 = vrot.lane.b32.xlu0 %v665, 120
        %v1169 = vpop.permute.xlu0 %1168
        %v1170 = vsel %vm672, %v1165, 0
        %v1172 = vsel %vm672, %v1167, 0
        %v1174 = vsel %vm672, %v1169, 0
        %1176 = vmatprep.subr.mxu0 0.0
        %1177 = vmatpush1.xpose.msra.mxu0 0.0
        %1178 = vmatprep.subr.mxu0 0.0
        %1179 = vmatpush1.xpose.msra.mxu0 0.0
        %1180 = vmatprep.subr.mxu0 0.0
        %1181 = vmatpush1.xpose.msra.mxu0 0.0
        %1182 = vmatprep.subr.mxu0 0.0
        %1183 = vmatpush1.xpose.msra.mxu0 0.0
        %1184 = vmatprep.subr.mxu0 0.0
        %1185 = vmatpush1.xpose.msra.mxu0 0.0
        %1186 = vmatprep.subr.mxu0 0.0
        %1187 = vmatpush1.xpose.msra.mxu0 0.0
        %1188 = vmatprep.subr.mxu0 0.0
        %1189 = vmatpush1.xpose.msra.mxu0 0.0
        %1190 = vmatprep.subr.mxu0 0.0
        %1191 = vmatpush1.xpose.msra.mxu0 0.0
        %1192 = vmatprep.subr.mxu0 0.0
        %1193 = vmatpush1.xpose.msra.mxu0 0.0
        %1194 = vmatprep.subr.mxu0 0.0
        %1195 = vmatpush1.xpose.msra.mxu0 0.0
        %1196 = vmatprep.subr.mxu0 0.0
        %1197 = vmatpush1.xpose.msra.mxu0 0.0
        %1198 = vmatprep.subr.mxu0 0.0
        %1199 = vmatpush1.xpose.msra.mxu0 0.0
        %1200 = vmatprep.subr.mxu0 0.0
        %1201 = vmatpush1.xpose.msra.mxu0 0.0
        %1202 = vmatprep.subr.mxu0 0.0
        %1203 = vmatpush1.xpose.msra.mxu0 0.0
        %1204 = vmatprep.subr.mxu0 0.0
        %1205 = vmatpush1.xpose.msra.mxu0 %v1174
        %1206 = vmatprep.subr.mxu0 0.0
        %1207 = vmatpush1.xpose.msra.mxu0 %v1172
        %1208 = vmatprep.subr.mxu0 0.0
        %1209 = vmatpush2.xpose.msra.mxu0 0.0
        %1210 = vmatprep.subr.mxu0 0.0
        %1211 = vmatpush2.xpose.msra.mxu0 0.0
        %1212 = vmatprep.subr.mxu0 0.0
        %1213 = vmatpush2.xpose.msra.mxu0 0.0
        %1214 = vmatprep.subr.mxu0 0.0
        %1215 = vmatpush2.xpose.msra.mxu0 0.0
        %1216 = vmatprep.subr.mxu0 0.0
        %1217 = vmatpush2.xpose.msra.mxu0 0.0
        %1218 = vmatprep.subr.mxu0 0.0
        %1219 = vmatpush2.xpose.msra.mxu0 0.0
        %1220 = vmatprep.subr.mxu0 0.0
        %1221 = vmatpush2.xpose.msra.mxu0 0.0
        %1222 = vmatprep.subr.mxu0 0.0
        %1223 = vmatpush2.xpose.msra.mxu0 0.0
        %1224 = vmatprep.subr.mxu0 0.0
        %1225 = vmatpush2.xpose.msra.mxu0 0.0
        %1226 = vmatprep.subr.mxu0 0.0
        %1227 = vmatpush2.xpose.msra.mxu0 0.0
        %1228 = vmatprep.subr.mxu0 0.0
        %1229 = vmatpush2.xpose.msra.mxu0 0.0
        %1230 = vmatprep.subr.mxu0 0.0
        %1231 = vmatpush2.xpose.msra.mxu0 0.0
        %1232 = vmatprep.subr.mxu0 0.0
        %1233 = vmatpush2.xpose.msra.mxu0 0.0
        %1234 = vmatprep.subr.mxu0 0.0
        %1235 = vmatpush2.xpose.msra.mxu0 0.0
        %1236 = vmatprep.subr.mxu0 0.0
        %1237 = vmatpush2.xpose.msra.mxu0 0.0
        %1238 = vmatprep.subr.mxu0 0.0
        %1239 = vmatpush2.xpose.msra.mxu0 0.0
        %1240 = vmatprep.mubr.f32.mxu0 0.0
        %1241 = vmatmul.mubr.f32.gmra.mxu0 %v1170
        %v1242 = vpop.f32.mrf.mxu0
        %v1243 = vadd.f32 0.0, %v1242
        %v1244 = vpop.f32.mrf.mxu0
        %1245 = vdwg.mxu0
        %v1246 = vsel %vm752, %v1243, -inf
        %1247 = vmax.xlane.f32.xlu0 %v1246
        %v1248 = vpop.xlane.xlu0 %1247
        %v1249 = vsub.f32 %v1243, %v1248
        %v1250 = vmul.f32 %v1249, 1.442695
        %v1251 = vpow.pop %v1250
        %v1252 = vsel %vm752, %v1251, 0.0
        %1253 = vadd.xlane.f32.xlu0 %v1252
        %v1254 = vpop.xlane.xlu0 %1253
        %1255 = vrot.lane.b32.xlu0 %v666, 120
        %v1256 = vpop.permute.xlu0 %1255
        %1257 = vrot.lane.b32.xlu0 %v667, 120
        %v1258 = vpop.permute.xlu0 %1257
        %v1262 = vsel %vm752, %v1251, 0
        %1264 = vmatprep.subr.mxu0 0.0
        %1265 = vmatpush1.msra.mxu0 0.0
        %1266 = vmatprep.subr.mxu0 0.0
        %1267 = vmatpush1.msra.mxu0 0.0
        %1268 = vmatprep.subr.mxu0 0.0
        %1269 = vmatpush1.msra.mxu0 0.0
        %1270 = vmatprep.subr.mxu0 0.0
        %1271 = vmatpush1.msra.mxu0 0.0
        %1272 = vmatprep.subr.mxu0 0.0
        %1273 = vmatpush1.msra.mxu0 0.0
        %1274 = vmatprep.subr.mxu0 0.0
        %1275 = vmatpush1.msra.mxu0 0.0
        %1276 = vmatprep.subr.mxu0 0.0
        %1277 = vmatpush1.msra.mxu0 0.0
        %1278 = vmatprep.subr.mxu0 0.0
        %1279 = vmatpush1.msra.mxu0 0.0
        %1280 = vmatprep.subr.mxu0 0.0
        %1281 = vmatpush1.msra.mxu0 0.0
        %1282 = vmatprep.subr.mxu0 0.0
        %1283 = vmatpush1.msra.mxu0 0.0
        %1284 = vmatprep.subr.mxu0 0.0
        %1285 = vmatpush1.msra.mxu0 0.0
        %1286 = vmatprep.subr.mxu0 0.0
        %1287 = vmatpush1.msra.mxu0 0.0
        %1288 = vmatprep.subr.mxu0 0.0
        %1289 = vmatpush1.msra.mxu0 0.0
        %1290 = vmatprep.subr.mxu0 0.0
        %1291 = vmatpush1.msra.mxu0 0.0
        %1292 = vmatprep.subr.mxu0 0.0
        %1293 = vmatpush1.msra.mxu0 %v1258
        %1294 = vmatprep.subr.mxu0 0.0
        %1295 = vmatpush1.msra.mxu0 %v1256
        %1296 = vmatprep.subr.mxu0 0.0
        %1297 = vmatpush2.msra.mxu0 0.0
        %1298 = vmatprep.subr.mxu0 0.0
        %1299 = vmatpush2.msra.mxu0 0.0
        %1300 = vmatprep.subr.mxu0 0.0
        %1301 = vmatpush2.msra.mxu0 0.0
        %1302 = vmatprep.subr.mxu0 0.0
        %1303 = vmatpush2.msra.mxu0 0.0
        %1304 = vmatprep.subr.mxu0 0.0
        %1305 = vmatpush2.msra.mxu0 0.0
        %1306 = vmatprep.subr.mxu0 0.0
        %1307 = vmatpush2.msra.mxu0 0.0
        %1308 = vmatprep.subr.mxu0 0.0
        %1309 = vmatpush2.msra.mxu0 0.0
        %1310 = vmatprep.subr.mxu0 0.0
        %1311 = vmatpush2.msra.mxu0 0.0
        %1312 = vmatprep.subr.mxu0 0.0
        %1313 = vmatpush2.msra.mxu0 0.0
        %1314 = vmatprep.subr.mxu0 0.0
        %1315 = vmatpush2.msra.mxu0 0.0
        %1316 = vmatprep.subr.mxu0 0.0
        %1317 = vmatpush2.msra.mxu0 0.0
        %1318 = vmatprep.subr.mxu0 0.0
        %1319 = vmatpush2.msra.mxu0 0.0
        %1320 = vmatprep.subr.mxu0 0.0
        %1321 = vmatpush2.msra.mxu0 0.0
        %1322 = vmatprep.subr.mxu0 0.0
        %1323 = vmatpush2.msra.mxu0 0.0
        %1324 = vmatprep.subr.mxu0 0.0
        %1325 = vmatpush2.msra.mxu0 0.0
        %1326 = vmatprep.subr.mxu0 0.0
        %1327 = vmatpush2.msra.mxu0 0.0
        %1328 = vmatprep.mubr.f32.mxu0 0.0
        %1329 = vmatmul.mubr.f32.gmra.mxu0 %v1262
        %v1330 = vpop.f32.mrf.mxu0
        %v1331 = vadd.f32 0.0, %v1330
        %v1332 = vpop.f32.mrf.mxu0
        %1333 = vdwg.mxu0
        %v1334 = vrcp.pop %v1254
        %v1335 = vmul.f32 %v1331, %v1334
        %v1337 = vsel %vm672, %v1335, 0
        %v1340 = vsel %vm1016, %v669, 0
        %1342 = vmatprep.subr.mxu0 0.0
        %1343 = vmatpush1.msra.mxu0 0.0
        %1344 = vmatprep.subr.mxu0 0.0
        %1345 = vmatpush1.msra.mxu0 0.0
        %1346 = vmatprep.subr.mxu0 0.0
        %1347 = vmatpush1.msra.mxu0 0.0
        %1348 = vmatprep.subr.mxu0 0.0
        %1349 = vmatpush1.msra.mxu0 0.0
        %1350 = vmatprep.subr.mxu0 0.0
        %1351 = vmatpush1.msra.mxu0 0.0
        %1352 = vmatprep.subr.mxu0 0.0
        %1353 = vmatpush1.msra.mxu0 0.0
        %1354 = vmatprep.subr.mxu0 0.0
        %1355 = vmatpush1.msra.mxu0 0.0
        %1356 = vmatprep.subr.mxu0 0.0
        %1357 = vmatpush1.msra.mxu0 0.0
        %1358 = vmatprep.subr.mxu0 0.0
        %1359 = vmatpush1.msra.mxu0 0.0
        %1360 = vmatprep.subr.mxu0 0.0
        %1361 = vmatpush1.msra.mxu0 0.0
        %1362 = vmatprep.subr.mxu0 0.0
        %1363 = vmatpush1.msra.mxu0 0.0
        %1364 = vmatprep.subr.mxu0 0.0
        %1365 = vmatpush1.msra.mxu0 0.0
        %1366 = vmatprep.subr.mxu0 0.0
        %1367 = vmatpush1.msra.mxu0 0.0
        %1368 = vmatprep.subr.mxu0 0.0
        %1369 = vmatpush1.msra.mxu0 0.0
        %1370 = vmatprep.subr.mxu0 0.0
        %1371 = vmatpush1.msra.mxu0 0.0
        %1372 = vmatprep.subr.mxu0 0.0
        %1373 = vmatpush1.msra.mxu0 %v1340
        %1374 = vmatprep.subr.mxu0 0.0
        %1375 = vmatpush2.msra.mxu0 0.0
        %1376 = vmatprep.subr.mxu0 0.0
        %1377 = vmatpush2.msra.mxu0 0.0
        %1378 = vmatprep.subr.mxu0 0.0
        %1379 = vmatpush2.msra.mxu0 0.0
        %1380 = vmatprep.subr.mxu0 0.0
        %1381 = vmatpush2.msra.mxu0 0.0
        %1382 = vmatprep.subr.mxu0 0.0
        %1383 = vmatpush2.msra.mxu0 0.0
        %1384 = vmatprep.subr.mxu0 0.0
        %1385 = vmatpush2.msra.mxu0 0.0
        %1386 = vmatprep.subr.mxu0 0.0
        %1387 = vmatpush2.msra.mxu0 0.0
        %1388 = vmatprep.subr.mxu0 0.0
        %1389 = vmatpush2.msra.mxu0 0.0
        %1390 = vmatprep.subr.mxu0 0.0
        %1391 = vmatpush2.msra.mxu0 0.0
        %1392 = vmatprep.subr.mxu0 0.0
        %1393 = vmatpush2.msra.mxu0 0.0
        %1394 = vmatprep.subr.mxu0 0.0
        %1395 = vmatpush2.msra.mxu0 0.0
        %1396 = vmatprep.subr.mxu0 0.0
        %1397 = vmatpush2.msra.mxu0 0.0
        %1398 = vmatprep.subr.mxu0 0.0
        %1399 = vmatpush2.msra.mxu0 0.0
        %1400 = vmatprep.subr.mxu0 0.0
        %1401 = vmatpush2.msra.mxu0 0.0
        %1402 = vmatprep.subr.mxu0 0.0
        %1403 = vmatpush2.msra.mxu0 0.0
        %1404 = vmatprep.subr.mxu0 0.0
        %1405 = vmatpush2.msra.mxu0 0.0
        %1406 = vmatprep.mubr.f32.mxu0 0.0
        %1407 = vmatmul.mubr.f32.gmra.mxu0 %v1337
        %v1408 = vpop.f32.mrf.mxu0
        %v1409 = vadd.f32 0.0, %v1408
        %v1410 = vpop.f32.mrf.mxu0
        %1411 = vdwg.mxu0
        %v1412 = vadd.f32 %v1161, %v1409
        %1413 = vrot.lane.b32.xlu0 %v663, 116
        %v1414 = vpop.permute.xlu0 %1413
        %1415 = vrot.lane.b32.xlu0 %v664, 116
        %v1416 = vpop.permute.xlu0 %1415
        %1417 = vrot.lane.b32.xlu0 %v665, 116
        %v1418 = vpop.permute.xlu0 %1417
        %v1419 = vsel %vm672, %v1414, 0
        %v1421 = vsel %vm672, %v1416, 0
        %v1423 = vsel %vm672, %v1418, 0
        %1425 = vmatprep.subr.mxu0 0.0
        %1426 = vmatpush1.xpose.msra.mxu0 0.0
        %1427 = vmatprep.subr.mxu0 0.0
        %1428 = vmatpush1.xpose.msra.mxu0 0.0
        %1429 = vmatprep.subr.mxu0 0.0
        %1430 = vmatpush1.xpose.msra.mxu0 0.0
        %1431 = vmatprep.subr.mxu0 0.0
        %1432 = vmatpush1.xpose.msra.mxu0 0.0
        %1433 = vmatprep.subr.mxu0 0.0
        %1434 = vmatpush1.xpose.msra.mxu0 0.0
        %1435 = vmatprep.subr.mxu0 0.0
        %1436 = vmatpush1.xpose.msra.mxu0 0.0
        %1437 = vmatprep.subr.mxu0 0.0
        %1438 = vmatpush1.xpose.msra.mxu0 0.0
        %1439 = vmatprep.subr.mxu0 0.0
        %1440 = vmatpush1.xpose.msra.mxu0 0.0
        %1441 = vmatprep.subr.mxu0 0.0
        %1442 = vmatpush1.xpose.msra.mxu0 0.0
        %1443 = vmatprep.subr.mxu0 0.0
        %1444 = vmatpush1.xpose.msra.mxu0 0.0
        %1445 = vmatprep.subr.mxu0 0.0
        %1446 = vmatpush1.xpose.msra.mxu0 0.0
        %1447 = vmatprep.subr.mxu0 0.0
        %1448 = vmatpush1.xpose.msra.mxu0 0.0
        %1449 = vmatprep.subr.mxu0 0.0
        %1450 = vmatpush1.xpose.msra.mxu0 0.0
        %1451 = vmatprep.subr.mxu0 0.0
        %1452 = vmatpush1.xpose.msra.mxu0 0.0
        %1453 = vmatprep.subr.mxu0 0.0
        %1454 = vmatpush1.xpose.msra.mxu0 %v1423
        %1455 = vmatprep.subr.mxu0 0.0
        %1456 = vmatpush1.xpose.msra.mxu0 %v1421
        %1457 = vmatprep.subr.mxu0 0.0
        %1458 = vmatpush2.xpose.msra.mxu0 0.0
        %1459 = vmatprep.subr.mxu0 0.0
        %1460 = vmatpush2.xpose.msra.mxu0 0.0
        %1461 = vmatprep.subr.mxu0 0.0
        %1462 = vmatpush2.xpose.msra.mxu0 0.0
        %1463 = vmatprep.subr.mxu0 0.0
        %1464 = vmatpush2.xpose.msra.mxu0 0.0
        %1465 = vmatprep.subr.mxu0 0.0
        %1466 = vmatpush2.xpose.msra.mxu0 0.0
        %1467 = vmatprep.subr.mxu0 0.0
        %1468 = vmatpush2.xpose.msra.mxu0 0.0
        %1469 = vmatprep.subr.mxu0 0.0
        %1470 = vmatpush2.xpose.msra.mxu0 0.0
        %1471 = vmatprep.subr.mxu0 0.0
        %1472 = vmatpush2.xpose.msra.mxu0 0.0
        %1473 = vmatprep.subr.mxu0 0.0
        %1474 = vmatpush2.xpose.msra.mxu0 0.0
        %1475 = vmatprep.subr.mxu0 0.0
        %1476 = vmatpush2.xpose.msra.mxu0 0.0
        %1477 = vmatprep.subr.mxu0 0.0
        %1478 = vmatpush2.xpose.msra.mxu0 0.0
        %1479 = vmatprep.subr.mxu0 0.0
        %1480 = vmatpush2.xpose.msra.mxu0 0.0
        %1481 = vmatprep.subr.mxu0 0.0
        %1482 = vmatpush2.xpose.msra.mxu0 0.0
        %1483 = vmatprep.subr.mxu0 0.0
        %1484 = vmatpush2.xpose.msra.mxu0 0.0
        %1485 = vmatprep.subr.mxu0 0.0
        %1486 = vmatpush2.xpose.msra.mxu0 0.0
        %1487 = vmatprep.subr.mxu0 0.0
        %1488 = vmatpush2.xpose.msra.mxu0 0.0
        %1489 = vmatprep.mubr.f32.mxu0 0.0
        %1490 = vmatmul.mubr.f32.gmra.mxu0 %v1419
        %v1491 = vpop.f32.mrf.mxu0
        %v1492 = vadd.f32 0.0, %v1491
        %v1493 = vpop.f32.mrf.mxu0
        %1494 = vdwg.mxu0
        %v1495 = vsel %vm752, %v1492, -inf
        %1496 = vmax.xlane.f32.xlu0 %v1495
        %v1497 = vpop.xlane.xlu0 %1496
        %v1498 = vsub.f32 %v1492, %v1497
        %v1499 = vmul.f32 %v1498, 1.442695
        %v1500 = vpow.pop %v1499
        %v1501 = vsel %vm752, %v1500, 0.0
        %1502 = vadd.xlane.f32.xlu0 %v1501
        %v1503 = vpop.xlane.xlu0 %1502
        %1504 = vrot.lane.b32.xlu0 %v666, 116
        %v1505 = vpop.permute.xlu0 %1504
        %1506 = vrot.lane.b32.xlu0 %v667, 116
        %v1507 = vpop.permute.xlu0 %1506
        %v1511 = vsel %vm752, %v1500, 0
        %1513 = vmatprep.subr.mxu0 0.0
        %1514 = vmatpush1.msra.mxu0 0.0
        %1515 = vmatprep.subr.mxu0 0.0
        %1516 = vmatpush1.msra.mxu0 0.0
        %1517 = vmatprep.subr.mxu0 0.0
        %1518 = vmatpush1.msra.mxu0 0.0
        %1519 = vmatprep.subr.mxu0 0.0
        %1520 = vmatpush1.msra.mxu0 0.0
        %1521 = vmatprep.subr.mxu0 0.0
        %1522 = vmatpush1.msra.mxu0 0.0
        %1523 = vmatprep.subr.mxu0 0.0
        %1524 = vmatpush1.msra.mxu0 0.0
        %1525 = vmatprep.subr.mxu0 0.0
        %1526 = vmatpush1.msra.mxu0 0.0
        %1527 = vmatprep.subr.mxu0 0.0
        %1528 = vmatpush1.msra.mxu0 0.0
        %1529 = vmatprep.subr.mxu0 0.0
        %1530 = vmatpush1.msra.mxu0 0.0
        %1531 = vmatprep.subr.mxu0 0.0
        %1532 = vmatpush1.msra.mxu0 0.0
        %1533 = vmatprep.subr.mxu0 0.0
        %1534 = vmatpush1.msra.mxu0 0.0
        %1535 = vmatprep.subr.mxu0 0.0
        %1536 = vmatpush1.msra.mxu0 0.0
        %1537 = vmatprep.subr.mxu0 0.0
        %1538 = vmatpush1.msra.mxu0 0.0
        %1539 = vmatprep.subr.mxu0 0.0
        %1540 = vmatpush1.msra.mxu0 0.0
        %1541 = vmatprep.subr.mxu0 0.0
        %1542 = vmatpush1.msra.mxu0 %v1507
        %1543 = vmatprep.subr.mxu0 0.0
        %1544 = vmatpush1.msra.mxu0 %v1505
        %1545 = vmatprep.subr.mxu0 0.0
        %1546 = vmatpush2.msra.mxu0 0.0
        %1547 = vmatprep.subr.mxu0 0.0
        %1548 = vmatpush2.msra.mxu0 0.0
        %1549 = vmatprep.subr.mxu0 0.0
        %1550 = vmatpush2.msra.mxu0 0.0
        %1551 = vmatprep.subr.mxu0 0.0
        %1552 = vmatpush2.msra.mxu0 0.0
        %1553 = vmatprep.subr.mxu0 0.0
        %1554 = vmatpush2.msra.mxu0 0.0
        %1555 = vmatprep.subr.mxu0 0.0
        %1556 = vmatpush2.msra.mxu0 0.0
        %1557 = vmatprep.subr.mxu0 0.0
        %1558 = vmatpush2.msra.mxu0 0.0
        %1559 = vmatprep.subr.mxu0 0.0
        %1560 = vmatpush2.msra.mxu0 0.0
        %1561 = vmatprep.subr.mxu0 0.0
        %1562 = vmatpush2.msra.mxu0 0.0
        %1563 = vmatprep.subr.mxu0 0.0
        %1564 = vmatpush2.msra.mxu0 0.0
        %1565 = vmatprep.subr.mxu0 0.0
        %1566 = vmatpush2.msra.mxu0 0.0
        %1567 = vmatprep.subr.mxu0 0.0
        %1568 = vmatpush2.msra.mxu0 0.0
        %1569 = vmatprep.subr.mxu0 0.0
        %1570 = vmatpush2.msra.mxu0 0.0
        %1571 = vmatprep.subr.mxu0 0.0
        %1572 = vmatpush2.msra.mxu0 0.0
        %1573 = vmatprep.subr.mxu0 0.0
        %1574 = vmatpush2.msra.mxu0 0.0
        %1575 = vmatprep.subr.mxu0 0.0
        %1576 = vmatpush2.msra.mxu0 0.0
        %1577 = vmatprep.mubr.f32.mxu0 0.0
        %1578 = vmatmul.mubr.f32.gmra.mxu0 %v1511
        %v1579 = vpop.f32.mrf.mxu0
        %v1580 = vadd.f32 0.0, %v1579
        %v1581 = vpop.f32.mrf.mxu0
        %1582 = vdwg.mxu0
        %v1583 = vrcp.pop %v1503
        %v1584 = vmul.f32 %v1580, %v1583
        %v1585 = vrot.slane %v669, 4
        %v1587 = vsel %vm672, %v1584, 0
        %v1589 = vsel %vm1016, %v1585, 0
        %1591 = vmatprep.subr.mxu0 0.0
        %1592 = vmatpush1.msra.mxu0 0.0
        %1593 = vmatprep.subr.mxu0 0.0
        %1594 = vmatpush1.msra.mxu0 0.0
        %1595 = vmatprep.subr.mxu0 0.0
        %1596 = vmatpush1.msra.mxu0 0.0
        %1597 = vmatprep.subr.mxu0 0.0
        %1598 = vmatpush1.msra.mxu0 0.0
        %1599 = vmatprep.subr.mxu0 0.0
        %1600 = vmatpush1.msra.mxu0 0.0
        %1601 = vmatprep.subr.mxu0 0.0
        %1602 = vmatpush1.msra.mxu0 0.0
        %1603 = vmatprep.subr.mxu0 0.0
        %1604 = vmatpush1.msra.mxu0 0.0
        %1605 = vmatprep.subr.mxu0 0.0
        %1606 = vmatpush1.msra.mxu0 0.0
        %1607 = vmatprep.subr.mxu0 0.0
        %1608 = vmatpush1.msra.mxu0 0.0
        %1609 = vmatprep.subr.mxu0 0.0
        %1610 = vmatpush1.msra.mxu0 0.0
        %1611 = vmatprep.subr.mxu0 0.0
        %1612 = vmatpush1.msra.mxu0 0.0
        %1613 = vmatprep.subr.mxu0 0.0
        %1614 = vmatpush1.msra.mxu0 0.0
        %1615 = vmatprep.subr.mxu0 0.0
        %1616 = vmatpush1.msra.mxu0 0.0
        %1617 = vmatprep.subr.mxu0 0.0
        %1618 = vmatpush1.msra.mxu0 0.0
        %1619 = vmatprep.subr.mxu0 0.0
        %1620 = vmatpush1.msra.mxu0 0.0
        %1621 = vmatprep.subr.mxu0 0.0
        %1622 = vmatpush1.msra.mxu0 %v1589
        %1623 = vmatprep.subr.mxu0 0.0
        %1624 = vmatpush2.msra.mxu0 0.0
        %1625 = vmatprep.subr.mxu0 0.0
        %1626 = vmatpush2.msra.mxu0 0.0
        %1627 = vmatprep.subr.mxu0 0.0
        %1628 = vmatpush2.msra.mxu0 0.0
        %1629 = vmatprep.subr.mxu0 0.0
        %1630 = vmatpush2.msra.mxu0 0.0
        %1631 = vmatprep.subr.mxu0 0.0
        %1632 = vmatpush2.msra.mxu0 0.0
        %1633 = vmatprep.subr.mxu0 0.0
        %1634 = vmatpush2.msra.mxu0 0.0
        %1635 = vmatprep.subr.mxu0 0.0
        %1636 = vmatpush2.msra.mxu0 0.0
        %1637 = vmatprep.subr.mxu0 0.0
        %1638 = vmatpush2.msra.mxu0 0.0
        %1639 = vmatprep.subr.mxu0 0.0
        %1640 = vmatpush2.msra.mxu0 0.0
        %1641 = vmatprep.subr.mxu0 0.0
        %1642 = vmatpush2.msra.mxu0 0.0
        %1643 = vmatprep.subr.mxu0 0.0
        %1644 = vmatpush2.msra.mxu0 0.0
        %1645 = vmatprep.subr.mxu0 0.0
        %1646 = vmatpush2.msra.mxu0 0.0
        %1647 = vmatprep.subr.mxu0 0.0
        %1648 = vmatpush2.msra.mxu0 0.0
        %1649 = vmatprep.subr.mxu0 0.0
        %1650 = vmatpush2.msra.mxu0 0.0
        %1651 = vmatprep.subr.mxu0 0.0
        %1652 = vmatpush2.msra.mxu0 0.0
        %1653 = vmatprep.subr.mxu0 0.0
        %1654 = vmatpush2.msra.mxu0 0.0
        %1655 = vmatprep.mubr.f32.mxu0 0.0
        %1656 = vmatmul.mubr.f32.gmra.mxu0 %v1587
        %v1657 = vpop.f32.mrf.mxu0
        %v1658 = vadd.f32 0.0, %v1657
        %v1659 = vpop.f32.mrf.mxu0
        %1660 = vdwg.mxu0
        %v1661 = vadd.f32 %v1412, %v1658
        %1662 = vrot.lane.b32.xlu0 %v663, 112
        %v1663 = vpop.permute.xlu0 %1662
        %1664 = vrot.lane.b32.xlu0 %v664, 112
        %v1665 = vpop.permute.xlu0 %1664
        %1666 = vrot.lane.b32.xlu0 %v665, 112
        %v1667 = vpop.permute.xlu0 %1666
        %v1668 = vsel %vm672, %v1663, 0
        %v1670 = vsel %vm672, %v1665, 0
        %v1672 = vsel %vm672, %v1667, 0
        %1674 = vmatprep.subr.mxu0 0.0
        %1675 = vmatpush1.xpose.msra.mxu0 0.0
        %1676 = vmatprep.subr.mxu0 0.0
        %1677 = vmatpush1.xpose.msra.mxu0 0.0
        %1678 = vmatprep.subr.mxu0 0.0
        %1679 = vmatpush1.xpose.msra.mxu0 0.0
        %1680 = vmatprep.subr.mxu0 0.0
        %1681 = vmatpush1.xpose.msra.mxu0 0.0
        %1682 = vmatprep.subr.mxu0 0.0
        %1683 = vmatpush1.xpose.msra.mxu0 0.0
        %1684 = vmatprep.subr.mxu0 0.0
        %1685 = vmatpush1.xpose.msra.mxu0 0.0
        %1686 = vmatprep.subr.mxu0 0.0
        %1687 = vmatpush1.xpose.msra.mxu0 0.0
        %1688 = vmatprep.subr.mxu0 0.0
        %1689 = vmatpush1.xpose.msra.mxu0 0.0
        %1690 = vmatprep.subr.mxu0 0.0
        %1691 = vmatpush1.xpose.msra.mxu0 0.0
        %1692 = vmatprep.subr.mxu0 0.0
        %1693 = vmatpush1.xpose.msra.mxu0 0.0
        %1694 = vmatprep.subr.mxu0 0.0
        %1695 = vmatpush1.xpose.msra.mxu0 0.0
        %1696 = vmatprep.subr.mxu0 0.0
        %1697 = vmatpush1.xpose.msra.mxu0 0.0
        %1698 = vmatprep.subr.mxu0 0.0
        %1699 = vmatpush1.xpose.msra.mxu0 0.0
        %1700 = vmatprep.subr.mxu0 0.0
        %1701 = vmatpush1.xpose.msra.mxu0 0.0
        %1702 = vmatprep.subr.mxu0 0.0
        %1703 = vmatpush1.xpose.msra.mxu0 %v1672
        %1704 = vmatprep.subr.mxu0 0.0
        %1705 = vmatpush1.xpose.msra.mxu0 %v1670
        %1706 = vmatprep.subr.mxu0 0.0
        %1707 = vmatpush2.xpose.msra.mxu0 0.0
        %1708 = vmatprep.subr.mxu0 0.0
        %1709 = vmatpush2.xpose.msra.mxu0 0.0
        %1710 = vmatprep.subr.mxu0 0.0
        %1711 = vmatpush2.xpose.msra.mxu0 0.0
        %1712 = vmatprep.subr.mxu0 0.0
        %1713 = vmatpush2.xpose.msra.mxu0 0.0
        %1714 = vmatprep.subr.mxu0 0.0
        %1715 = vmatpush2.xpose.msra.mxu0 0.0
        %1716 = vmatprep.subr.mxu0 0.0
        %1717 = vmatpush2.xpose.msra.mxu0 0.0
        %1718 = vmatprep.subr.mxu0 0.0
        %1719 = vmatpush2.xpose.msra.mxu0 0.0
        %1720 = vmatprep.subr.mxu0 0.0
        %1721 = vmatpush2.xpose.msra.mxu0 0.0
        %1722 = vmatprep.subr.mxu0 0.0
        %1723 = vmatpush2.xpose.msra.mxu0 0.0
        %1724 = vmatprep.subr.mxu0 0.0
        %1725 = vmatpush2.xpose.msra.mxu0 0.0
        %1726 = vmatprep.subr.mxu0 0.0
        %1727 = vmatpush2.xpose.msra.mxu0 0.0
        %1728 = vmatprep.subr.mxu0 0.0
        %1729 = vmatpush2.xpose.msra.mxu0 0.0
        %1730 = vmatprep.subr.mxu0 0.0
        %1731 = vmatpush2.xpose.msra.mxu0 0.0
        %1732 = vmatprep.subr.mxu0 0.0
        %1733 = vmatpush2.xpose.msra.mxu0 0.0
        %1734 = vmatprep.subr.mxu0 0.0
        %1735 = vmatpush2.xpose.msra.mxu0 0.0
        %1736 = vmatprep.subr.mxu0 0.0
        %1737 = vmatpush2.xpose.msra.mxu0 0.0
        %1738 = vmatprep.mubr.f32.mxu0 0.0
        %1739 = vmatmul.mubr.f32.gmra.mxu0 %v1668
        %v1740 = vpop.f32.mrf.mxu0
        %v1741 = vadd.f32 0.0, %v1740
        %v1742 = vpop.f32.mrf.mxu0
        %1743 = vdwg.mxu0
        %v1744 = vsel %vm752, %v1741, -inf
        %1745 = vmax.xlane.f32.xlu0 %v1744
        %v1746 = vpop.xlane.xlu0 %1745
        %v1747 = vsub.f32 %v1741, %v1746
        %v1748 = vmul.f32 %v1747, 1.442695
        %v1749 = vpow.pop %v1748
        %v1750 = vsel %vm752, %v1749, 0.0
        %1751 = vadd.xlane.f32.xlu0 %v1750
        %v1752 = vpop.xlane.xlu0 %1751
        %1753 = vrot.lane.b32.xlu0 %v666, 112
        %v1754 = vpop.permute.xlu0 %1753
        %1755 = vrot.lane.b32.xlu0 %v667, 112
        %v1756 = vpop.permute.xlu0 %1755
        %v1760 = vsel %vm752, %v1749, 0
        %1762 = vmatprep.subr.mxu0 0.0
        %1763 = vmatpush1.msra.mxu0 0.0
        %1764 = vmatprep.subr.mxu0 0.0
        %1765 = vmatpush1.msra.mxu0 0.0
        %1766 = vmatprep.subr.mxu0 0.0
        %1767 = vmatpush1.msra.mxu0 0.0
        %1768 = vmatprep.subr.mxu0 0.0
        %1769 = vmatpush1.msra.mxu0 0.0
        %1770 = vmatprep.subr.mxu0 0.0
        %1771 = vmatpush1.msra.mxu0 0.0
        %1772 = vmatprep.subr.mxu0 0.0
        %1773 = vmatpush1.msra.mxu0 0.0
        %1774 = vmatprep.subr.mxu0 0.0
        %1775 = vmatpush1.msra.mxu0 0.0
        %1776 = vmatprep.subr.mxu0 0.0
        %1777 = vmatpush1.msra.mxu0 0.0
        %1778 = vmatprep.subr.mxu0 0.0
        %1779 = vmatpush1.msra.mxu0 0.0
        %1780 = vmatprep.subr.mxu0 0.0
        %1781 = vmatpush1.msra.mxu0 0.0
        %1782 = vmatprep.subr.mxu0 0.0
        %1783 = vmatpush1.msra.mxu0 0.0
        %1784 = vmatprep.subr.mxu0 0.0
        %1785 = vmatpush1.msra.mxu0 0.0
        %1786 = vmatprep.subr.mxu0 0.0
        %1787 = vmatpush1.msra.mxu0 0.0
        %1788 = vmatprep.subr.mxu0 0.0
        %1789 = vmatpush1.msra.mxu0 0.0
        %1790 = vmatprep.subr.mxu0 0.0
        %1791 = vmatpush1.msra.mxu0 %v1756
        %1792 = vmatprep.subr.mxu0 0.0
        %1793 = vmatpush1.msra.mxu0 %v1754
        %1794 = vmatprep.subr.mxu0 0.0
        %1795 = vmatpush2.msra.mxu0 0.0
        %1796 = vmatprep.subr.mxu0 0.0
        %1797 = vmatpush2.msra.mxu0 0.0
        %1798 = vmatprep.subr.mxu0 0.0
        %1799 = vmatpush2.msra.mxu0 0.0
        %1800 = vmatprep.subr.mxu0 0.0
        %1801 = vmatpush2.msra.mxu0 0.0
        %1802 = vmatprep.subr.mxu0 0.0
        %1803 = vmatpush2.msra.mxu0 0.0
        %1804 = vmatprep.subr.mxu0 0.0
        %1805 = vmatpush2.msra.mxu0 0.0
        %1806 = vmatprep.subr.mxu0 0.0
        %1807 = vmatpush2.msra.mxu0 0.0
        %1808 = vmatprep.subr.mxu0 0.0
        %1809 = vmatpush2.msra.mxu0 0.0
        %1810 = vmatprep.subr.mxu0 0.0
        %1811 = vmatpush2.msra.mxu0 0.0
        %1812 = vmatprep.subr.mxu0 0.0
        %1813 = vmatpush2.msra.mxu0 0.0
        %1814 = vmatprep.subr.mxu0 0.0
        %1815 = vmatpush2.msra.mxu0 0.0
        %1816 = vmatprep.subr.mxu0 0.0
        %1817 = vmatpush2.msra.mxu0 0.0
        %1818 = vmatprep.subr.mxu0 0.0
        %1819 = vmatpush2.msra.mxu0 0.0
        %1820 = vmatprep.subr.mxu0 0.0
        %1821 = vmatpush2.msra.mxu0 0.0
        %1822 = vmatprep.subr.mxu0 0.0
        %1823 = vmatpush2.msra.mxu0 0.0
        %1824 = vmatprep.subr.mxu0 0.0
        %1825 = vmatpush2.msra.mxu0 0.0
        %1826 = vmatprep.mubr.f32.mxu0 0.0
        %1827 = vmatmul.mubr.f32.gmra.mxu0 %v1760
        %v1828 = vpop.f32.mrf.mxu0
        %v1829 = vadd.f32 0.0, %v1828
        %v1830 = vpop.f32.mrf.mxu0
        %1831 = vdwg.mxu0
        %v1832 = vrcp.pop %v1752
        %v1833 = vmul.f32 %v1829, %v1832
        %v1835 = vsel %vm672, %v1833, 0
        %v1838 = vsel %vm1016, %v670, 0
        %1840 = vmatprep.subr.mxu0 0.0
        %1841 = vmatpush1.msra.mxu0 0.0
        %1842 = vmatprep.subr.mxu0 0.0
        %1843 = vmatpush1.msra.mxu0 0.0
        %1844 = vmatprep.subr.mxu0 0.0
        %1845 = vmatpush1.msra.mxu0 0.0
        %1846 = vmatprep.subr.mxu0 0.0
        %1847 = vmatpush1.msra.mxu0 0.0
        %1848 = vmatprep.subr.mxu0 0.0
        %1849 = vmatpush1.msra.mxu0 0.0
        %1850 = vmatprep.subr.mxu0 0.0
        %1851 = vmatpush1.msra.mxu0 0.0
        %1852 = vmatprep.subr.mxu0 0.0
        %1853 = vmatpush1.msra.mxu0 0.0
        %1854 = vmatprep.subr.mxu0 0.0
        %1855 = vmatpush1.msra.mxu0 0.0
        %1856 = vmatprep.subr.mxu0 0.0
        %1857 = vmatpush1.msra.mxu0 0.0
        %1858 = vmatprep.subr.mxu0 0.0
        %1859 = vmatpush1.msra.mxu0 0.0
        %1860 = vmatprep.subr.mxu0 0.0
        %1861 = vmatpush1.msra.mxu0 0.0
        %1862 = vmatprep.subr.mxu0 0.0
        %1863 = vmatpush1.msra.mxu0 0.0
        %1864 = vmatprep.subr.mxu0 0.0
        %1865 = vmatpush1.msra.mxu0 0.0
        %1866 = vmatprep.subr.mxu0 0.0
        %1867 = vmatpush1.msra.mxu0 0.0
        %1868 = vmatprep.subr.mxu0 0.0
        %1869 = vmatpush1.msra.mxu0 0.0
        %1870 = vmatprep.subr.mxu0 0.0
        %1871 = vmatpush1.msra.mxu0 %v1838
        %1872 = vmatprep.subr.mxu0 0.0
        %1873 = vmatpush2.msra.mxu0 0.0
        %1874 = vmatprep.subr.mxu0 0.0
        %1875 = vmatpush2.msra.mxu0 0.0
        %1876 = vmatprep.subr.mxu0 0.0
        %1877 = vmatpush2.msra.mxu0 0.0
        %1878 = vmatprep.subr.mxu0 0.0
        %1879 = vmatpush2.msra.mxu0 0.0
        %1880 = vmatprep.subr.mxu0 0.0
        %1881 = vmatpush2.msra.mxu0 0.0
        %1882 = vmatprep.subr.mxu0 0.0
        %1883 = vmatpush2.msra.mxu0 0.0
        %1884 = vmatprep.subr.mxu0 0.0
        %1885 = vmatpush2.msra.mxu0 0.0
        %1886 = vmatprep.subr.mxu0 0.0
        %1887 = vmatpush2.msra.mxu0 0.0
        %1888 = vmatprep.subr.mxu0 0.0
        %1889 = vmatpush2.msra.mxu0 0.0
        %1890 = vmatprep.subr.mxu0 0.0
        %1891 = vmatpush2.msra.mxu0 0.0
        %1892 = vmatprep.subr.mxu0 0.0
        %1893 = vmatpush2.msra.mxu0 0.0
        %1894 = vmatprep.subr.mxu0 0.0
        %1895 = vmatpush2.msra.mxu0 0.0
        %1896 = vmatprep.subr.mxu0 0.0
        %1897 = vmatpush2.msra.mxu0 0.0
        %1898 = vmatprep.subr.mxu0 0.0
        %1899 = vmatpush2.msra.mxu0 0.0
        %1900 = vmatprep.subr.mxu0 0.0
        %1901 = vmatpush2.msra.mxu0 0.0
        %1902 = vmatprep.subr.mxu0 0.0
        %1903 = vmatpush2.msra.mxu0 0.0
        %1904 = vmatprep.mubr.f32.mxu0 0.0
        %1905 = vmatmul.mubr.f32.gmra.mxu0 %v1835
        %v1906 = vpop.f32.mrf.mxu0
        %v1907 = vadd.f32 0.0, %v1906
        %v1908 = vpop.f32.mrf.mxu0
        %1909 = vdwg.mxu0
        %v1910 = vadd.f32 %v1661, %v1907
        %1911 = vrot.lane.b32.xlu0 %v663, 108
        %v1912 = vpop.permute.xlu0 %1911
        %1913 = vrot.lane.b32.xlu0 %v664, 108
        %v1914 = vpop.permute.xlu0 %1913
        %1915 = vrot.lane.b32.xlu0 %v665, 108
        %v1916 = vpop.permute.xlu0 %1915
        %v1917 = vsel %vm672, %v1912, 0
        %v1919 = vsel %vm672, %v1914, 0
        %v1921 = vsel %vm672, %v1916, 0
        %1923 = vmatprep.subr.mxu0 0.0
        %1924 = vmatpush1.xpose.msra.mxu0 0.0
        %1925 = vmatprep.subr.mxu0 0.0
        %1926 = vmatpush1.xpose.msra.mxu0 0.0
        %1927 = vmatprep.subr.mxu0 0.0
        %1928 = vmatpush1.xpose.msra.mxu0 0.0
        %1929 = vmatprep.subr.mxu0 0.0
        %1930 = vmatpush1.xpose.msra.mxu0 0.0
        %1931 = vmatprep.subr.mxu0 0.0
        %1932 = vmatpush1.xpose.msra.mxu0 0.0
        %1933 = vmatprep.subr.mxu0 0.0
        %1934 = vmatpush1.xpose.msra.mxu0 0.0
        %1935 = vmatprep.subr.mxu0 0.0
        %1936 = vmatpush1.xpose.msra.mxu0 0.0
        %1937 = vmatprep.subr.mxu0 0.0
        %1938 = vmatpush1.xpose.msra.mxu0 0.0
        %1939 = vmatprep.subr.mxu0 0.0
        %1940 = vmatpush1.xpose.msra.mxu0 0.0
        %1941 = vmatprep.subr.mxu0 0.0
        %1942 = vmatpush1.xpose.msra.mxu0 0.0
        %1943 = vmatprep.subr.mxu0 0.0
        %1944 = vmatpush1.xpose.msra.mxu0 0.0
        %1945 = vmatprep.subr.mxu0 0.0
        %1946 = vmatpush1.xpose.msra.mxu0 0.0
        %1947 = vmatprep.subr.mxu0 0.0
        %1948 = vmatpush1.xpose.msra.mxu0 0.0
        %1949 = vmatprep.subr.mxu0 0.0
        %1950 = vmatpush1.xpose.msra.mxu0 0.0
        %1951 = vmatprep.subr.mxu0 0.0
        %1952 = vmatpush1.xpose.msra.mxu0 %v1921
        %1953 = vmatprep.subr.mxu0 0.0
        %1954 = vmatpush1.xpose.msra.mxu0 %v1919
        %1955 = vmatprep.subr.mxu0 0.0
        %1956 = vmatpush2.xpose.msra.mxu0 0.0
        %1957 = vmatprep.subr.mxu0 0.0
        %1958 = vmatpush2.xpose.msra.mxu0 0.0
        %1959 = vmatprep.subr.mxu0 0.0
        %1960 = vmatpush2.xpose.msra.mxu0 0.0
        %1961 = vmatprep.subr.mxu0 0.0
        %1962 = vmatpush2.xpose.msra.mxu0 0.0
        %1963 = vmatprep.subr.mxu0 0.0
        %1964 = vmatpush2.xpose.msra.mxu0 0.0
        %1965 = vmatprep.subr.mxu0 0.0
        %1966 = vmatpush2.xpose.msra.mxu0 0.0
        %1967 = vmatprep.subr.mxu0 0.0
        %1968 = vmatpush2.xpose.msra.mxu0 0.0
        %1969 = vmatprep.subr.mxu0 0.0
        %1970 = vmatpush2.xpose.msra.mxu0 0.0
        %1971 = vmatprep.subr.mxu0 0.0
        %1972 = vmatpush2.xpose.msra.mxu0 0.0
        %1973 = vmatprep.subr.mxu0 0.0
        %1974 = vmatpush2.xpose.msra.mxu0 0.0
        %1975 = vmatprep.subr.mxu0 0.0
        %1976 = vmatpush2.xpose.msra.mxu0 0.0
        %1977 = vmatprep.subr.mxu0 0.0
        %1978 = vmatpush2.xpose.msra.mxu0 0.0
        %1979 = vmatprep.subr.mxu0 0.0
        %1980 = vmatpush2.xpose.msra.mxu0 0.0
        %1981 = vmatprep.subr.mxu0 0.0
        %1982 = vmatpush2.xpose.msra.mxu0 0.0
        %1983 = vmatprep.subr.mxu0 0.0
        %1984 = vmatpush2.xpose.msra.mxu0 0.0
        %1985 = vmatprep.subr.mxu0 0.0
        %1986 = vmatpush2.xpose.msra.mxu0 0.0
        %1987 = vmatprep.mubr.f32.mxu0 0.0
        %1988 = vmatmul.mubr.f32.gmra.mxu0 %v1917
        %v1989 = vpop.f32.mrf.mxu0
        %v1990 = vadd.f32 0.0, %v1989
        %v1991 = vpop.f32.mrf.mxu0
        %1992 = vdwg.mxu0
        %v1993 = vsel %vm752, %v1990, -inf
        %1994 = vmax.xlane.f32.xlu0 %v1993
        %v1995 = vpop.xlane.xlu0 %1994
        %v1996 = vsub.f32 %v1990, %v1995
        %v1997 = vmul.f32 %v1996, 1.442695
        %v1998 = vpow.pop %v1997
        %v1999 = vsel %vm752, %v1998, 0.0
        %2000 = vadd.xlane.f32.xlu0 %v1999
        %v2001 = vpop.xlane.xlu0 %2000
        %2002 = vrot.lane.b32.xlu0 %v666, 108
        %v2003 = vpop.permute.xlu0 %2002
        %2004 = vrot.lane.b32.xlu0 %v667, 108
        %v2005 = vpop.permute.xlu0 %2004
        %v2009 = vsel %vm752, %v1998, 0
        %2011 = vmatprep.subr.mxu0 0.0
        %2012 = vmatpush1.msra.mxu0 0.0
        %2013 = vmatprep.subr.mxu0 0.0
        %2014 = vmatpush1.msra.mxu0 0.0
        %2015 = vmatprep.subr.mxu0 0.0
        %2016 = vmatpush1.msra.mxu0 0.0
        %2017 = vmatprep.subr.mxu0 0.0
        %2018 = vmatpush1.msra.mxu0 0.0
        %2019 = vmatprep.subr.mxu0 0.0
        %2020 = vmatpush1.msra.mxu0 0.0
        %2021 = vmatprep.subr.mxu0 0.0
        %2022 = vmatpush1.msra.mxu0 0.0
        %2023 = vmatprep.subr.mxu0 0.0
        %2024 = vmatpush1.msra.mxu0 0.0
        %2025 = vmatprep.subr.mxu0 0.0
        %2026 = vmatpush1.msra.mxu0 0.0
        %2027 = vmatprep.subr.mxu0 0.0
        %2028 = vmatpush1.msra.mxu0 0.0
        %2029 = vmatprep.subr.mxu0 0.0
        %2030 = vmatpush1.msra.mxu0 0.0
        %2031 = vmatprep.subr.mxu0 0.0
        %2032 = vmatpush1.msra.mxu0 0.0
        %2033 = vmatprep.subr.mxu0 0.0
        %2034 = vmatpush1.msra.mxu0 0.0
        %2035 = vmatprep.subr.mxu0 0.0
        %2036 = vmatpush1.msra.mxu0 0.0
        %2037 = vmatprep.subr.mxu0 0.0
        %2038 = vmatpush1.msra.mxu0 0.0
        %2039 = vmatprep.subr.mxu0 0.0
        %2040 = vmatpush1.msra.mxu0 %v2005
        %2041 = vmatprep.subr.mxu0 0.0
        %2042 = vmatpush1.msra.mxu0 %v2003
        %2043 = vmatprep.subr.mxu0 0.0
        %2044 = vmatpush2.msra.mxu0 0.0
        %2045 = vmatprep.subr.mxu0 0.0
        %2046 = vmatpush2.msra.mxu0 0.0
        %2047 = vmatprep.subr.mxu0 0.0
        %2048 = vmatpush2.msra.mxu0 0.0
        %2049 = vmatprep.subr.mxu0 0.0
        %2050 = vmatpush2.msra.mxu0 0.0
        %2051 = vmatprep.subr.mxu0 0.0
        %2052 = vmatpush2.msra.mxu0 0.0
        %2053 = vmatprep.subr.mxu0 0.0
        %2054 = vmatpush2.msra.mxu0 0.0
        %2055 = vmatprep.subr.mxu0 0.0
        %2056 = vmatpush2.msra.mxu0 0.0
        %2057 = vmatprep.subr.mxu0 0.0
        %2058 = vmatpush2.msra.mxu0 0.0
        %2059 = vmatprep.subr.mxu0 0.0
        %2060 = vmatpush2.msra.mxu0 0.0
        %2061 = vmatprep.subr.mxu0 0.0
        %2062 = vmatpush2.msra.mxu0 0.0
        %2063 = vmatprep.subr.mxu0 0.0
        %2064 = vmatpush2.msra.mxu0 0.0
        %2065 = vmatprep.subr.mxu0 0.0
        %2066 = vmatpush2.msra.mxu0 0.0
        %2067 = vmatprep.subr.mxu0 0.0
        %2068 = vmatpush2.msra.mxu0 0.0
        %2069 = vmatprep.subr.mxu0 0.0
        %2070 = vmatpush2.msra.mxu0 0.0
        %2071 = vmatprep.subr.mxu0 0.0
        %2072 = vmatpush2.msra.mxu0 0.0
        %2073 = vmatprep.subr.mxu0 0.0
        %2074 = vmatpush2.msra.mxu0 0.0
        %2075 = vmatprep.mubr.f32.mxu0 0.0
        %2076 = vmatmul.mubr.f32.gmra.mxu0 %v2009
        %v2077 = vpop.f32.mrf.mxu0
        %v2078 = vadd.f32 0.0, %v2077
        %v2079 = vpop.f32.mrf.mxu0
        %2080 = vdwg.mxu0
        %v2081 = vrcp.pop %v2001
        %v2082 = vmul.f32 %v2078, %v2081
        %v2083 = vrot.slane %v670, 4
        %v2085 = vsel %vm672, %v2082, 0
        %v2087 = vsel %vm1016, %v2083, 0
        %2089 = vmatprep.subr.mxu0 0.0
        %2090 = vmatpush1.msra.mxu0 0.0
        %2091 = vmatprep.subr.mxu0 0.0
        %2092 = vmatpush1.msra.mxu0 0.0
        %2093 = vmatprep.subr.mxu0 0.0
        %2094 = vmatpush1.msra.mxu0 0.0
        %2095 = vmatprep.subr.mxu0 0.0
        %2096 = vmatpush1.msra.mxu0 0.0
        %2097 = vmatprep.subr.mxu0 0.0
        %2098 = vmatpush1.msra.mxu0 0.0
        %2099 = vmatprep.subr.mxu0 0.0
        %2100 = vmatpush1.msra.mxu0 0.0
        %2101 = vmatprep.subr.mxu0 0.0
        %2102 = vmatpush1.msra.mxu0 0.0
        %2103 = vmatprep.subr.mxu0 0.0
        %2104 = vmatpush1.msra.mxu0 0.0
        %2105 = vmatprep.subr.mxu0 0.0
        %2106 = vmatpush1.msra.mxu0 0.0
        %2107 = vmatprep.subr.mxu0 0.0
        %2108 = vmatpush1.msra.mxu0 0.0
        %2109 = vmatprep.subr.mxu0 0.0
        %2110 = vmatpush1.msra.mxu0 0.0
        %2111 = vmatprep.subr.mxu0 0.0
        %2112 = vmatpush1.msra.mxu0 0.0
        %2113 = vmatprep.subr.mxu0 0.0
        %2114 = vmatpush1.msra.mxu0 0.0
        %2115 = vmatprep.subr.mxu0 0.0
        %2116 = vmatpush1.msra.mxu0 0.0
        %2117 = vmatprep.subr.mxu0 0.0
        %2118 = vmatpush1.msra.mxu0 0.0
        %2119 = vmatprep.subr.mxu0 0.0
        %2120 = vmatpush1.msra.mxu0 %v2087
        %2121 = vmatprep.subr.mxu0 0.0
        %2122 = vmatpush2.msra.mxu0 0.0
        %2123 = vmatprep.subr.mxu0 0.0
        %2124 = vmatpush2.msra.mxu0 0.0
        %2125 = vmatprep.subr.mxu0 0.0
        %2126 = vmatpush2.msra.mxu0 0.0
        %2127 = vmatprep.subr.mxu0 0.0
        %2128 = vmatpush2.msra.mxu0 0.0
        %2129 = vmatprep.subr.mxu0 0.0
        %2130 = vmatpush2.msra.mxu0 0.0
        %2131 = vmatprep.subr.mxu0 0.0
        %2132 = vmatpush2.msra.mxu0 0.0
        %2133 = vmatprep.subr.mxu0 0.0
        %2134 = vmatpush2.msra.mxu0 0.0
        %2135 = vmatprep.subr.mxu0 0.0
        %2136 = vmatpush2.msra.mxu0 0.0
        %2137 = vmatprep.subr.mxu0 0.0
        %2138 = vmatpush2.msra.mxu0 0.0
        %2139 = vmatprep.subr.mxu0 0.0
        %2140 = vmatpush2.msra.mxu0 0.0
        %2141 = vmatprep.subr.mxu0 0.0
        %2142 = vmatpush2.msra.mxu0 0.0
        %2143 = vmatprep.subr.mxu0 0.0
        %2144 = vmatpush2.msra.mxu0 0.0
        %2145 = vmatprep.subr.mxu0 0.0
        %2146 = vmatpush2.msra.mxu0 0.0
        %2147 = vmatprep.subr.mxu0 0.0
        %2148 = vmatpush2.msra.mxu0 0.0
        %2149 = vmatprep.subr.mxu0 0.0
        %2150 = vmatpush2.msra.mxu0 0.0
        %2151 = vmatprep.subr.mxu0 0.0
        %2152 = vmatpush2.msra.mxu0 0.0
        %2153 = vmatprep.mubr.f32.mxu0 0.0
        %2154 = vmatmul.mubr.f32.gmra.mxu0 %v2085
        %v2155 = vpop.f32.mrf.mxu0
        %v2156 = vadd.f32 0.0, %v2155
        %v2157 = vpop.f32.mrf.mxu0
        %2158 = vdwg.mxu0
        %v2159 = vadd.f32 %v1910, %v2156
        %2160 = vrot.lane.b32.xlu0 %v663, 104
        %v2161 = vpop.permute.xlu0 %2160
        %2162 = vrot.lane.b32.xlu0 %v664, 104
        %v2163 = vpop.permute.xlu0 %2162
        %2164 = vrot.lane.b32.xlu0 %v665, 104
        %v2165 = vpop.permute.xlu0 %2164
        %v2166 = vsel %vm672, %v2161, 0
        %v2168 = vsel %vm672, %v2163, 0
        %v2170 = vsel %vm672, %v2165, 0
        %2172 = vmatprep.subr.mxu0 0.0
        %2173 = vmatpush1.xpose.msra.mxu0 0.0
        %2174 = vmatprep.subr.mxu0 0.0
        %2175 = vmatpush1.xpose.msra.mxu0 0.0
        %2176 = vmatprep.subr.mxu0 0.0
        %2177 = vmatpush1.xpose.msra.mxu0 0.0
        %2178 = vmatprep.subr.mxu0 0.0
        %2179 = vmatpush1.xpose.msra.mxu0 0.0
        %2180 = vmatprep.subr.mxu0 0.0
        %2181 = vmatpush1.xpose.msra.mxu0 0.0
        %2182 = vmatprep.subr.mxu0 0.0
        %2183 = vmatpush1.xpose.msra.mxu0 0.0
        %2184 = vmatprep.subr.mxu0 0.0
        %2185 = vmatpush1.xpose.msra.mxu0 0.0
        %2186 = vmatprep.subr.mxu0 0.0
        %2187 = vmatpush1.xpose.msra.mxu0 0.0
        %2188 = vmatprep.subr.mxu0 0.0
        %2189 = vmatpush1.xpose.msra.mxu0 0.0
        %2190 = vmatprep.subr.mxu0 0.0
        %2191 = vmatpush1.xpose.msra.mxu0 0.0
        %2192 = vmatprep.subr.mxu0 0.0
        %2193 = vmatpush1.xpose.msra.mxu0 0.0
        %2194 = vmatprep.subr.mxu0 0.0
        %2195 = vmatpush1.xpose.msra.mxu0 0.0
        %2196 = vmatprep.subr.mxu0 0.0
        %2197 = vmatpush1.xpose.msra.mxu0 0.0
        %2198 = vmatprep.subr.mxu0 0.0
        %2199 = vmatpush1.xpose.msra.mxu0 0.0
        %2200 = vmatprep.subr.mxu0 0.0
        %2201 = vmatpush1.xpose.msra.mxu0 %v2170
        %2202 = vmatprep.subr.mxu0 0.0
        %2203 = vmatpush1.xpose.msra.mxu0 %v2168
        %2204 = vmatprep.subr.mxu0 0.0
        %2205 = vmatpush2.xpose.msra.mxu0 0.0
        %2206 = vmatprep.subr.mxu0 0.0
        %2207 = vmatpush2.xpose.msra.mxu0 0.0
        %2208 = vmatprep.subr.mxu0 0.0
        %2209 = vmatpush2.xpose.msra.mxu0 0.0
        %2210 = vmatprep.subr.mxu0 0.0
        %2211 = vmatpush2.xpose.msra.mxu0 0.0
        %2212 = vmatprep.subr.mxu0 0.0
        %2213 = vmatpush2.xpose.msra.mxu0 0.0
        %2214 = vmatprep.subr.mxu0 0.0
        %2215 = vmatpush2.xpose.msra.mxu0 0.0
        %2216 = vmatprep.subr.mxu0 0.0
        %2217 = vmatpush2.xpose.msra.mxu0 0.0
        %2218 = vmatprep.subr.mxu0 0.0
        %2219 = vmatpush2.xpose.msra.mxu0 0.0
        %2220 = vmatprep.subr.mxu0 0.0
        %2221 = vmatpush2.xpose.msra.mxu0 0.0
        %2222 = vmatprep.subr.mxu0 0.0
        %2223 = vmatpush2.xpose.msra.mxu0 0.0
        %2224 = vmatprep.subr.mxu0 0.0
        %2225 = vmatpush2.xpose.msra.mxu0 0.0
        %2226 = vmatprep.subr.mxu0 0.0
        %2227 = vmatpush2.xpose.msra.mxu0 0.0
        %2228 = vmatprep.subr.mxu0 0.0
        %2229 = vmatpush2.xpose.msra.mxu0 0.0
        %2230 = vmatprep.subr.mxu0 0.0
        %2231 = vmatpush2.xpose.msra.mxu0 0.0
        %2232 = vmatprep.subr.mxu0 0.0
        %2233 = vmatpush2.xpose.msra.mxu0 0.0
        %2234 = vmatprep.subr.mxu0 0.0
        %2235 = vmatpush2.xpose.msra.mxu0 0.0
        %2236 = vmatprep.mubr.f32.mxu0 0.0
        %2237 = vmatmul.mubr.f32.gmra.mxu0 %v2166
        %v2238 = vpop.f32.mrf.mxu0
        %v2239 = vadd.f32 0.0, %v2238
        %v2240 = vpop.f32.mrf.mxu0
        %2241 = vdwg.mxu0
        %v2242 = vsel %vm752, %v2239, -inf
        %2243 = vmax.xlane.f32.xlu0 %v2242
        %v2244 = vpop.xlane.xlu0 %2243
        %v2245 = vsub.f32 %v2239, %v2244
        %v2246 = vmul.f32 %v2245, 1.442695
        %v2247 = vpow.pop %v2246
        %v2248 = vsel %vm752, %v2247, 0.0
        %2249 = vadd.xlane.f32.xlu0 %v2248
        %v2250 = vpop.xlane.xlu0 %2249
        %2251 = vrot.lane.b32.xlu0 %v666, 104
        %v2252 = vpop.permute.xlu0 %2251
        %2253 = vrot.lane.b32.xlu0 %v667, 104
        %v2254 = vpop.permute.xlu0 %2253
        %v2258 = vsel %vm752, %v2247, 0
        %2260 = vmatprep.subr.mxu0 0.0
        %2261 = vmatpush1.msra.mxu0 0.0
        %2262 = vmatprep.subr.mxu0 0.0
        %2263 = vmatpush1.msra.mxu0 0.0
        %2264 = vmatprep.subr.mxu0 0.0
        %2265 = vmatpush1.msra.mxu0 0.0
        %2266 = vmatprep.subr.mxu0 0.0
        %2267 = vmatpush1.msra.mxu0 0.0
        %2268 = vmatprep.subr.mxu0 0.0
        %2269 = vmatpush1.msra.mxu0 0.0
        %2270 = vmatprep.subr.mxu0 0.0
        %2271 = vmatpush1.msra.mxu0 0.0
        %2272 = vmatprep.subr.mxu0 0.0
        %2273 = vmatpush1.msra.mxu0 0.0
        %2274 = vmatprep.subr.mxu0 0.0
        %2275 = vmatpush1.msra.mxu0 0.0
        %2276 = vmatprep.subr.mxu0 0.0
        %2277 = vmatpush1.msra.mxu0 0.0
        %2278 = vmatprep.subr.mxu0 0.0
        %2279 = vmatpush1.msra.mxu0 0.0
        %2280 = vmatprep.subr.mxu0 0.0
        %2281 = vmatpush1.msra.mxu0 0.0
        %2282 = vmatprep.subr.mxu0 0.0
        %2283 = vmatpush1.msra.mxu0 0.0
        %2284 = vmatprep.subr.mxu0 0.0
        %2285 = vmatpush1.msra.mxu0 0.0
        %2286 = vmatprep.subr.mxu0 0.0
        %2287 = vmatpush1.msra.mxu0 0.0
        %2288 = vmatprep.subr.mxu0 0.0
        %2289 = vmatpush1.msra.mxu0 %v2254
        %2290 = vmatprep.subr.mxu0 0.0
        %2291 = vmatpush1.msra.mxu0 %v2252
        %2292 = vmatprep.subr.mxu0 0.0
        %2293 = vmatpush2.msra.mxu0 0.0
        %2294 = vmatprep.subr.mxu0 0.0
        %2295 = vmatpush2.msra.mxu0 0.0
        %2296 = vmatprep.subr.mxu0 0.0
        %2297 = vmatpush2.msra.mxu0 0.0
        %2298 = vmatprep.subr.mxu0 0.0
        %2299 = vmatpush2.msra.mxu0 0.0
        %2300 = vmatprep.subr.mxu0 0.0
        %2301 = vmatpush2.msra.mxu0 0.0
        %2302 = vmatprep.subr.mxu0 0.0
        %2303 = vmatpush2.msra.mxu0 0.0
        %2304 = vmatprep.subr.mxu0 0.0
        %2305 = vmatpush2.msra.mxu0 0.0
        %2306 = vmatprep.subr.mxu0 0.0
        %2307 = vmatpush2.msra.mxu0 0.0
        %2308 = vmatprep.subr.mxu0 0.0
        %2309 = vmatpush2.msra.mxu0 0.0
        %2310 = vmatprep.subr.mxu0 0.0
        %2311 = vmatpush2.msra.mxu0 0.0
        %2312 = vmatprep.subr.mxu0 0.0
        %2313 = vmatpush2.msra.mxu0 0.0
        %2314 = vmatprep.subr.mxu0 0.0
        %2315 = vmatpush2.msra.mxu0 0.0
        %2316 = vmatprep.subr.mxu0 0.0
        %2317 = vmatpush2.msra.mxu0 0.0
        %2318 = vmatprep.subr.mxu0 0.0
        %2319 = vmatpush2.msra.mxu0 0.0
        %2320 = vmatprep.subr.mxu0 0.0
        %2321 = vmatpush2.msra.mxu0 0.0
        %2322 = vmatprep.subr.mxu0 0.0
        %2323 = vmatpush2.msra.mxu0 0.0
        %2324 = vmatprep.mubr.f32.mxu0 0.0
        %2325 = vmatmul.mubr.f32.gmra.mxu0 %v2258
        %v2326 = vpop.f32.mrf.mxu0
        %v2327 = vadd.f32 0.0, %v2326
        %v2328 = vpop.f32.mrf.mxu0
        %2329 = vdwg.mxu0
        %v2330 = vrcp.pop %v2250
        %v2331 = vmul.f32 %v2327, %v2330
        %v2333 = vsel %vm672, %v2331, 0
        %v2336 = vsel %vm1016, %v671, 0
        %2338 = vmatprep.subr.mxu0 0.0
        %2339 = vmatpush1.msra.mxu0 0.0
        %2340 = vmatprep.subr.mxu0 0.0
        %2341 = vmatpush1.msra.mxu0 0.0
        %2342 = vmatprep.subr.mxu0 0.0
        %2343 = vmatpush1.msra.mxu0 0.0
        %2344 = vmatprep.subr.mxu0 0.0
        %2345 = vmatpush1.msra.mxu0 0.0
        %2346 = vmatprep.subr.mxu0 0.0
        %2347 = vmatpush1.msra.mxu0 0.0
        %2348 = vmatprep.subr.mxu0 0.0
        %2349 = vmatpush1.msra.mxu0 0.0
        %2350 = vmatprep.subr.mxu0 0.0
        %2351 = vmatpush1.msra.mxu0 0.0
        %2352 = vmatprep.subr.mxu0 0.0
        %2353 = vmatpush1.msra.mxu0 0.0
        %2354 = vmatprep.subr.mxu0 0.0
        %2355 = vmatpush1.msra.mxu0 0.0
        %2356 = vmatprep.subr.mxu0 0.0
        %2357 = vmatpush1.msra.mxu0 0.0
        %2358 = vmatprep.subr.mxu0 0.0
        %2359 = vmatpush1.msra.mxu0 0.0
        %2360 = vmatprep.subr.mxu0 0.0
        %2361 = vmatpush1.msra.mxu0 0.0
        %2362 = vmatprep.subr.mxu0 0.0
        %2363 = vmatpush1.msra.mxu0 0.0
        %2364 = vmatprep.subr.mxu0 0.0
        %2365 = vmatpush1.msra.mxu0 0.0
        %2366 = vmatprep.subr.mxu0 0.0
        %2367 = vmatpush1.msra.mxu0 0.0
        %2368 = vmatprep.subr.mxu0 0.0
        %2369 = vmatpush1.msra.mxu0 %v2336
        %2370 = vmatprep.subr.mxu0 0.0
        %2371 = vmatpush2.msra.mxu0 0.0
        %2372 = vmatprep.subr.mxu0 0.0
        %2373 = vmatpush2.msra.mxu0 0.0
        %2374 = vmatprep.subr.mxu0 0.0
        %2375 = vmatpush2.msra.mxu0 0.0
        %2376 = vmatprep.subr.mxu0 0.0
        %2377 = vmatpush2.msra.mxu0 0.0
        %2378 = vmatprep.subr.mxu0 0.0
        %2379 = vmatpush2.msra.mxu0 0.0
        %2380 = vmatprep.subr.mxu0 0.0
        %2381 = vmatpush2.msra.mxu0 0.0
        %2382 = vmatprep.subr.mxu0 0.0
        %2383 = vmatpush2.msra.mxu0 0.0
        %2384 = vmatprep.subr.mxu0 0.0
        %2385 = vmatpush2.msra.mxu0 0.0
        %2386 = vmatprep.subr.mxu0 0.0
        %2387 = vmatpush2.msra.mxu0 0.0
        %2388 = vmatprep.subr.mxu0 0.0
        %2389 = vmatpush2.msra.mxu0 0.0
        %2390 = vmatprep.subr.mxu0 0.0
        %2391 = vmatpush2.msra.mxu0 0.0
        %2392 = vmatprep.subr.mxu0 0.0
        %2393 = vmatpush2.msra.mxu0 0.0
        %2394 = vmatprep.subr.mxu0 0.0
        %2395 = vmatpush2.msra.mxu0 0.0
        %2396 = vmatprep.subr.mxu0 0.0
        %2397 = vmatpush2.msra.mxu0 0.0
        %2398 = vmatprep.subr.mxu0 0.0
        %2399 = vmatpush2.msra.mxu0 0.0
        %2400 = vmatprep.subr.mxu0 0.0
        %2401 = vmatpush2.msra.mxu0 0.0
        %2402 = vmatprep.mubr.f32.mxu0 0.0
        %2403 = vmatmul.mubr.f32.gmra.mxu0 %v2333
        %v2404 = vpop.f32.mrf.mxu0
        %v2405 = vadd.f32 0.0, %v2404
        %v2406 = vpop.f32.mrf.mxu0
        %2407 = vdwg.mxu0
        %v2408 = vadd.f32 %v2159, %v2405
        %2409 = vrot.lane.b32.xlu0 %v663, 100
        %v2410 = vpop.permute.xlu0 %2409
        %2411 = vrot.lane.b32.xlu0 %v664, 100
        %v2412 = vpop.permute.xlu0 %2411
        %2413 = vrot.lane.b32.xlu0 %v665, 100
        %v2414 = vpop.permute.xlu0 %2413
        %v2415 = vsel %vm672, %v2410, 0
        %v2417 = vsel %vm672, %v2412, 0
        %v2419 = vsel %vm672, %v2414, 0
        %2421 = vmatprep.subr.mxu0 0.0
        %2422 = vmatpush1.xpose.msra.mxu0 0.0
        %2423 = vmatprep.subr.mxu0 0.0
        %2424 = vmatpush1.xpose.msra.mxu0 0.0
        %2425 = vmatprep.subr.mxu0 0.0
        %2426 = vmatpush1.xpose.msra.mxu0 0.0
        %2427 = vmatprep.subr.mxu0 0.0
        %2428 = vmatpush1.xpose.msra.mxu0 0.0
        %2429 = vmatprep.subr.mxu0 0.0
        %2430 = vmatpush1.xpose.msra.mxu0 0.0
        %2431 = vmatprep.subr.mxu0 0.0
        %2432 = vmatpush1.xpose.msra.mxu0 0.0
        %2433 = vmatprep.subr.mxu0 0.0
        %2434 = vmatpush1.xpose.msra.mxu0 0.0
        %2435 = vmatprep.subr.mxu0 0.0
        %2436 = vmatpush1.xpose.msra.mxu0 0.0
        %2437 = vmatprep.subr.mxu0 0.0
        %2438 = vmatpush1.xpose.msra.mxu0 0.0
        %2439 = vmatprep.subr.mxu0 0.0
        %2440 = vmatpush1.xpose.msra.mxu0 0.0
        %2441 = vmatprep.subr.mxu0 0.0
        %2442 = vmatpush1.xpose.msra.mxu0 0.0
        %2443 = vmatprep.subr.mxu0 0.0
        %2444 = vmatpush1.xpose.msra.mxu0 0.0
        %2445 = vmatprep.subr.mxu0 0.0
        %2446 = vmatpush1.xpose.msra.mxu0 0.0
        %2447 = vmatprep.subr.mxu0 0.0
        %2448 = vmatpush1.xpose.msra.mxu0 0.0
        %2449 = vmatprep.subr.mxu0 0.0
        %2450 = vmatpush1.xpose.msra.mxu0 %v2419
        %2451 = vmatprep.subr.mxu0 0.0
        %2452 = vmatpush1.xpose.msra.mxu0 %v2417
        %2453 = vmatprep.subr.mxu0 0.0
        %2454 = vmatpush2.xpose.msra.mxu0 0.0
        %2455 = vmatprep.subr.mxu0 0.0
        %2456 = vmatpush2.xpose.msra.mxu0 0.0
        %2457 = vmatprep.subr.mxu0 0.0
        %2458 = vmatpush2.xpose.msra.mxu0 0.0
        %2459 = vmatprep.subr.mxu0 0.0
        %2460 = vmatpush2.xpose.msra.mxu0 0.0
        %2461 = vmatprep.subr.mxu0 0.0
        %2462 = vmatpush2.xpose.msra.mxu0 0.0
        %2463 = vmatprep.subr.mxu0 0.0
        %2464 = vmatpush2.xpose.msra.mxu0 0.0
        %2465 = vmatprep.subr.mxu0 0.0
        %2466 = vmatpush2.xpose.msra.mxu0 0.0
        %2467 = vmatprep.subr.mxu0 0.0
        %2468 = vmatpush2.xpose.msra.mxu0 0.0
        %2469 = vmatprep.subr.mxu0 0.0
        %2470 = vmatpush2.xpose.msra.mxu0 0.0
        %2471 = vmatprep.subr.mxu0 0.0
        %2472 = vmatpush2.xpose.msra.mxu0 0.0
        %2473 = vmatprep.subr.mxu0 0.0
        %2474 = vmatpush2.xpose.msra.mxu0 0.0
        %2475 = vmatprep.subr.mxu0 0.0
        %2476 = vmatpush2.xpose.msra.mxu0 0.0
        %2477 = vmatprep.subr.mxu0 0.0
        %2478 = vmatpush2.xpose.msra.mxu0 0.0
        %2479 = vmatprep.subr.mxu0 0.0
        %2480 = vmatpush2.xpose.msra.mxu0 0.0
        %2481 = vmatprep.subr.mxu0 0.0
        %2482 = vmatpush2.xpose.msra.mxu0 0.0
        %2483 = vmatprep.subr.mxu0 0.0
        %2484 = vmatpush2.xpose.msra.mxu0 0.0
        %2485 = vmatprep.mubr.f32.mxu0 0.0
        %2486 = vmatmul.mubr.f32.gmra.mxu0 %v2415
        %v2487 = vpop.f32.mrf.mxu0
        %v2488 = vadd.f32 0.0, %v2487
        %v2489 = vpop.f32.mrf.mxu0
        %2490 = vdwg.mxu0
        %v2491 = vsel %vm752, %v2488, -inf
        %2492 = vmax.xlane.f32.xlu0 %v2491
        %v2493 = vpop.xlane.xlu0 %2492
        %v2494 = vsub.f32 %v2488, %v2493
        %v2495 = vmul.f32 %v2494, 1.442695
        %v2496 = vpow.pop %v2495
        %v2497 = vsel %vm752, %v2496, 0.0
        %2498 = vadd.xlane.f32.xlu0 %v2497
        %v2499 = vpop.xlane.xlu0 %2498
        %2500 = vrot.lane.b32.xlu0 %v666, 100
        %v2501 = vpop.permute.xlu0 %2500
        %2502 = vrot.lane.b32.xlu0 %v667, 100
        %v2503 = vpop.permute.xlu0 %2502
        %v2507 = vsel %vm752, %v2496, 0
        %2509 = vmatprep.subr.mxu0 0.0
        %2510 = vmatpush1.msra.mxu0 0.0
        %2511 = vmatprep.subr.mxu0 0.0
        %2512 = vmatpush1.msra.mxu0 0.0
        %2513 = vmatprep.subr.mxu0 0.0
        %2514 = vmatpush1.msra.mxu0 0.0
        %2515 = vmatprep.subr.mxu0 0.0
        %2516 = vmatpush1.msra.mxu0 0.0
        %2517 = vmatprep.subr.mxu0 0.0
        %2518 = vmatpush1.msra.mxu0 0.0
        %2519 = vmatprep.subr.mxu0 0.0
        %2520 = vmatpush1.msra.mxu0 0.0
        %2521 = vmatprep.subr.mxu0 0.0
        %2522 = vmatpush1.msra.mxu0 0.0
        %2523 = vmatprep.subr.mxu0 0.0
        %2524 = vmatpush1.msra.mxu0 0.0
        %2525 = vmatprep.subr.mxu0 0.0
        %2526 = vmatpush1.msra.mxu0 0.0
        %2527 = vmatprep.subr.mxu0 0.0
        %2528 = vmatpush1.msra.mxu0 0.0
        %2529 = vmatprep.subr.mxu0 0.0
        %2530 = vmatpush1.msra.mxu0 0.0
        %2531 = vmatprep.subr.mxu0 0.0
        %2532 = vmatpush1.msra.mxu0 0.0
        %2533 = vmatprep.subr.mxu0 0.0
        %2534 = vmatpush1.msra.mxu0 0.0
        %2535 = vmatprep.subr.mxu0 0.0
        %2536 = vmatpush1.msra.mxu0 0.0
        %2537 = vmatprep.subr.mxu0 0.0
        %2538 = vmatpush1.msra.mxu0 %v2503
        %2539 = vmatprep.subr.mxu0 0.0
        %2540 = vmatpush1.msra.mxu0 %v2501
        %2541 = vmatprep.subr.mxu0 0.0
        %2542 = vmatpush2.msra.mxu0 0.0
        %2543 = vmatprep.subr.mxu0 0.0
        %2544 = vmatpush2.msra.mxu0 0.0
        %2545 = vmatprep.subr.mxu0 0.0
        %2546 = vmatpush2.msra.mxu0 0.0
        %2547 = vmatprep.subr.mxu0 0.0
        %2548 = vmatpush2.msra.mxu0 0.0
        %2549 = vmatprep.subr.mxu0 0.0
        %2550 = vmatpush2.msra.mxu0 0.0
        %2551 = vmatprep.subr.mxu0 0.0
        %2552 = vmatpush2.msra.mxu0 0.0
        %2553 = vmatprep.subr.mxu0 0.0
        %2554 = vmatpush2.msra.mxu0 0.0
        %2555 = vmatprep.subr.mxu0 0.0
        %2556 = vmatpush2.msra.mxu0 0.0
        %2557 = vmatprep.subr.mxu0 0.0
        %2558 = vmatpush2.msra.mxu0 0.0
        %2559 = vmatprep.subr.mxu0 0.0
        %2560 = vmatpush2.msra.mxu0 0.0
        %2561 = vmatprep.subr.mxu0 0.0
        %2562 = vmatpush2.msra.mxu0 0.0
        %2563 = vmatprep.subr.mxu0 0.0
        %2564 = vmatpush2.msra.mxu0 0.0
        %2565 = vmatprep.subr.mxu0 0.0
        %2566 = vmatpush2.msra.mxu0 0.0
        %2567 = vmatprep.subr.mxu0 0.0
        %2568 = vmatpush2.msra.mxu0 0.0
        %2569 = vmatprep.subr.mxu0 0.0
        %2570 = vmatpush2.msra.mxu0 0.0
        %2571 = vmatprep.subr.mxu0 0.0
        %2572 = vmatpush2.msra.mxu0 0.0
        %2573 = vmatprep.mubr.f32.mxu0 0.0
        %2574 = vmatmul.mubr.f32.gmra.mxu0 %v2507
        %v2575 = vpop.f32.mrf.mxu0
        %v2576 = vadd.f32 0.0, %v2575
        %v2577 = vpop.f32.mrf.mxu0
        %2578 = vdwg.mxu0
        %v2579 = vrcp.pop %v2499
        %v2580 = vmul.f32 %v2576, %v2579
        %v2581 = vrot.slane %v671, 4
        %v2583 = vsel %vm672, %v2580, 0
        %v2585 = vsel %vm1016, %v2581, 0
        %2587 = vmatprep.subr.mxu0 0.0
        %2588 = vmatpush1.msra.mxu0 0.0
        %2589 = vmatprep.subr.mxu0 0.0
        %2590 = vmatpush1.msra.mxu0 0.0
        %2591 = vmatprep.subr.mxu0 0.0
        %2592 = vmatpush1.msra.mxu0 0.0
        %2593 = vmatprep.subr.mxu0 0.0
        %2594 = vmatpush1.msra.mxu0 0.0
        %2595 = vmatprep.subr.mxu0 0.0
        %2596 = vmatpush1.msra.mxu0 0.0
        %2597 = vmatprep.subr.mxu0 0.0
        %2598 = vmatpush1.msra.mxu0 0.0
        %2599 = vmatprep.subr.mxu0 0.0
        %2600 = vmatpush1.msra.mxu0 0.0
        %2601 = vmatprep.subr.mxu0 0.0
        %2602 = vmatpush1.msra.mxu0 0.0
        %2603 = vmatprep.subr.mxu0 0.0
        %2604 = vmatpush1.msra.mxu0 0.0
        %2605 = vmatprep.subr.mxu0 0.0
        %2606 = vmatpush1.msra.mxu0 0.0
        %2607 = vmatprep.subr.mxu0 0.0
        %2608 = vmatpush1.msra.mxu0 0.0
        %2609 = vmatprep.subr.mxu0 0.0
        %2610 = vmatpush1.msra.mxu0 0.0
        %2611 = vmatprep.subr.mxu0 0.0
        %2612 = vmatpush1.msra.mxu0 0.0
        %2613 = vmatprep.subr.mxu0 0.0
        %2614 = vmatpush1.msra.mxu0 0.0
        %2615 = vmatprep.subr.mxu0 0.0
        %2616 = vmatpush1.msra.mxu0 0.0
        %2617 = vmatprep.subr.mxu0 0.0
        %2618 = vmatpush1.msra.mxu0 %v2585
        %2619 = vmatprep.subr.mxu0 0.0
        %2620 = vmatpush2.msra.mxu0 0.0
        %2621 = vmatprep.subr.mxu0 0.0
        %2622 = vmatpush2.msra.mxu0 0.0
        %2623 = vmatprep.subr.mxu0 0.0
        %2624 = vmatpush2.msra.mxu0 0.0
        %2625 = vmatprep.subr.mxu0 0.0
        %2626 = vmatpush2.msra.mxu0 0.0
        %2627 = vmatprep.subr.mxu0 0.0
        %2628 = vmatpush2.msra.mxu0 0.0
        %2629 = vmatprep.subr.mxu0 0.0
        %2630 = vmatpush2.msra.mxu0 0.0
        %2631 = vmatprep.subr.mxu0 0.0
        %2632 = vmatpush2.msra.mxu0 0.0
        %2633 = vmatprep.subr.mxu0 0.0
        %2634 = vmatpush2.msra.mxu0 0.0
        %2635 = vmatprep.subr.mxu0 0.0
        %2636 = vmatpush2.msra.mxu0 0.0
        %2637 = vmatprep.subr.mxu0 0.0
        %2638 = vmatpush2.msra.mxu0 0.0
        %2639 = vmatprep.subr.mxu0 0.0
        %2640 = vmatpush2.msra.mxu0 0.0
        %2641 = vmatprep.subr.mxu0 0.0
        %2642 = vmatpush2.msra.mxu0 0.0
        %2643 = vmatprep.subr.mxu0 0.0
        %2644 = vmatpush2.msra.mxu0 0.0
        %2645 = vmatprep.subr.mxu0 0.0
        %2646 = vmatpush2.msra.mxu0 0.0
        %2647 = vmatprep.subr.mxu0 0.0
        %2648 = vmatpush2.msra.mxu0 0.0
        %2649 = vmatprep.subr.mxu0 0.0
        %2650 = vmatpush2.msra.mxu0 0.0
        %2651 = vmatprep.mubr.f32.mxu0 0.0
        %2652 = vmatmul.mubr.f32.gmra.mxu0 %v2583
        %v2653 = vpop.f32.mrf.mxu0
        %v2654 = vadd.f32 0.0, %v2653
        %v2655 = vpop.f32.mrf.mxu0
        %2656 = vdwg.mxu0
        %v2657 = vadd.f32 %v2408, %v2654
        %v2658 = vld [vmem:[%s6] sm:$0x1]
        %v2660 = vlaneseq
        %v2661 = vshrl.u32 %v2660, 7
        %v2662 = vsub.s32 0, %v2661
        %v2663 = vrot.slane %v2658, %v2662
        %v2665 = vadd.f32 %v2657, %v2663
        %2666 = vst.msk [vmem:[%s408] sm:$0xff] %vm589, %v2665
        %s2667 = sand.u32 %s210, 1
        %s2668 = scalar_lea.sflag [#allocation6], %s2667
        %s2669 = sand.u32 %s210, 1
        %s2670 = smul.addr %s2669, 8
        %s2671 = scalar_lea.vmem [#allocation15], %s2670
        // Predicated region
        $region77: #{tpu_custom_call.1} parent=47 // pred_check
          %p2672 = pneg %p220
        $region78: #{tpu_custom_call.1} parent=47 // pred_check_branch
          %2674 = sbr.rel (%p2672) target = $region80
        $region79: #{tpu_custom_call.1} parent=47 // pred_region
          %s2676 = ssub.s32 128, 128
          %2677 = vsyncadd %s2668, %s2676
          %s2678 = sadd.s32 %s34, %s33
          %s2679 = smul.addr %s2678, 128
          %s2680 = scalar_lea.hbm %s7, %s2679
          %s2682 = sshll.u32 %s2671, 4
          %s2683 = int_to_ptr.vmem [resolvable:$true] %s2682
          %2685 = dma.vmem_to_hbm [thread:$0]  %s2683, 128, %s2680, %s2668
        $region80: #{tpu_custom_call.1} parent=47 // pred_fallthru
          _
      $region48: #{tpu_custom_call.1} parent=5 // pred_fallthru
        _
      %p2686 = scmp.le.s32.totalorder 2, %s24
      // Predicated region
      $region81: #{tpu_custom_call.1} parent=5 // pred_check
        %p2687 = pneg %p2686
      $region82: #{tpu_custom_call.1} parent=5 // pred_check_branch
        %2689 = sbr.rel (%p2687) target = $region84
      $region83: #{tpu_custom_call.1} parent=5 // pred_region
        %s2690 = ssub.s32 %s24, 2
        // Predicated region
        $region85: #{tpu_custom_call.1} parent=83 // pred_check
          %p2691 = pneg %p226
        $region86: #{tpu_custom_call.1} parent=83 // pred_check_branch
          %2693 = sbr.rel (%p2691) target = $region88
        $region87: #{tpu_custom_call.1} parent=83 // pred_region
          %s2694 = sand.u32 %s211, 1
          %s2695 = scalar_lea.sflag [#allocation6], %s2694
          %s2696 = sand.u32 %s211, 1
          %s2697 = smul.addr %s2696, 8
          %s2698 = scalar_lea.vmem [#allocation15], %s2697
          %2699 = dma.done %s2695, 128
        $region88: #{tpu_custom_call.1} parent=83 // pred_fallthru
          _
      $region84: #{tpu_custom_call.1} parent=5 // pred_fallthru
        _
    $region6: #{tpu_custom_call.1} parent=1 // loop_footer
      %s28 = sadd.s32 1, %s24
    $region7: #{tpu_custom_call.1} parent=1 // loop_footer_branch
      %23 = sbr.rel target = $region3
    $region8: #{tpu_custom_call.1} parent=1 // loop_exit
      _
    %2700 = vsyncpa [#allocation5], 1
    %s2701 = scalar_lea.sflag [#allocation5], 1
    %2702 = vsyncpa %s2701, 1
    %2703 = vsyncpa [#allocation8], 1
    %s2704 = scalar_lea.sflag [#allocation8], 1
    %2705 = vsyncpa %s2704, 1
    %2706 = vsyncpa [#allocation11], 1
    %2707 = vsyncpa [#allocation14], 1
    %2708 = vsyncpa [#allocation6], 1
    %s2709 = scalar_lea.sflag [#allocation6], 1
    %2710 = vsyncpa %s2709, 1

</llo_original>
